<compile_context>
chip_gen: v6e
topology: v6e:2x2x1
jax: 0.10.0
libtpu: 0.0.40
codegen_flags: <defaults>
</compile_context>

<pallas_src>
import functools

import jax
import jax.numpy as jnp
from jax.experimental import pallas as pl
from jax.experimental.pallas import tpu as pltpu


def _round_up(x, m):
    return (x + m - 1) // m * m


def _integrate_kernel(tc_ref, feat_ref, idx_ref, fv_ref, cnt_ref,
                      fv_out_ref, cnt_out_ref, acc_ref,
                      *, xs, ys, zs, n, v_tile):
    """Grid = (voxel tiles, point tiles).  Point axis is the reduction axis."""
    i = pl.program_id(0)                 # voxel tile
    k = pl.program_id(1)                 # point tile (reduction, last axis)
    last_k = pl.num_programs(1) - 1
    base = i * v_tile
    has_points = tc_ref[i] > 0           # scalar-prefetched per-tile histogram

    @pl.when(has_points)
    def _compute():
        @pl.when(k == 0)
        def _():
            acc_ref[...] = jnp.zeros_like(acc_ref)

        idx = idx_ref[...]                       # (m_tile, 3) int32
        ix = idx[:, 0:1]
        iy = idx[:, 1:2]
        iz = idx[:, 2:3]

        # get_index_mask: keep only indices inside the volume.
        valid = ((ix >= 0) & (ix < xs) &
                 (iy >= 0) & (iy < ys) &
                 (iz >= 0) & (iz < zs))          # (m_tile, 1) bool

        # linear voxel index relative to this tile; invalid points -> -1 so
        # they never match the iota (single compare + cast on the big array).
        lin_rel = (ys * zs) * ix + zs * iy + iz - base
        lin_masked = jnp.where(valid, lin_rel, -1)          # (m_tile, 1)

        m_tile = feat_ref.shape[0]
        col = jax.lax.broadcasted_iota(jnp.int32, (m_tile, v_tile), 1)
        onehot = (col == lin_masked).astype(jnp.float32)    # (m_tile, v_tile)

        feat = feat_ref[...]                     # (m_tile, n+1), last col == 1

        # scatter-add realized as a single matmul; last column accumulates the
        # per-voxel point counts (the unit weights).
        contract = (((0,), (0,)), ((), ()))
        acc_ref[...] += jax.lax.dot_general(
            onehot, feat, contract, preferred_element_type=jnp.float32)

        @pl.when(k == last_k)
        def _finalize():
            acc = acc_ref[...]                   # (v_tile, n+1)
            fsum = acc[:, 0:n]                   # (v_tile, n)
            wcol = acc[:, n:n + 1]               # (v_tile, 1) point counts
            touched = wcol > 0.0

            pooled = fsum / jnp.where(touched, wcol, 1.0)    # feature_pooling

            old_fv = fv_ref[...]                 # (v_tile, n)
            old_cnt = cnt_ref[...]               # (v_tile, 1)

            new_fv = jnp.where(
                touched,
                (old_fv * old_cnt + pooled) / (old_cnt + 1.0),
                old_fv)
            new_cnt = jnp.where(touched, old_cnt + 1.0, old_cnt)

            fv_out_ref[...] = new_fv
            cnt_out_ref[...] = new_cnt

    @pl.when(jnp.logical_not(has_points))
    def _passthrough():
        @pl.when(k == last_k)
        def _():
            fv_out_ref[...] = fv_ref[...]
            cnt_out_ref[...] = cnt_ref[...]


def integrate(feature, indices, feature_volume, count_volume,
              *, v_tile=512, m_tile=1024):
    """Pallas port of Integrator.forward.

    Returns updated (feature_volume, count_volume).
    """
    xs, ys, zs, n = feature_volume.shape
    n1, n2, n3 = feature.shape

    feat = feature.reshape(-1, n).astype(jnp.float32)            # (M, n)
    idx = indices.reshape(n1 * n2 * n, 3).astype(jnp.int32)      # (M, 3)
    assert feat.shape[0] == idx.shape[0], "feature / indices row mismatch"
    m = feat.shape[0]

    # Append a unit-weight column: one dot produces both feature sums and the
    # per-voxel point counts.
    feat_aug = jnp.concatenate([feat, jnp.ones((m, 1), jnp.float32)], axis=1)

    # Tile / pad the point axis (pad rows use idx=-1 -> masked out in-kernel).
    m_tile = min(m_tile, _round_up(m, 8))
    m_pad = _round_up(m, m_tile)
    if m_pad != m:
        feat_aug = jnp.pad(feat_aug, ((0, m_pad - m), (0, 0)))
        idx = jnp.pad(idx, ((0, m_pad - m), (0, 0)), constant_values=-1)

    # Tile / pad the voxel axis (pad voxels are never referenced by valid lin).
    v = xs * ys * zs
    v_tile = min(v_tile, _round_up(v, 8))
    v_pad = _round_up(v, v_tile)
    fv2d = feature_volume.reshape(v, n).astype(jnp.float32)
    cnt2d = count_volume.reshape(v, 1).astype(jnp.float32)
    if v_pad != v:
        fv2d = jnp.pad(fv2d, ((0, v_pad - v), (0, 0)))
        cnt2d = jnp.pad(cnt2d, ((0, v_pad - v), (0, 0)))
    num_v_tiles = v_pad // v_tile

    # Per-voxel-tile point histogram (scalar prefetch) so empty tiles skip the
    # one-hot + matmul entirely.
    valid = ((idx[:, 0] >= 0) & (idx[:, 0] < xs) &
             (idx[:, 1] >= 0) & (idx[:, 1] < ys) &
             (idx[:, 2] >= 0) & (idx[:, 2] < zs))
    lin = ys * zs * idx[:, 0] + zs * idx[:, 1] + idx[:, 2]
    tile_id = jnp.where(valid, lin, 0) // v_tile
    tile_counts = jnp.zeros((num_v_tiles,), jnp.int32).at[tile_id].add(
        valid.astype(jnp.int32))

    kernel = functools.partial(
        _integrate_kernel, xs=xs, ys=ys, zs=zs, n=n, v_tile=v_tile)

    fv_new, cnt_new = pl.pallas_call(
        kernel,
        out_shape=(jax.ShapeDtypeStruct((v_pad, n), jnp.float32),
                   jax.ShapeDtypeStruct((v_pad, 1), jnp.float32)),
        grid_spec=pltpu.PrefetchScalarGridSpec(
            num_scalar_prefetch=1,
            grid=(num_v_tiles, m_pad // m_tile),
            in_specs=[
                pl.BlockSpec((m_tile, n + 1), lambda i, k, tc: (k, 0)),
                pl.BlockSpec((m_tile, 3), lambda i, k, tc: (k, 0)),
                pl.BlockSpec((v_tile, n), lambda i, k, tc: (i, 0)),
                pl.BlockSpec((v_tile, 1), lambda i, k, tc: (i, 0)),
            ],
            out_specs=[
                pl.BlockSpec((v_tile, n), lambda i, k, tc: (i, 0)),
                pl.BlockSpec((v_tile, 1), lambda i, k, tc: (i, 0)),
            ],
            scratch_shapes=[pltpu.VMEM((v_tile, n + 1), jnp.float32)],
        ),
        compiler_params=pltpu.CompilerParams(
            dimension_semantics=("parallel", "arbitrary"),
            vmem_limit_bytes=32 * 1024 * 1024),
        # inputs: 0=tile_counts, 1=feat_aug, 2=idx, 3=fv2d, 4=cnt2d
        input_output_aliases={3: 0, 4: 1},
    )(tile_counts, feat_aug, idx, fv2d, cnt2d)

    fv_new = fv_new[:v].reshape(xs, ys, zs, n)
    cnt_new = cnt_new[:v].reshape(xs, ys, zs)
    return fv_new, cnt_new


def integrate_reference(feature, indices, feature_volume, count_volume):
    """Pure-JAX reference mirroring the PyTorch code."""
    xs, ys, zs, n = feature_volume.shape
    n1, n2, n3 = feature.shape
    feat = feature.reshape(-1, n).astype(jnp.float32)
    idx = indices.reshape(n1 * n2 * n, 3).astype(jnp.int32)
    valid = ((idx[:, 0] >= 0) & (idx[:, 0] < xs) &
             (idx[:, 1] >= 0) & (idx[:, 1] < ys) &
             (idx[:, 2] >= 0) & (idx[:, 2] < zs))
    lin = ys * zs * idx[:, 0] + zs * idx[:, 1] + idx[:, 2]
    lin = jnp.where(valid, lin, 0)
    w = jnp.where(valid, 1.0, 0.0)[:, None]
    v = xs * ys * zs
    fcache = jnp.zeros((v, n), jnp.float32).at[lin].add(feat * w)
    wcache = jnp.zeros((v, n), jnp.float32).at[lin].add(jnp.ones_like(feat) * w)
    touched = wcache > 0.0
    pooled = fcache / jnp.where(touched, wcache, 1.0)
    fv = feature_volume.reshape(v, n).astype(jnp.float32)
    cnt = count_volume.reshape(v, 1).astype(jnp.float32)
    new_cnt = jnp.where(wcache[:, :1] > 0, cnt + 1.0, cnt)
    new_fv = jnp.where(touched, (fv * cnt + pooled) / (cnt + 1.0), fv)
    return new_fv.reshape(xs, ys, zs, n), new_cnt.reshape(xs, ys, zs)


if __name__ == "__main__":
    key = jax.random.PRNGKey(0)
    k1, k2, k3, k4, k5 = jax.random.split(key, 5)

    # Small, self-consistent shapes: feature.view(-1, n) rows must equal
    # indices.view(n1*n2*n, 3) rows  =>  n3 == n*n here.
    X = Y = Z = 16
    n = 8                      # feature channels of the global volume
    n1, n2 = 2, 16             # local grid "batch" / spatial
    n3 = n * n                 # M = n1*n2*n = 256 rows in both views

    feature = jax.random.normal(k1, (n1, n2, n3), dtype=jnp.float32)
    # indices: x restricted to [-1, 8] so some voxel tiles stay empty
    # (exercises the pl.when skip path); y,z in [-1, X] to exercise the mask.
    ix = jax.random.randint(k2, (n1, n2, n, 1), -1, X // 2 + 1, dtype=jnp.int32)
    iyz = jax.random.randint(k5, (n1, n2, n, 2), -1, X + 1, dtype=jnp.int32)
    indices = jnp.concatenate([ix, iyz], axis=-1)
    feature_volume = jax.random.normal(k3, (X, Y, Z, n), dtype=jnp.float32)
    count_volume = jax.random.randint(k4, (X, Y, Z), 0, 4).astype(jnp.float32)

    fv_out, cnt_out = integrate(feature, indices, feature_volume, count_volume)
    jax.block_until_ready((fv_out, cnt_out))

    fv_ref, cnt_ref = integrate_reference(feature, indices, feature_volume,
                                          count_volume)
    assert jnp.allclose(fv_out, fv_ref, atol=1e-4, rtol=1e-4), "feature_volume mismatch"
    assert jnp.allclose(cnt_out, cnt_ref, atol=1e-5, rtol=1e-5), "count_volume mismatch"

    print("KERNEL_OK")
</pallas_src>

<mosaic_0001>
module attributes {stable_mosaic.version = 11 : i64} {
  func.func @_integrate_kernel(%arg0: i32, %arg1: i32, %arg2: memref<8xi32, #tpu.memory_space<smem>>, %arg3: memref<256x9xf32, #tpu.memory_space<vmem>>, %arg4: memref<256x3xi32, #tpu.memory_space<vmem>>, %arg5: memref<512x8xf32, #tpu.memory_space<vmem>>, %arg6: memref<512x1xf32, #tpu.memory_space<vmem>>, %arg7: memref<512x8xf32, #tpu.memory_space<vmem>>, %arg8: memref<512x1xf32, #tpu.memory_space<vmem>>, %arg9: memref<512x9xf32, #tpu.memory_space<vmem>>) attributes {dimension_semantics = [#tpu.dimension_semantics<parallel>, #tpu.dimension_semantics<arbitrary>], iteration_bounds = array<i64: 8, 1>, scalar_prefetch = 1 : i64, scratch_operands = 1 : i64, tpu.core_type = #tpu.core_type<tc>, window_params = [{transform_indices = @transform_0, window_bounds = array<i64: 256, 9>}, {transform_indices = @transform_1, window_bounds = array<i64: 256, 3>}, {transform_indices = @transform_2, window_bounds = array<i64: 512, 8>}, {transform_indices = @transform_3, window_bounds = array<i64: 512, 1>}, {transform_indices = @transform_4, window_bounds = array<i64: 512, 8>}, {transform_indices = @transform_5, window_bounds = array<i64: 512, 1>}]} {
    %c512_i32 = arith.constant 512 : i32
    %0 = arith.muli %arg0, %c512_i32 : i32
    %1 = arith.index_cast %arg0 : i32 to index
    %2 = memref.load %arg2[%1] : memref<8xi32, #tpu.memory_space<smem>>
    %c0_i32 = arith.constant 0 : i32
    %3 = arith.cmpi sgt, %2, %c0_i32 : i32
    %4 = arith.extui %3 : i1 to i32
    %c0_i32_0 = arith.constant 0 : i32
    %5 = arith.cmpi ne, %4, %c0_i32_0 : i32
    scf.if %5 {
      %c0_i32_2 = arith.constant 0 : i32
      %9 = arith.cmpi eq, %arg1, %c0_i32_2 : i32
      %10 = arith.extui %9 : i1 to i32
      %c0_i32_3 = arith.constant 0 : i32
      %11 = arith.cmpi ne, %10, %c0_i32_3 : i32
      scf.if %11 {
        %cst_19 = arith.constant 0.000000e+00 : f32
        %56 = vector.broadcast %cst_19 : f32 to vector<512x9xf32>
        %c0_20 = arith.constant 0 : index
        %c0_21 = arith.constant 0 : index
        %57 = vector.load %arg9[%c0_20, %c0_21] : memref<512x9xf32, #tpu.memory_space<vmem>>, vector<512x9xf32>
        tpu.vector_store %arg9[%c0_20, %c0_21], %56 {strides = array<i32>} : memref<512x9xf32, #tpu.memory_space<vmem>>, vector<512x9xf32>,
      } else {
      }
      %c0 = arith.constant 0 : index
      %c0_4 = arith.constant 0 : index
      %12 = vector.load %arg4[%c0, %c0_4] : memref<256x3xi32, #tpu.memory_space<vmem>>, vector<256x3xi32>
      %13 = vector.extract_strided_slice %12 {offsets = [0, 0], sizes = [256, 1], strides = [1, 1]} : vector<256x3xi32> to vector<256x1xi32>
      %14 = vector.extract_strided_slice %12 {offsets = [0, 1], sizes = [256, 1], strides = [1, 1]} : vector<256x3xi32> to vector<256x1xi32>
      %15 = vector.extract_strided_slice %12 {offsets = [0, 2], sizes = [256, 1], strides = [1, 1]} : vector<256x3xi32> to vector<256x1xi32>
      %c0_i32_5 = arith.constant 0 : i32
      %16 = vector.broadcast %c0_i32_5 : i32 to vector<256x1xi32>
      %17 = arith.cmpi sge, %13, %16 : vector<256x1xi32>
      %c16_i32 = arith.constant 16 : i32
      %18 = vector.broadcast %c16_i32 : i32 to vector<256x1xi32>
      %19 = arith.cmpi slt, %13, %18 : vector<256x1xi32>
      %20 = arith.andi %17, %19 : vector<256x1xi1>
      %c0_i32_6 = arith.constant 0 : i32
      %21 = vector.broadcast %c0_i32_6 : i32 to vector<256x1xi32>
      %22 = arith.cmpi sge, %14, %21 : vector<256x1xi32>
      %23 = arith.andi %20, %22 : vector<256x1xi1>
      %c16_i32_7 = arith.constant 16 : i32
      %24 = vector.broadcast %c16_i32_7 : i32 to vector<256x1xi32>
      %25 = arith.cmpi slt, %14, %24 : vector<256x1xi32>
      %26 = arith.andi %23, %25 : vector<256x1xi1>
      %c0_i32_8 = arith.constant 0 : i32
      %27 = vector.broadcast %c0_i32_8 : i32 to vector<256x1xi32>
      %28 = arith.cmpi sge, %15, %27 : vector<256x1xi32>
      %29 = arith.andi %26, %28 : vector<256x1xi1>
      %c16_i32_9 = arith.constant 16 : i32
      %30 = vector.broadcast %c16_i32_9 : i32 to vector<256x1xi32>
      %31 = arith.cmpi slt, %15, %30 : vector<256x1xi32>
      %32 = arith.andi %29, %31 : vector<256x1xi1>
      %c256_i32 = arith.constant 256 : i32
      %33 = vector.broadcast %c256_i32 : i32 to vector<256x1xi32>
      %34 = arith.muli %33, %13 : vector<256x1xi32>
      %c16_i32_10 = arith.constant 16 : i32
      %35 = vector.broadcast %c16_i32_10 : i32 to vector<256x1xi32>
      %36 = arith.muli %35, %14 : vector<256x1xi32>
      %37 = arith.addi %34, %36 : vector<256x1xi32>
      %38 = arith.addi %37, %15 : vector<256x1xi32>
      %39 = vector.broadcast %0 : i32 to vector<256x1xi32>
      %40 = arith.subi %38, %39 : vector<256x1xi32>
      %c-1_i32 = arith.constant -1 : i32
      %41 = vector.broadcast %c-1_i32 : i32 to vector<256x1xi32>
      %42 = arith.select %32, %40, %41 : vector<256x1xi1>, vector<256x1xi32>
      %43 = tpu.iota {dimensions = array<i32: 1>} : vector<256x512xi32>
      %44 = vector.broadcast %42 : vector<256x1xi32> to vector<256x512xi32>
      %45 = arith.cmpi eq, %43, %44 : vector<256x512xi32>
      %46 = arith.extui %45 : vector<256x512xi1> to vector<256x512xi32>
      %47 = arith.sitofp %46 : vector<256x512xi32> to vector<256x512xf32>
      %c0_11 = arith.constant 0 : index
      %c0_12 = arith.constant 0 : index
      %48 = vector.load %arg3[%c0_11, %c0_12] : memref<256x9xf32, #tpu.memory_space<vmem>>, vector<256x9xf32>
      %c0_13 = arith.constant 0 : index
      %c0_14 = arith.constant 0 : index
      %49 = vector.load %arg9[%c0_13, %c0_14] : memref<512x9xf32, #tpu.memory_space<vmem>>, vector<512x9xf32>
      %cst = arith.constant dense<0.000000e+00> : vector<512x9xf32>
      %50 = tpu.matmul %47, %48, %cst {dimension_numbers = #tpu.dot_dimension_numbers<[0], [0], [1], [1], [0, 1, 1, 1], [], []>} : vector<256x512xf32>, vector<256x9xf32>, vector<512x9xf32> -> vector<512x9xf32>
      %51 = arith.addf %49, %50 : vector<512x9xf32>
      %c0_15 = arith.constant 0 : index
      %c0_16 = arith.constant 0 : index
      %52 = vector.load %arg9[%c0_15, %c0_16] : memref<512x9xf32, #tpu.memory_space<vmem>>, vector<512x9xf32>
      tpu.vector_store %arg9[%c0_15, %c0_16], %51 {strides = array<i32>} : memref<512x9xf32, #tpu.memory_space<vmem>>, vector<512x9xf32>,
      %c0_i32_17 = arith.constant 0 : i32
      %53 = arith.cmpi eq, %arg1, %c0_i32_17 : i32
      %54 = arith.extui %53 : i1 to i32
      %c0_i32_18 = arith.constant 0 : i32
      %55 = arith.cmpi ne, %54, %c0_i32_18 : i32
      scf.if %55 {
        %c0_19 = arith.constant 0 : index
        %c0_20 = arith.constant 0 : index
        %56 = vector.load %arg9[%c0_19, %c0_20] : memref<512x9xf32, #tpu.memory_space<vmem>>, vector<512x9xf32>
        %57 = vector.extract_strided_slice %56 {offsets = [0, 0], sizes = [512, 8], strides = [1, 1]} : vector<512x9xf32> to vector<512x8xf32>
        %58 = vector.extract_strided_slice %56 {offsets = [0, 8], sizes = [512, 1], strides = [1, 1]} : vector<512x9xf32> to vector<512x1xf32>
        %cst_21 = arith.constant 0.000000e+00 : f32
        %59 = vector.broadcast %cst_21 : f32 to vector<512x1xf32>
        %60 = arith.cmpf ogt, %58, %59 : vector<512x1xf32>
        %cst_22 = arith.constant 1.000000e+00 : f32
        %61 = vector.broadcast %cst_22 : f32 to vector<512x1xf32>
        %62 = arith.select %60, %58, %61 : vector<512x1xi1>, vector<512x1xf32>
        %63 = vector.broadcast %62 : vector<512x1xf32> to vector<512x8xf32>
        %64 = arith.divf %57, %63 : vector<512x8xf32>
        %c0_23 = arith.constant 0 : index
        %c0_24 = arith.constant 0 : index
        %65 = vector.load %arg5[%c0_23, %c0_24] : memref<512x8xf32, #tpu.memory_space<vmem>>, vector<512x8xf32>
        %c0_25 = arith.constant 0 : index
        %c0_26 = arith.constant 0 : index
        %66 = vector.load %arg6[%c0_25, %c0_26] : memref<512x1xf32, #tpu.memory_space<vmem>>, vector<512x1xf32>
        %67 = vector.broadcast %66 : vector<512x1xf32> to vector<512x8xf32>
        %68 = arith.mulf %65, %67 : vector<512x8xf32>
        %69 = arith.addf %68, %64 : vector<512x8xf32>
        %cst_27 = arith.constant 1.000000e+00 : f32
        %70 = vector.broadcast %cst_27 : f32 to vector<512x1xf32>
        %71 = arith.addf %66, %70 : vector<512x1xf32>
        %72 = vector.broadcast %71 : vector<512x1xf32> to vector<512x8xf32>
        %73 = arith.divf %69, %72 : vector<512x8xf32>
        %74 = vector.shape_cast %60 : vector<512x1xi1> to vector<512x1xi1>
        %75 = vector.broadcast %74 : vector<512x1xi1> to vector<512x8xi1>
        %76 = arith.select %75, %73, %65 : vector<512x8xi1>, vector<512x8xf32>
        %cst_28 = arith.constant 1.000000e+00 : f32
        %77 = vector.broadcast %cst_28 : f32 to vector<512x1xf32>
        %78 = arith.addf %66, %77 : vector<512x1xf32>
        %79 = arith.select %60, %78, %66 : vector<512x1xi1>, vector<512x1xf32>
        %c0_29 = arith.constant 0 : index
        %c0_30 = arith.constant 0 : index
        %80 = vector.load %arg7[%c0_29, %c0_30] : memref<512x8xf32, #tpu.memory_space<vmem>>, vector<512x8xf32>
        tpu.vector_store %arg7[%c0_29, %c0_30], %76 {strides = array<i32>} : memref<512x8xf32, #tpu.memory_space<vmem>>, vector<512x8xf32>,
        %c0_31 = arith.constant 0 : index
        %c0_32 = arith.constant 0 : index
        %81 = vector.load %arg8[%c0_31, %c0_32] : memref<512x1xf32, #tpu.memory_space<vmem>>, vector<512x1xf32>
        tpu.vector_store %arg8[%c0_31, %c0_32], %79 {strides = array<i32>} : memref<512x1xf32, #tpu.memory_space<vmem>>, vector<512x1xf32>,
      } else {
      }
    } else {
    }
    %true = arith.constant true
    %6 = arith.xori %3, %true : i1
    %7 = arith.extui %6 : i1 to i32
    %c0_i32_1 = arith.constant 0 : i32
    %8 = arith.cmpi ne, %7, %c0_i32_1 : i32
    scf.if %8 {
      %c0_i32_2 = arith.constant 0 : i32
      %9 = arith.cmpi eq, %arg1, %c0_i32_2 : i32
      %10 = arith.extui %9 : i1 to i32
      %c0_i32_3 = arith.constant 0 : i32
      %11 = arith.cmpi ne, %10, %c0_i32_3 : i32
      scf.if %11 {
        %c0 = arith.constant 0 : index
        %c0_4 = arith.constant 0 : index
        %12 = vector.load %arg5[%c0, %c0_4] : memref<512x8xf32, #tpu.memory_space<vmem>>, vector<512x8xf32>
        %c0_5 = arith.constant 0 : index
        %c0_6 = arith.constant 0 : index
        %13 = vector.load %arg7[%c0_5, %c0_6] : memref<512x8xf32, #tpu.memory_space<vmem>>, vector<512x8xf32>
        tpu.vector_store %arg7[%c0_5, %c0_6], %12 {strides = array<i32>} : memref<512x8xf32, #tpu.memory_space<vmem>>, vector<512x8xf32>,
        %c0_7 = arith.constant 0 : index
        %c0_8 = arith.constant 0 : index
        %14 = vector.load %arg6[%c0_7, %c0_8] : memref<512x1xf32, #tpu.memory_space<vmem>>, vector<512x1xf32>
        %c0_9 = arith.constant 0 : index
        %c0_10 = arith.constant 0 : index
        %15 = vector.load %arg8[%c0_9, %c0_10] : memref<512x1xf32, #tpu.memory_space<vmem>>, vector<512x1xf32>
        tpu.vector_store %arg8[%c0_9, %c0_10], %14 {strides = array<i32>} : memref<512x1xf32, #tpu.memory_space<vmem>>, vector<512x1xf32>,
      } else {
      }
    } else {
    }
    return
  }
  func.func @transform_0(%arg0: i32, %arg1: i32, %arg2: memref<8xi32, #tpu.memory_space<smem>>) -> (i32, i32) {
    %c0_i32 = arith.constant 0 : i32
    %c0_i32_0 = arith.constant 0 : i32
    return %arg1, %c0_i32 : i32, i32
  }
  func.func @transform_1(%arg0: i32, %arg1: i32, %arg2: memref<8xi32, #tpu.memory_space<smem>>) -> (i32, i32) {
    %c0_i32 = arith.constant 0 : i32
    %c0_i32_0 = arith.constant 0 : i32
    return %arg1, %c0_i32 : i32, i32
  }
  func.func @transform_2(%arg0: i32, %arg1: i32, %arg2: memref<8xi32, #tpu.memory_space<smem>>) -> (i32, i32) {
    %c0_i32 = arith.constant 0 : i32
    %c0_i32_0 = arith.constant 0 : i32
    return %arg0, %c0_i32 : i32, i32
  }
  func.func @transform_3(%arg0: i32, %arg1: i32, %arg2: memref<8xi32, #tpu.memory_space<smem>>) -> (i32, i32) {
    %c0_i32 = arith.constant 0 : i32
    %c0_i32_0 = arith.constant 0 : i32
    return %arg0, %c0_i32 : i32, i32
  }
  func.func @transform_4(%arg0: i32, %arg1: i32, %arg2: memref<8xi32, #tpu.memory_space<smem>>) -> (i32, i32) {
    %c0_i32 = arith.constant 0 : i32
    %c0_i32_0 = arith.constant 0 : i32
    return %arg0, %c0_i32 : i32, i32
  }
  func.func @transform_5(%arg0: i32, %arg1: i32, %arg2: memref<8xi32, #tpu.memory_space<smem>>) -> (i32, i32) {
    %c0_i32 = arith.constant 0 : i32
    %c0_i32_0 = arith.constant 0 : i32
    return %arg0, %c0_i32 : i32, i32
  }
}

</mosaic_0001>

<llo_original>
// kernel: tpu_custom_call.1
$region0: #{tpu_custom_call.1}
  #allocation0 [shape = 'u32[]', space=smem, size = 0x4, offset = 0x4, fixed_abs, tag = 'smem constant byte address 0x4 - core index']
  #allocation1 [shape = 'u32[144,128]{1,0:T(1,128)}', space=vmem, size = 0x12000, scoped, tag = 'internal scratch']
  #allocation2 [shape = 'f32[512,9]{1,0:T(8,128)}', space=vmem, size = 0x40000, scoped, tag = 'scratch operand']
  #allocation3 [shape = 's32[1]{0}', space=sflag, size = 0x4, scoped, tag = 'scoped memory for tpu_custom_call.1']
  #allocation4 [shape = 'u8[512]{0}', space=smem, size = 0x200, scoped, tag = 'prefetched SMEM operand 0']
  %s0 = inlined_call_operand.vmem [shape: s32[8], index: 0, kind: input, shape index: {}]
  %s1 = inlined_call_operand.vmem [shape: f32[256,9], index: 1, kind: input, shape index: {}]
  %s2 = inlined_call_operand.vmem [shape: s32[256,3], index: 2, kind: input, shape index: {}]
  %s3 = inlined_call_operand.vmem [shape: f32[4096,8], index: 3, kind: input, shape index: {}, may-alias: {3,5}]
  %s4 = inlined_call_operand.vmem [shape: f32[4096,1], index: 4, kind: input, shape index: {}, may-alias: {4,6}]
  %s5 = inlined_call_operand.vmem [shape: f32[4096,8], index: 5, kind: output, shape index: {0}, may-alias: {3,5}]
  %s6 = inlined_call_operand.vmem [shape: f32[4096,1], index: 6, kind: output, shape index: {1}, may-alias: {4,6}]
  %7 = xla_tuple %s5, %s6
  %s8 = sld [smem:[#allocation0]]
  $region77: #{tpu_custom_call.1} parent=0
    _
  %s10 = ssub.s32 1, %s8
  %s11 = scalar_select 0, %s10, %s8
  %s12 = sshll.u32 %s0, 4
  %s13 = int_to_ptr.vmem [resolvable:$true] %s12
  %15 = dma.vmem_to_smem %s13, 16, [#allocation4], [#allocation3]
  %16 = dma.done [#allocation3], 16
  %17 = sfence
  loop: start=0, step=1, limit=10
  $region2: #{tpu_custom_call.1} parent=0 // loop_pre_header
    _
  $region3: #{tpu_custom_call.1} parent=0 // loop_header
    %s19 = sphi 0, %s23
    %p20 = scmp.ge.s32.totalorder %s19, 10
    %s26 = sphi 0, %s38
    %s27 = sphi 0, %s34
    %s28 = sphi 0, %s26
    %s29 = sphi 0, %s27
    %s30 = sphi 0, %s28
    %s31 = sphi 0, %s29
    %s41 = sphi 0, %s43
    %s44 = sphi 0, %s41
    %s45 = sphi 0, %s44
    %s61 = sphi 0, %s45
    %s67 = sphi 0, %s69
    %s70 = sphi 0, %s67
    %s71 = sphi 0, %s70
    %s87 = sphi 0, %s71
    %s93 = sphi 0, %s95
    %s96 = sphi 0, %s93
    %s97 = sphi 0, %s96
    %s113 = sphi 0, %s97
    %s119 = sphi 0, %s121
    %s122 = sphi 0, %s119
    %s123 = sphi 0, %s122
    %s139 = sphi 0, %s123
    %s145 = sphi 0, %s147
    %s148 = sphi 0, %s145
    %s149 = sphi 0, %s148
    %s165 = sphi 0, %s149
    %s171 = sphi 0, %s173
    %s174 = sphi 0, %s171
    %s175 = sphi 0, %s174
    %s191 = sphi 0, %s175
  $region4: #{tpu_custom_call.1} parent=0 // loop_header_branch
    %22 = sbr.rel (%p20) target = $region8
  $region5: #{tpu_custom_call.1} parent=0 // loop_body
    %s24 = ssub.s32 %s19, 1
    %s25 = ssub.s32 %s19, 2
    %s32 = sadd.s32 1, %s27
    %p33 = scmp.ge.s32.totalorder %s32, 1
    %s34 = scalar_select %p33, 0, %s32
    %s35 = sadd.s32 1, %s26
    %s36 = scalar_select %p33, %s35, %s26
    %p37 = scmp.ge.s32.totalorder %s36, 8
    %s38 = scalar_select %p37, 0, %s36
    %s39 = ssub.s32 %s27, %s34
    %p40 = scmp.eq.s32.totalorder %s39, 0
    %s42 = sadd.s32 %s41, 1
    %s43 = scalar_select %p40, %s41, %s42
    %p46 = pneg %p40
    %p47 = scmp.eq.s32.totalorder %s19, 7
    %p48 = por %p46, %p47
    %p49 = scmp.ne.s32.totalorder %s41, %s44
    %p50 = scmp.eq.s32.totalorder %s19, 0
    %p51 = por %p49, %p50
    %p52 = scmp.ne.s32.totalorder %s41, %s44
    %p53 = scmp.eq.s32.totalorder %s24, 7
    %p54 = por %p52, %p53
    %p55 = scmp.ne.s32.totalorder %s44, %s45
    %p56 = scmp.eq.s32.totalorder %s24, 0
    %p57 = por %p55, %p56
    %p58 = scmp.ne.s32.totalorder %s44, %s45
    %p59 = scmp.eq.s32.totalorder %s25, 7
    %p60 = por %p58, %p59
    %p62 = scmp.ne.s32.totalorder %s45, %s61
    %p63 = scmp.eq.s32.totalorder %s25, 0
    %p64 = por %p62, %p63
    %s65 = ssub.s32 %s27, %s34
    %p66 = scmp.eq.s32.totalorder %s65, 0
    %s68 = sadd.s32 %s67, 1
    %s69 = scalar_select %p66, %s67, %s68
    %p72 = pneg %p66
    %p73 = scmp.eq.s32.totalorder %s19, 7
    %p74 = por %p72, %p73
    %p75 = scmp.ne.s32.totalorder %s67, %s70
    %p76 = scmp.eq.s32.totalorder %s19, 0
    %p77 = por %p75, %p76
    %p78 = scmp.ne.s32.totalorder %s67, %s70
    %p79 = scmp.eq.s32.totalorder %s24, 7
    %p80 = por %p78, %p79
    %p81 = scmp.ne.s32.totalorder %s70, %s71
    %p82 = scmp.eq.s32.totalorder %s24, 0
    %p83 = por %p81, %p82
    %p84 = scmp.ne.s32.totalorder %s70, %s71
    %p85 = scmp.eq.s32.totalorder %s25, 7
    %p86 = por %p84, %p85
    %p88 = scmp.ne.s32.totalorder %s71, %s87
    %p89 = scmp.eq.s32.totalorder %s25, 0
    %p90 = por %p88, %p89
    %s91 = ssub.s32 %s26, %s38
    %p92 = scmp.eq.s32.totalorder %s91, 0
    %s94 = sadd.s32 %s93, 1
    %s95 = scalar_select %p92, %s93, %s94
    %p98 = pneg %p92
    %p99 = scmp.eq.s32.totalorder %s19, 7
    %p100 = por %p98, %p99
    %p101 = scmp.ne.s32.totalorder %s93, %s96
    %p102 = scmp.eq.s32.totalorder %s19, 0
    %p103 = por %p101, %p102
    %p104 = scmp.ne.s32.totalorder %s93, %s96
    %p105 = scmp.eq.s32.totalorder %s24, 7
    %p106 = por %p104, %p105
    %p107 = scmp.ne.s32.totalorder %s96, %s97
    %p108 = scmp.eq.s32.totalorder %s24, 0
    %p109 = por %p107, %p108
    %p110 = scmp.ne.s32.totalorder %s96, %s97
    %p111 = scmp.eq.s32.totalorder %s25, 7
    %p112 = por %p110, %p111
    %p114 = scmp.ne.s32.totalorder %s97, %s113
    %p115 = scmp.eq.s32.totalorder %s25, 0
    %p116 = por %p114, %p115
    %s117 = ssub.s32 %s26, %s38
    %p118 = scmp.eq.s32.totalorder %s117, 0
    %s120 = sadd.s32 %s119, 1
    %s121 = scalar_select %p118, %s119, %s120
    %p124 = pneg %p118
    %p125 = scmp.eq.s32.totalorder %s19, 7
    %p126 = por %p124, %p125
    %p127 = scmp.ne.s32.totalorder %s119, %s122
    %p128 = scmp.eq.s32.totalorder %s19, 0
    %p129 = por %p127, %p128
    %p130 = scmp.ne.s32.totalorder %s119, %s122
    %p131 = scmp.eq.s32.totalorder %s24, 7
    %p132 = por %p130, %p131
    %p133 = scmp.ne.s32.totalorder %s122, %s123
    %p134 = scmp.eq.s32.totalorder %s24, 0
    %p135 = por %p133, %p134
    %p136 = scmp.ne.s32.totalorder %s122, %s123
    %p137 = scmp.eq.s32.totalorder %s25, 7
    %p138 = por %p136, %p137
    %p140 = scmp.ne.s32.totalorder %s123, %s139
    %p141 = scmp.eq.s32.totalorder %s25, 0
    %p142 = por %p140, %p141
    %s143 = ssub.s32 %s26, %s38
    %p144 = scmp.eq.s32.totalorder %s143, 0
    %s146 = sadd.s32 %s145, 1
    %s147 = scalar_select %p144, %s145, %s146
    %p150 = pneg %p144
    %p151 = scmp.eq.s32.totalorder %s19, 7
    %p152 = por %p150, %p151
    %p153 = scmp.ne.s32.totalorder %s145, %s148
    %p154 = scmp.eq.s32.totalorder %s19, 0
    %p155 = por %p153, %p154
    %p156 = scmp.ne.s32.totalorder %s145, %s148
    %p157 = scmp.eq.s32.totalorder %s24, 7
    %p158 = por %p156, %p157
    %p159 = scmp.ne.s32.totalorder %s148, %s149
    %p160 = scmp.eq.s32.totalorder %s24, 0
    %p161 = por %p159, %p160
    %p162 = scmp.ne.s32.totalorder %s148, %s149
    %p163 = scmp.eq.s32.totalorder %s25, 7
    %p164 = por %p162, %p163
    %p166 = scmp.ne.s32.totalorder %s149, %s165
    %p167 = scmp.eq.s32.totalorder %s25, 0
    %p168 = por %p166, %p167
    %s169 = ssub.s32 %s26, %s38
    %p170 = scmp.eq.s32.totalorder %s169, 0
    %s172 = sadd.s32 %s171, 1
    %s173 = scalar_select %p170, %s171, %s172
    %p176 = pneg %p170
    %p177 = scmp.eq.s32.totalorder %s19, 7
    %p178 = por %p176, %p177
    %p179 = scmp.ne.s32.totalorder %s171, %s174
    %p180 = scmp.eq.s32.totalorder %s19, 0
    %p181 = por %p179, %p180
    %p182 = scmp.ne.s32.totalorder %s171, %s174
    %p183 = scmp.eq.s32.totalorder %s24, 7
    %p184 = por %p182, %p183
    %p185 = scmp.ne.s32.totalorder %s174, %s175
    %p186 = scmp.eq.s32.totalorder %s24, 0
    %p187 = por %p185, %p186
    %p188 = scmp.ne.s32.totalorder %s174, %s175
    %p189 = scmp.eq.s32.totalorder %s25, 7
    %p190 = por %p188, %p189
    %p192 = scmp.ne.s32.totalorder %s175, %s191
    %p193 = scmp.eq.s32.totalorder %s25, 0
    %p194 = por %p192, %p193
    %p195 = scmp.le.s32.totalorder 1, %s19
    %p196 = scmp.lt.s32.totalorder %s19, 9
    %p197 = pnand %p195, %p196
    %p198 = pneg %p197
    // Predicated region
    $region9: #{tpu_custom_call.1} parent=5 // pred_check
      _
    $region10: #{tpu_custom_call.1} parent=5 // pred_check_branch
      %200 = sbr.rel (%p197) target = $region12
    $region11: #{tpu_custom_call.1} parent=5 // pred_region
      %s201 = ssub.s32 %s19, 1
      // Predicated region
      $region13: #{tpu_custom_call.1} parent=11 // pred_check
        %p202 = pneg %p57
      $region14: #{tpu_custom_call.1} parent=11 // pred_check_branch
        %204 = sbr.rel (%p202) target = $region16
      $region15: #{tpu_custom_call.1} parent=11 // pred_region
        %s205 = smul.u32 32, %s29
        %p206 = scmp.lt.s32.totalorder %s205, 31
        %s207 = scalar_select %p206, %s205, 31
        %s208 = smul.addr %s207, 8
        %s209 = scalar_lea.vmem %s1, %s208
        %s210 = smul.u32 32, %s29
      $region16: #{tpu_custom_call.1} parent=11 // pred_fallthru
        _
      // Predicated region
      $region17: #{tpu_custom_call.1} parent=11 // pred_check
        %p211 = pneg %p83
      $region18: #{tpu_custom_call.1} parent=11 // pred_check_branch
        %213 = sbr.rel (%p211) target = $region20
      $region19: #{tpu_custom_call.1} parent=11 // pred_region
        %s214 = smul.u32 32, %s29
        %p215 = scmp.lt.s32.totalorder %s214, 31
        %s216 = scalar_select %p215, %s214, 31
        %s217 = smul.addr %s216, 8
        %s218 = scalar_lea.vmem %s2, %s217
        %s219 = smul.u32 32, %s29
      $region20: #{tpu_custom_call.1} parent=11 // pred_fallthru
        _
    $region12: #{tpu_custom_call.1} parent=5 // pred_fallthru
      _
    %p220 = scmp.lt.s32.totalorder %s19, 8
    // Predicated region
    $region21: #{tpu_custom_call.1} parent=5 // pred_check
      %p221 = pneg %p220
    $region22: #{tpu_custom_call.1} parent=5 // pred_check_branch
      %223 = sbr.rel (%p221) target = $region24
    $region23: #{tpu_custom_call.1} parent=5 // pred_region
      // Predicated region
      $region25: #{tpu_custom_call.1} parent=23 // pred_check
        %p224 = pneg %p103
      $region26: #{tpu_custom_call.1} parent=23 // pred_check_branch
        %226 = sbr.rel (%p224) target = $region28
      $region27: #{tpu_custom_call.1} parent=23 // pred_region
        %s227 = smul.u32 64, %s26
        %p228 = scmp.lt.s32.totalorder %s227, 511
        %s229 = scalar_select %p228, %s227, 511
        %s230 = smul.addr %s229, 8
        %s231 = scalar_lea.vmem %s3, %s230
        %s232 = smul.u32 64, %s26
      $region28: #{tpu_custom_call.1} parent=23 // pred_fallthru
        _
      // Predicated region
      $region29: #{tpu_custom_call.1} parent=23 // pred_check
        %p233 = pneg %p129
      $region30: #{tpu_custom_call.1} parent=23 // pred_check_branch
        %235 = sbr.rel (%p233) target = $region32
      $region31: #{tpu_custom_call.1} parent=23 // pred_region
        %s236 = smul.u32 64, %s26
        %p237 = scmp.lt.s32.totalorder %s236, 511
        %s238 = scalar_select %p237, %s236, 511
        %s239 = smul.addr %s238, 8
        %s240 = scalar_lea.vmem %s4, %s239
        %s241 = smul.u32 64, %s26
      $region32: #{tpu_custom_call.1} parent=23 // pred_fallthru
        _
    $region24: #{tpu_custom_call.1} parent=5 // pred_fallthru
      _
    %p242 = scmp.le.s32.totalorder 1, %s19
    %p243 = scmp.lt.s32.totalorder %s19, 9
    %p244 = pnand %p242, %p243
    %p245 = pneg %p244
    // Predicated region
    $region33: #{tpu_custom_call.1} parent=5 // pred_check
      _
    $region34: #{tpu_custom_call.1} parent=5 // pred_check_branch
      %247 = sbr.rel (%p244) target = $region36
    $region35: #{tpu_custom_call.1} parent=5 // pred_region
      %s248 = ssub.s32 %s19, 1
      %s249 = smul.u32 32, %s29
      %p250 = scmp.lt.s32.totalorder %s249, 31
      %s251 = scalar_select %p250, %s249, 31
      %s252 = smul.addr %s251, 8
      %s253 = scalar_lea.vmem %s1, %s252
      %p254 = pneg %p57
      %p255 = pneg %p54
      %s256 = smul.u32 32, %s29
      %p257 = scmp.lt.s32.totalorder %s256, 31
      %s258 = scalar_select %p257, %s256, 31
      %s259 = smul.addr %s258, 8
      %s260 = scalar_lea.vmem %s2, %s259
      %p261 = pneg %p83
      %p262 = pneg %p80
      %s263 = smul.u32 64, %s28
      %p264 = scmp.lt.s32.totalorder %s263, 511
      %s265 = scalar_select %p264, %s263, 511
      %s266 = smul.addr %s265, 8
      %s267 = scalar_lea.vmem %s3, %s266
      %p268 = pneg %p109
      %p269 = pneg %p106
      %s270 = smul.u32 64, %s28
      %p271 = scmp.lt.s32.totalorder %s270, 511
      %s272 = scalar_select %p271, %s270, 511
      %s273 = smul.addr %s272, 8
      %s274 = scalar_lea.vmem %s4, %s273
      %p275 = pneg %p135
      %p276 = pneg %p132
      %p277 = pneg %p161
      %p278 = pneg %p158
      %s279 = smul.u32 64, %s28
      %p280 = scmp.lt.s32.totalorder %s279, 511
      %s281 = scalar_select %p280, %s279, 511
      %s282 = smul.addr %s281, 8
      %s283 = scalar_lea.vmem %s5, %s282
      %p284 = pneg %p187
      %p285 = pneg %p184
      %s286 = smul.u32 64, %s28
      %p287 = scmp.lt.s32.totalorder %s286, 511
      %s288 = scalar_select %p287, %s286, 511
      %s289 = smul.addr %s288, 8
      %s290 = scalar_lea.vmem %s6, %s289
      %s291 = smul.u32 32, %s29
      %p292 = scmp.lt.s32.totalorder %s291, 31
      %s293 = scalar_select %p292, %s291, 31
      %s294 = smul.addr %s293, 8
      %s295 = scalar_lea.vmem %s1, %s294
      %s296 = smul.u32 32, %s29
      %s297 = smul.u32 32, %s29
      %p298 = scmp.lt.s32.totalorder %s297, 31
      %s299 = scalar_select %p298, %s297, 31
      %s300 = smul.addr %s299, 8
      %s301 = scalar_lea.vmem %s2, %s300
      %s302 = smul.u32 32, %s29
      %s303 = smul.u32 64, %s28
      %p304 = scmp.lt.s32.totalorder %s303, 511
      %s305 = scalar_select %p304, %s303, 511
      %s306 = smul.addr %s305, 8
      %s307 = scalar_lea.vmem %s3, %s306
      %s308 = smul.u32 64, %s28
      %s309 = smul.u32 64, %s28
      %p310 = scmp.lt.s32.totalorder %s309, 511
      %s311 = scalar_select %p310, %s309, 511
      %s312 = smul.addr %s311, 8
      %s313 = scalar_lea.vmem %s4, %s312
      %s314 = smul.u32 64, %s28
      %s315 = smul.u32 64, %s28
      %p316 = scmp.lt.s32.totalorder %s315, 511
      %s317 = scalar_select %p316, %s315, 511
      %s318 = smul.addr %s317, 8
      %s319 = scalar_lea.vmem %s5, %s318
      %s320 = smul.u32 64, %s28
      %s321 = smul.u32 64, %s28
      %p322 = scmp.lt.s32.totalorder %s321, 511
      %s323 = scalar_select %p322, %s321, 511
      %s324 = smul.addr %s323, 8
      %s325 = scalar_lea.vmem %s6, %s324
      %s326 = smul.u32 64, %s28
      %s327 = smul.u32 %s28, 512
      %s328 = sld [smem:[#allocation4 + %s28]]
      %p329 = scmp.gt.s32.totalorder %s328, 0
      // Predicated region
      $region37: #{tpu_custom_call.1} parent=35 // pred_check
        %p330 = pneg %p329
      $region38: #{tpu_custom_call.1} parent=35 // pred_check_branch
        %332 = sbr.rel (%p330) target = $region40
      $region39: #{tpu_custom_call.1} parent=35 // pred_region
        %p333 = scmp.eq.s32.totalorder %s29, 0
        // Predicated region
        $region41: #{tpu_custom_call.1} parent=39 // pred_check
          %p334 = pneg %p333
        $region42: #{tpu_custom_call.1} parent=39 // pred_check_branch
          %336 = sbr.rel (%p334) target = $region44
        $region43: #{tpu_custom_call.1} parent=39 // pred_region
          %vm337 = vcmask 72704
          %338 = vst.msk [vmem:[#allocation2] sm:$0xff] %vm337, 0.0
          %339 = vst.msk [vmem:[#allocation2 + $0x8] sm:$0xff] %vm337, 0.0
          %340 = vst.msk [vmem:[#allocation2 + $0x10] sm:$0xff] %vm337, 0.0
          %341 = vst.msk [vmem:[#allocation2 + $0x18] sm:$0xff] %vm337, 0.0
          %342 = vst.msk [vmem:[#allocation2 + $0x20] sm:$0xff] %vm337, 0.0
          %343 = vst.msk [vmem:[#allocation2 + $0x28] sm:$0xff] %vm337, 0.0
          %344 = vst.msk [vmem:[#allocation2 + $0x30] sm:$0xff] %vm337, 0.0
          %345 = vst.msk [vmem:[#allocation2 + $0x38] sm:$0xff] %vm337, 0.0
          %346 = vst.msk [vmem:[#allocation2 + $0x40] sm:$0xff] %vm337, 0.0
          %347 = vst.msk [vmem:[#allocation2 + $0x48] sm:$0xff] %vm337, 0.0
          %348 = vst.msk [vmem:[#allocation2 + $0x50] sm:$0xff] %vm337, 0.0
          %349 = vst.msk [vmem:[#allocation2 + $0x58] sm:$0xff] %vm337, 0.0
          %350 = vst.msk [vmem:[#allocation2 + $0x60] sm:$0xff] %vm337, 0.0
          %351 = vst.msk [vmem:[#allocation2 + $0x68] sm:$0xff] %vm337, 0.0
          %352 = vst.msk [vmem:[#allocation2 + $0x70] sm:$0xff] %vm337, 0.0
          %353 = vst.msk [vmem:[#allocation2 + $0x78] sm:$0xff] %vm337, 0.0
          %354 = vst.msk [vmem:[#allocation2 + $0x80] sm:$0xff] %vm337, 0.0
          %355 = vst.msk [vmem:[#allocation2 + $0x88] sm:$0xff] %vm337, 0.0
          %356 = vst.msk [vmem:[#allocation2 + $0x90] sm:$0xff] %vm337, 0.0
          %357 = vst.msk [vmem:[#allocation2 + $0x98] sm:$0xff] %vm337, 0.0
          %358 = vst.msk [vmem:[#allocation2 + $0xa0] sm:$0xff] %vm337, 0.0
          %359 = vst.msk [vmem:[#allocation2 + $0xa8] sm:$0xff] %vm337, 0.0
          %360 = vst.msk [vmem:[#allocation2 + $0xb0] sm:$0xff] %vm337, 0.0
          %361 = vst.msk [vmem:[#allocation2 + $0xb8] sm:$0xff] %vm337, 0.0
          %362 = vst.msk [vmem:[#allocation2 + $0xc0] sm:$0xff] %vm337, 0.0
          %363 = vst.msk [vmem:[#allocation2 + $0xc8] sm:$0xff] %vm337, 0.0
          %364 = vst.msk [vmem:[#allocation2 + $0xd0] sm:$0xff] %vm337, 0.0
          %365 = vst.msk [vmem:[#allocation2 + $0xd8] sm:$0xff] %vm337, 0.0
          %366 = vst.msk [vmem:[#allocation2 + $0xe0] sm:$0xff] %vm337, 0.0
          %367 = vst.msk [vmem:[#allocation2 + $0xe8] sm:$0xff] %vm337, 0.0
          %368 = vst.msk [vmem:[#allocation2 + $0xf0] sm:$0xff] %vm337, 0.0
          %369 = vst.msk [vmem:[#allocation2 + $0xf8] sm:$0xff] %vm337, 0.0
          %370 = vst.msk [vmem:[#allocation2 + $0x100] sm:$0xff] %vm337, 0.0
          %371 = vst.msk [vmem:[#allocation2 + $0x108] sm:$0xff] %vm337, 0.0
          %372 = vst.msk [vmem:[#allocation2 + $0x110] sm:$0xff] %vm337, 0.0
          %373 = vst.msk [vmem:[#allocation2 + $0x118] sm:$0xff] %vm337, 0.0
          %374 = vst.msk [vmem:[#allocation2 + $0x120] sm:$0xff] %vm337, 0.0
          %375 = vst.msk [vmem:[#allocation2 + $0x128] sm:$0xff] %vm337, 0.0
          %376 = vst.msk [vmem:[#allocation2 + $0x130] sm:$0xff] %vm337, 0.0
          %377 = vst.msk [vmem:[#allocation2 + $0x138] sm:$0xff] %vm337, 0.0
          %378 = vst.msk [vmem:[#allocation2 + $0x140] sm:$0xff] %vm337, 0.0
          %379 = vst.msk [vmem:[#allocation2 + $0x148] sm:$0xff] %vm337, 0.0
          %380 = vst.msk [vmem:[#allocation2 + $0x150] sm:$0xff] %vm337, 0.0
          %381 = vst.msk [vmem:[#allocation2 + $0x158] sm:$0xff] %vm337, 0.0
          %382 = vst.msk [vmem:[#allocation2 + $0x160] sm:$0xff] %vm337, 0.0
          %383 = vst.msk [vmem:[#allocation2 + $0x168] sm:$0xff] %vm337, 0.0
          %384 = vst.msk [vmem:[#allocation2 + $0x170] sm:$0xff] %vm337, 0.0
          %385 = vst.msk [vmem:[#allocation2 + $0x178] sm:$0xff] %vm337, 0.0
          %386 = vst.msk [vmem:[#allocation2 + $0x180] sm:$0xff] %vm337, 0.0
          %387 = vst.msk [vmem:[#allocation2 + $0x188] sm:$0xff] %vm337, 0.0
          %388 = vst.msk [vmem:[#allocation2 + $0x190] sm:$0xff] %vm337, 0.0
          %389 = vst.msk [vmem:[#allocation2 + $0x198] sm:$0xff] %vm337, 0.0
          %390 = vst.msk [vmem:[#allocation2 + $0x1a0] sm:$0xff] %vm337, 0.0
          %391 = vst.msk [vmem:[#allocation2 + $0x1a8] sm:$0xff] %vm337, 0.0
          %392 = vst.msk [vmem:[#allocation2 + $0x1b0] sm:$0xff] %vm337, 0.0
          %393 = vst.msk [vmem:[#allocation2 + $0x1b8] sm:$0xff] %vm337, 0.0
          %394 = vst.msk [vmem:[#allocation2 + $0x1c0] sm:$0xff] %vm337, 0.0
          %395 = vst.msk [vmem:[#allocation2 + $0x1c8] sm:$0xff] %vm337, 0.0
          %396 = vst.msk [vmem:[#allocation2 + $0x1d0] sm:$0xff] %vm337, 0.0
          %397 = vst.msk [vmem:[#allocation2 + $0x1d8] sm:$0xff] %vm337, 0.0
          %398 = vst.msk [vmem:[#allocation2 + $0x1e0] sm:$0xff] %vm337, 0.0
          %399 = vst.msk [vmem:[#allocation2 + $0x1e8] sm:$0xff] %vm337, 0.0
          %400 = vst.msk [vmem:[#allocation2 + $0x1f0] sm:$0xff] %vm337, 0.0
          %401 = vst.msk [vmem:[#allocation2 + $0x1f8] sm:$0xff] %vm337, 0.0
        $region44: #{tpu_custom_call.1} parent=39 // pred_fallthru
          _
        %v402 = vld [vmem:[%s301] sm:$0xff]
        %v403 = vld [vmem:[%s301 + $0x8] sm:$0xff]
        %v404 = vld [vmem:[%s301 + $0x10] sm:$0xff]
        %v405 = vld [vmem:[%s301 + $0x18] sm:$0xff]
        %v406 = vld [vmem:[%s301 + $0x20] sm:$0xff]
        %v407 = vld [vmem:[%s301 + $0x28] sm:$0xff]
        %v408 = vld [vmem:[%s301 + $0x30] sm:$0xff]
        %v409 = vld [vmem:[%s301 + $0x38] sm:$0xff]
        %v410 = vld [vmem:[%s301 + $0x40] sm:$0xff]
        %v411 = vld [vmem:[%s301 + $0x48] sm:$0xff]
        %v412 = vld [vmem:[%s301 + $0x50] sm:$0xff]
        %v413 = vld [vmem:[%s301 + $0x58] sm:$0xff]
        %v414 = vld [vmem:[%s301 + $0x60] sm:$0xff]
        %v415 = vld [vmem:[%s301 + $0x68] sm:$0xff]
        %v416 = vld [vmem:[%s301 + $0x70] sm:$0xff]
        %v417 = vld [vmem:[%s301 + $0x78] sm:$0xff]
        %v418 = vld [vmem:[%s301 + $0x80] sm:$0xff]
        %v419 = vld [vmem:[%s301 + $0x88] sm:$0xff]
        %v420 = vld [vmem:[%s301 + $0x90] sm:$0xff]
        %v421 = vld [vmem:[%s301 + $0x98] sm:$0xff]
        %v422 = vld [vmem:[%s301 + $0xa0] sm:$0xff]
        %v423 = vld [vmem:[%s301 + $0xa8] sm:$0xff]
        %v424 = vld [vmem:[%s301 + $0xb0] sm:$0xff]
        %v425 = vld [vmem:[%s301 + $0xb8] sm:$0xff]
        %v426 = vld [vmem:[%s301 + $0xc0] sm:$0xff]
        %v427 = vld [vmem:[%s301 + $0xc8] sm:$0xff]
        %v428 = vld [vmem:[%s301 + $0xd0] sm:$0xff]
        %v429 = vld [vmem:[%s301 + $0xd8] sm:$0xff]
        %v430 = vld [vmem:[%s301 + $0xe0] sm:$0xff]
        %v431 = vld [vmem:[%s301 + $0xe8] sm:$0xff]
        %v432 = vld [vmem:[%s301 + $0xf0] sm:$0xff]
        %v433 = vld [vmem:[%s301 + $0xf8] sm:$0xff]
        %vm434 = vcmp.ge.s32.totalorder %v402, 0
        %vm435 = vcmp.ge.s32.totalorder %v403, 0
        %vm436 = vcmp.ge.s32.totalorder %v404, 0
        %vm437 = vcmp.ge.s32.totalorder %v405, 0
        %vm438 = vcmp.ge.s32.totalorder %v406, 0
        %vm439 = vcmp.ge.s32.totalorder %v407, 0
        %vm440 = vcmp.ge.s32.totalorder %v408, 0
        %vm441 = vcmp.ge.s32.totalorder %v409, 0
        %vm442 = vcmp.ge.s32.totalorder %v410, 0
        %vm443 = vcmp.ge.s32.totalorder %v411, 0
        %vm444 = vcmp.ge.s32.totalorder %v412, 0
        %vm445 = vcmp.ge.s32.totalorder %v413, 0
        %vm446 = vcmp.ge.s32.totalorder %v414, 0
        %vm447 = vcmp.ge.s32.totalorder %v415, 0
        %vm448 = vcmp.ge.s32.totalorder %v416, 0
        %vm449 = vcmp.ge.s32.totalorder %v417, 0
        %vm450 = vcmp.ge.s32.totalorder %v418, 0
        %vm451 = vcmp.ge.s32.totalorder %v419, 0
        %vm452 = vcmp.ge.s32.totalorder %v420, 0
        %vm453 = vcmp.ge.s32.totalorder %v421, 0
        %vm454 = vcmp.ge.s32.totalorder %v422, 0
        %vm455 = vcmp.ge.s32.totalorder %v423, 0
        %vm456 = vcmp.ge.s32.totalorder %v424, 0
        %vm457 = vcmp.ge.s32.totalorder %v425, 0
        %vm458 = vcmp.ge.s32.totalorder %v426, 0
        %vm459 = vcmp.ge.s32.totalorder %v427, 0
        %vm460 = vcmp.ge.s32.totalorder %v428, 0
        %vm461 = vcmp.ge.s32.totalorder %v429, 0
        %vm462 = vcmp.ge.s32.totalorder %v430, 0
        %vm463 = vcmp.ge.s32.totalorder %v431, 0
        %vm464 = vcmp.ge.s32.totalorder %v432, 0
        %vm465 = vcmp.ge.s32.totalorder %v433, 0
        %vm466 = vcmp.lt.s32.totalorder %v402, 16
        %vm467 = vcmp.lt.s32.totalorder %v403, 16
        %vm468 = vcmp.lt.s32.totalorder %v404, 16
        %vm469 = vcmp.lt.s32.totalorder %v405, 16
        %vm470 = vcmp.lt.s32.totalorder %v406, 16
        %vm471 = vcmp.lt.s32.totalorder %v407, 16
        %vm472 = vcmp.lt.s32.totalorder %v408, 16
        %vm473 = vcmp.lt.s32.totalorder %v409, 16
        %vm474 = vcmp.lt.s32.totalorder %v410, 16
        %vm475 = vcmp.lt.s32.totalorder %v411, 16
        %vm476 = vcmp.lt.s32.totalorder %v412, 16
        %vm477 = vcmp.lt.s32.totalorder %v413, 16
        %vm478 = vcmp.lt.s32.totalorder %v414, 16
        %vm479 = vcmp.lt.s32.totalorder %v415, 16
        %vm480 = vcmp.lt.s32.totalorder %v416, 16
        %vm481 = vcmp.lt.s32.totalorder %v417, 16
        %vm482 = vcmp.lt.s32.totalorder %v418, 16
        %vm483 = vcmp.lt.s32.totalorder %v419, 16
        %vm484 = vcmp.lt.s32.totalorder %v420, 16
        %vm485 = vcmp.lt.s32.totalorder %v421, 16
        %vm486 = vcmp.lt.s32.totalorder %v422, 16
        %vm487 = vcmp.lt.s32.totalorder %v423, 16
        %vm488 = vcmp.lt.s32.totalorder %v424, 16
        %vm489 = vcmp.lt.s32.totalorder %v425, 16
        %vm490 = vcmp.lt.s32.totalorder %v426, 16
        %vm491 = vcmp.lt.s32.totalorder %v427, 16
        %vm492 = vcmp.lt.s32.totalorder %v428, 16
        %vm493 = vcmp.lt.s32.totalorder %v429, 16
        %vm494 = vcmp.lt.s32.totalorder %v430, 16
        %vm495 = vcmp.lt.s32.totalorder %v431, 16
        %vm496 = vcmp.lt.s32.totalorder %v432, 16
        %vm497 = vcmp.lt.s32.totalorder %v433, 16
        %vm498 = vmand %vm434, %vm466
        %vm499 = vmand %vm435, %vm467
        %vm500 = vmand %vm436, %vm468
        %vm501 = vmand %vm437, %vm469
        %vm502 = vmand %vm438, %vm470
        %vm503 = vmand %vm439, %vm471
        %vm504 = vmand %vm440, %vm472
        %vm505 = vmand %vm441, %vm473
        %vm506 = vmand %vm442, %vm474
        %vm507 = vmand %vm443, %vm475
        %vm508 = vmand %vm444, %vm476
        %vm509 = vmand %vm445, %vm477
        %vm510 = vmand %vm446, %vm478
        %vm511 = vmand %vm447, %vm479
        %vm512 = vmand %vm448, %vm480
        %vm513 = vmand %vm449, %vm481
        %vm514 = vmand %vm450, %vm482
        %vm515 = vmand %vm451, %vm483
        %vm516 = vmand %vm452, %vm484
        %vm517 = vmand %vm453, %vm485
        %vm518 = vmand %vm454, %vm486
        %vm519 = vmand %vm455, %vm487
        %vm520 = vmand %vm456, %vm488
        %vm521 = vmand %vm457, %vm489
        %vm522 = vmand %vm458, %vm490
        %vm523 = vmand %vm459, %vm491
        %vm524 = vmand %vm460, %vm492
        %vm525 = vmand %vm461, %vm493
        %vm526 = vmand %vm462, %vm494
        %vm527 = vmand %vm463, %vm495
        %vm528 = vmand %vm464, %vm496
        %vm529 = vmand %vm465, %vm497
        %v530 = vsel %vm434, 1, 0
        %v531 = vsel %vm435, 1, 0
        %v532 = vsel %vm436, 1, 0
        %v533 = vsel %vm437, 1, 0
        %v534 = vsel %vm438, 1, 0
        %v535 = vsel %vm439, 1, 0
        %v536 = vsel %vm440, 1, 0
        %v537 = vsel %vm441, 1, 0
        %v538 = vsel %vm442, 1, 0
        %v539 = vsel %vm443, 1, 0
        %v540 = vsel %vm444, 1, 0
        %v541 = vsel %vm445, 1, 0
        %v542 = vsel %vm446, 1, 0
        %v543 = vsel %vm447, 1, 0
        %v544 = vsel %vm448, 1, 0
        %v545 = vsel %vm449, 1, 0
        %v546 = vsel %vm450, 1, 0
        %v547 = vsel %vm451, 1, 0
        %v548 = vsel %vm452, 1, 0
        %v549 = vsel %vm453, 1, 0
        %v550 = vsel %vm454, 1, 0
        %v551 = vsel %vm455, 1, 0
        %v552 = vsel %vm456, 1, 0
        %v553 = vsel %vm457, 1, 0
        %v554 = vsel %vm458, 1, 0
        %v555 = vsel %vm459, 1, 0
        %v556 = vsel %vm460, 1, 0
        %v557 = vsel %vm461, 1, 0
        %v558 = vsel %vm462, 1, 0
        %v559 = vsel %vm463, 1, 0
        %v560 = vsel %vm464, 1, 0
        %v561 = vsel %vm465, 1, 0
        %562 = vrot.lane.b32.xlu0 %v530, 127
        %v563 = vpop.permute.xlu0 %562
        %564 = vrot.lane.b32.xlu0 %v531, 127
        %v565 = vpop.permute.xlu0 %564
        %566 = vrot.lane.b32.xlu0 %v532, 127
        %v567 = vpop.permute.xlu0 %566
        %568 = vrot.lane.b32.xlu0 %v533, 127
        %v569 = vpop.permute.xlu0 %568
        %570 = vrot.lane.b32.xlu0 %v534, 127
        %v571 = vpop.permute.xlu0 %570
        %572 = vrot.lane.b32.xlu0 %v535, 127
        %v573 = vpop.permute.xlu0 %572
        %574 = vrot.lane.b32.xlu0 %v536, 127
        %v575 = vpop.permute.xlu0 %574
        %576 = vrot.lane.b32.xlu0 %v537, 127
        %v577 = vpop.permute.xlu0 %576
        %578 = vrot.lane.b32.xlu0 %v538, 127
        %v579 = vpop.permute.xlu0 %578
        %580 = vrot.lane.b32.xlu0 %v539, 127
        %v581 = vpop.permute.xlu0 %580
        %582 = vrot.lane.b32.xlu0 %v540, 127
        %v583 = vpop.permute.xlu0 %582
        %584 = vrot.lane.b32.xlu0 %v541, 127
        %v585 = vpop.permute.xlu0 %584
        %586 = vrot.lane.b32.xlu0 %v542, 127
        %v587 = vpop.permute.xlu0 %586
        %588 = vrot.lane.b32.xlu0 %v543, 127
        %v589 = vpop.permute.xlu0 %588
        %590 = vrot.lane.b32.xlu0 %v544, 127
        %v591 = vpop.permute.xlu0 %590
        %592 = vrot.lane.b32.xlu0 %v545, 127
        %v593 = vpop.permute.xlu0 %592
        %594 = vrot.lane.b32.xlu0 %v546, 127
        %v595 = vpop.permute.xlu0 %594
        %596 = vrot.lane.b32.xlu0 %v547, 127
        %v597 = vpop.permute.xlu0 %596
        %598 = vrot.lane.b32.xlu0 %v548, 127
        %v599 = vpop.permute.xlu0 %598
        %600 = vrot.lane.b32.xlu0 %v549, 127
        %v601 = vpop.permute.xlu0 %600
        %602 = vrot.lane.b32.xlu0 %v550, 127
        %v603 = vpop.permute.xlu0 %602
        %604 = vrot.lane.b32.xlu0 %v551, 127
        %v605 = vpop.permute.xlu0 %604
        %606 = vrot.lane.b32.xlu0 %v552, 127
        %v607 = vpop.permute.xlu0 %606
        %608 = vrot.lane.b32.xlu0 %v553, 127
        %v609 = vpop.permute.xlu0 %608
        %610 = vrot.lane.b32.xlu0 %v554, 127
        %v611 = vpop.permute.xlu0 %610
        %612 = vrot.lane.b32.xlu0 %v555, 127
        %v613 = vpop.permute.xlu0 %612
        %614 = vrot.lane.b32.xlu0 %v556, 127
        %v615 = vpop.permute.xlu0 %614
        %616 = vrot.lane.b32.xlu0 %v557, 127
        %v617 = vpop.permute.xlu0 %616
        %618 = vrot.lane.b32.xlu0 %v558, 127
        %v619 = vpop.permute.xlu0 %618
        %620 = vrot.lane.b32.xlu0 %v559, 127
        %v621 = vpop.permute.xlu0 %620
        %622 = vrot.lane.b32.xlu0 %v560, 127
        %v623 = vpop.permute.xlu0 %622
        %624 = vrot.lane.b32.xlu0 %v561, 127
        %v625 = vpop.permute.xlu0 %624
        %vm626 = vcmp.ne.s32.totalorder %v563, 0
        %vm627 = vcmp.ne.s32.totalorder %v565, 0
        %vm628 = vcmp.ne.s32.totalorder %v567, 0
        %vm629 = vcmp.ne.s32.totalorder %v569, 0
        %vm630 = vcmp.ne.s32.totalorder %v571, 0
        %vm631 = vcmp.ne.s32.totalorder %v573, 0
        %vm632 = vcmp.ne.s32.totalorder %v575, 0
        %vm633 = vcmp.ne.s32.totalorder %v577, 0
        %vm634 = vcmp.ne.s32.totalorder %v579, 0
        %vm635 = vcmp.ne.s32.totalorder %v581, 0
        %vm636 = vcmp.ne.s32.totalorder %v583, 0
        %vm637 = vcmp.ne.s32.totalorder %v585, 0
        %vm638 = vcmp.ne.s32.totalorder %v587, 0
        %vm639 = vcmp.ne.s32.totalorder %v589, 0
        %vm640 = vcmp.ne.s32.totalorder %v591, 0
        %vm641 = vcmp.ne.s32.totalorder %v593, 0
        %vm642 = vcmp.ne.s32.totalorder %v595, 0
        %vm643 = vcmp.ne.s32.totalorder %v597, 0
        %vm644 = vcmp.ne.s32.totalorder %v599, 0
        %vm645 = vcmp.ne.s32.totalorder %v601, 0
        %vm646 = vcmp.ne.s32.totalorder %v603, 0
        %vm647 = vcmp.ne.s32.totalorder %v605, 0
        %vm648 = vcmp.ne.s32.totalorder %v607, 0
        %vm649 = vcmp.ne.s32.totalorder %v609, 0
        %vm650 = vcmp.ne.s32.totalorder %v611, 0
        %vm651 = vcmp.ne.s32.totalorder %v613, 0
        %vm652 = vcmp.ne.s32.totalorder %v615, 0
        %vm653 = vcmp.ne.s32.totalorder %v617, 0
        %vm654 = vcmp.ne.s32.totalorder %v619, 0
        %vm655 = vcmp.ne.s32.totalorder %v621, 0
        %vm656 = vcmp.ne.s32.totalorder %v623, 0
        %vm657 = vcmp.ne.s32.totalorder %v625, 0
        %vm658 = vmand %vm498, %vm626
        %vm659 = vmand %vm499, %vm627
        %vm660 = vmand %vm500, %vm628
        %vm661 = vmand %vm501, %vm629
        %vm662 = vmand %vm502, %vm630
        %vm663 = vmand %vm503, %vm631
        %vm664 = vmand %vm504, %vm632
        %vm665 = vmand %vm505, %vm633
        %vm666 = vmand %vm506, %vm634
        %vm667 = vmand %vm507, %vm635
        %vm668 = vmand %vm508, %vm636
        %vm669 = vmand %vm509, %vm637
        %vm670 = vmand %vm510, %vm638
        %vm671 = vmand %vm511, %vm639
        %vm672 = vmand %vm512, %vm640
        %vm673 = vmand %vm513, %vm641
        %vm674 = vmand %vm514, %vm642
        %vm675 = vmand %vm515, %vm643
        %vm676 = vmand %vm516, %vm644
        %vm677 = vmand %vm517, %vm645
        %vm678 = vmand %vm518, %vm646
        %vm679 = vmand %vm519, %vm647
        %vm680 = vmand %vm520, %vm648
        %vm681 = vmand %vm521, %vm649
        %vm682 = vmand %vm522, %vm650
        %vm683 = vmand %vm523, %vm651
        %vm684 = vmand %vm524, %vm652
        %vm685 = vmand %vm525, %vm653
        %vm686 = vmand %vm526, %vm654
        %vm687 = vmand %vm527, %vm655
        %vm688 = vmand %vm528, %vm656
        %vm689 = vmand %vm529, %vm657
        %v690 = vsel %vm466, 1, 0
        %v691 = vsel %vm467, 1, 0
        %v692 = vsel %vm468, 1, 0
        %v693 = vsel %vm469, 1, 0
        %v694 = vsel %vm470, 1, 0
        %v695 = vsel %vm471, 1, 0
        %v696 = vsel %vm472, 1, 0
        %v697 = vsel %vm473, 1, 0
        %v698 = vsel %vm474, 1, 0
        %v699 = vsel %vm475, 1, 0
        %v700 = vsel %vm476, 1, 0
        %v701 = vsel %vm477, 1, 0
        %v702 = vsel %vm478, 1, 0
        %v703 = vsel %vm479, 1, 0
        %v704 = vsel %vm480, 1, 0
        %v705 = vsel %vm481, 1, 0
        %v706 = vsel %vm482, 1, 0
        %v707 = vsel %vm483, 1, 0
        %v708 = vsel %vm484, 1, 0
        %v709 = vsel %vm485, 1, 0
        %v710 = vsel %vm486, 1, 0
        %v711 = vsel %vm487, 1, 0
        %v712 = vsel %vm488, 1, 0
        %v713 = vsel %vm489, 1, 0
        %v714 = vsel %vm490, 1, 0
        %v715 = vsel %vm491, 1, 0
        %v716 = vsel %vm492, 1, 0
        %v717 = vsel %vm493, 1, 0
        %v718 = vsel %vm494, 1, 0
        %v719 = vsel %vm495, 1, 0
        %v720 = vsel %vm496, 1, 0
        %v721 = vsel %vm497, 1, 0
        %722 = vrot.lane.b32.xlu0 %v690, 127
        %v723 = vpop.permute.xlu0 %722
        %724 = vrot.lane.b32.xlu0 %v691, 127
        %v725 = vpop.permute.xlu0 %724
        %726 = vrot.lane.b32.xlu0 %v692, 127
        %v727 = vpop.permute.xlu0 %726
        %728 = vrot.lane.b32.xlu0 %v693, 127
        %v729 = vpop.permute.xlu0 %728
        %730 = vrot.lane.b32.xlu0 %v694, 127
        %v731 = vpop.permute.xlu0 %730
        %732 = vrot.lane.b32.xlu0 %v695, 127
        %v733 = vpop.permute.xlu0 %732
        %734 = vrot.lane.b32.xlu0 %v696, 127
        %v735 = vpop.permute.xlu0 %734
        %736 = vrot.lane.b32.xlu0 %v697, 127
        %v737 = vpop.permute.xlu0 %736
        %738 = vrot.lane.b32.xlu0 %v698, 127
        %v739 = vpop.permute.xlu0 %738
        %740 = vrot.lane.b32.xlu0 %v699, 127
        %v741 = vpop.permute.xlu0 %740
        %742 = vrot.lane.b32.xlu0 %v700, 127
        %v743 = vpop.permute.xlu0 %742
        %744 = vrot.lane.b32.xlu0 %v701, 127
        %v745 = vpop.permute.xlu0 %744
        %746 = vrot.lane.b32.xlu0 %v702, 127
        %v747 = vpop.permute.xlu0 %746
        %748 = vrot.lane.b32.xlu0 %v703, 127
        %v749 = vpop.permute.xlu0 %748
        %750 = vrot.lane.b32.xlu0 %v704, 127
        %v751 = vpop.permute.xlu0 %750
        %752 = vrot.lane.b32.xlu0 %v705, 127
        %v753 = vpop.permute.xlu0 %752
        %754 = vrot.lane.b32.xlu0 %v706, 127
        %v755 = vpop.permute.xlu0 %754
        %756 = vrot.lane.b32.xlu0 %v707, 127
        %v757 = vpop.permute.xlu0 %756
        %758 = vrot.lane.b32.xlu0 %v708, 127
        %v759 = vpop.permute.xlu0 %758
        %760 = vrot.lane.b32.xlu0 %v709, 127
        %v761 = vpop.permute.xlu0 %760
        %762 = vrot.lane.b32.xlu0 %v710, 127
        %v763 = vpop.permute.xlu0 %762
        %764 = vrot.lane.b32.xlu0 %v711, 127
        %v765 = vpop.permute.xlu0 %764
        %766 = vrot.lane.b32.xlu0 %v712, 127
        %v767 = vpop.permute.xlu0 %766
        %768 = vrot.lane.b32.xlu0 %v713, 127
        %v769 = vpop.permute.xlu0 %768
        %770 = vrot.lane.b32.xlu0 %v714, 127
        %v771 = vpop.permute.xlu0 %770
        %772 = vrot.lane.b32.xlu0 %v715, 127
        %v773 = vpop.permute.xlu0 %772
        %774 = vrot.lane.b32.xlu0 %v716, 127
        %v775 = vpop.permute.xlu0 %774
        %776 = vrot.lane.b32.xlu0 %v717, 127
        %v777 = vpop.permute.xlu0 %776
        %778 = vrot.lane.b32.xlu0 %v718, 127
        %v779 = vpop.permute.xlu0 %778
        %780 = vrot.lane.b32.xlu0 %v719, 127
        %v781 = vpop.permute.xlu0 %780
        %782 = vrot.lane.b32.xlu0 %v720, 127
        %v783 = vpop.permute.xlu0 %782
        %784 = vrot.lane.b32.xlu0 %v721, 127
        %v785 = vpop.permute.xlu0 %784
        %vm786 = vcmp.ne.s32.totalorder %v723, 0
        %vm787 = vcmp.ne.s32.totalorder %v725, 0
        %vm788 = vcmp.ne.s32.totalorder %v727, 0
        %vm789 = vcmp.ne.s32.totalorder %v729, 0
        %vm790 = vcmp.ne.s32.totalorder %v731, 0
        %vm791 = vcmp.ne.s32.totalorder %v733, 0
        %vm792 = vcmp.ne.s32.totalorder %v735, 0
        %vm793 = vcmp.ne.s32.totalorder %v737, 0
        %vm794 = vcmp.ne.s32.totalorder %v739, 0
        %vm795 = vcmp.ne.s32.totalorder %v741, 0
        %vm796 = vcmp.ne.s32.totalorder %v743, 0
        %vm797 = vcmp.ne.s32.totalorder %v745, 0
        %vm798 = vcmp.ne.s32.totalorder %v747, 0
        %vm799 = vcmp.ne.s32.totalorder %v749, 0
        %vm800 = vcmp.ne.s32.totalorder %v751, 0
        %vm801 = vcmp.ne.s32.totalorder %v753, 0
        %vm802 = vcmp.ne.s32.totalorder %v755, 0
        %vm803 = vcmp.ne.s32.totalorder %v757, 0
        %vm804 = vcmp.ne.s32.totalorder %v759, 0
        %vm805 = vcmp.ne.s32.totalorder %v761, 0
        %vm806 = vcmp.ne.s32.totalorder %v763, 0
        %vm807 = vcmp.ne.s32.totalorder %v765, 0
        %vm808 = vcmp.ne.s32.totalorder %v767, 0
        %vm809 = vcmp.ne.s32.totalorder %v769, 0
        %vm810 = vcmp.ne.s32.totalorder %v771, 0
        %vm811 = vcmp.ne.s32.totalorder %v773, 0
        %vm812 = vcmp.ne.s32.totalorder %v775, 0
        %vm813 = vcmp.ne.s32.totalorder %v777, 0
        %vm814 = vcmp.ne.s32.totalorder %v779, 0
        %vm815 = vcmp.ne.s32.totalorder %v781, 0
        %vm816 = vcmp.ne.s32.totalorder %v783, 0
        %vm817 = vcmp.ne.s32.totalorder %v785, 0
        %vm818 = vmand %vm658, %vm786
        %vm819 = vmand %vm659, %vm787
        %vm820 = vmand %vm660, %vm788
        %vm821 = vmand %vm661, %vm789
        %vm822 = vmand %vm662, %vm790
        %vm823 = vmand %vm663, %vm791
        %vm824 = vmand %vm664, %vm792
        %vm825 = vmand %vm665, %vm793
        %vm826 = vmand %vm666, %vm794
        %vm827 = vmand %vm667, %vm795
        %vm828 = vmand %vm668, %vm796
        %vm829 = vmand %vm669, %vm797
        %vm830 = vmand %vm670, %vm798
        %vm831 = vmand %vm671, %vm799
        %vm832 = vmand %vm672, %vm800
        %vm833 = vmand %vm673, %vm801
        %vm834 = vmand %vm674, %vm802
        %vm835 = vmand %vm675, %vm803
        %vm836 = vmand %vm676, %vm804
        %vm837 = vmand %vm677, %vm805
        %vm838 = vmand %vm678, %vm806
        %vm839 = vmand %vm679, %vm807
        %vm840 = vmand %vm680, %vm808
        %vm841 = vmand %vm681, %vm809
        %vm842 = vmand %vm682, %vm810
        %vm843 = vmand %vm683, %vm811
        %vm844 = vmand %vm684, %vm812
        %vm845 = vmand %vm685, %vm813
        %vm846 = vmand %vm686, %vm814
        %vm847 = vmand %vm687, %vm815
        %vm848 = vmand %vm688, %vm816
        %vm849 = vmand %vm689, %vm817
        %850 = vrot.lane.b32.xlu0 %v530, 126
        %v851 = vpop.permute.xlu0 %850
        %852 = vrot.lane.b32.xlu0 %v531, 126
        %v853 = vpop.permute.xlu0 %852
        %854 = vrot.lane.b32.xlu0 %v532, 126
        %v855 = vpop.permute.xlu0 %854
        %856 = vrot.lane.b32.xlu0 %v533, 126
        %v857 = vpop.permute.xlu0 %856
        %858 = vrot.lane.b32.xlu0 %v534, 126
        %v859 = vpop.permute.xlu0 %858
        %860 = vrot.lane.b32.xlu0 %v535, 126
        %v861 = vpop.permute.xlu0 %860
        %862 = vrot.lane.b32.xlu0 %v536, 126
        %v863 = vpop.permute.xlu0 %862
        %864 = vrot.lane.b32.xlu0 %v537, 126
        %v865 = vpop.permute.xlu0 %864
        %866 = vrot.lane.b32.xlu0 %v538, 126
        %v867 = vpop.permute.xlu0 %866
        %868 = vrot.lane.b32.xlu0 %v539, 126
        %v869 = vpop.permute.xlu0 %868
        %870 = vrot.lane.b32.xlu0 %v540, 126
        %v871 = vpop.permute.xlu0 %870
        %872 = vrot.lane.b32.xlu0 %v541, 126
        %v873 = vpop.permute.xlu0 %872
        %874 = vrot.lane.b32.xlu0 %v542, 126
        %v875 = vpop.permute.xlu0 %874
        %876 = vrot.lane.b32.xlu0 %v543, 126
        %v877 = vpop.permute.xlu0 %876
        %878 = vrot.lane.b32.xlu0 %v544, 126
        %v879 = vpop.permute.xlu0 %878
        %880 = vrot.lane.b32.xlu0 %v545, 126
        %v881 = vpop.permute.xlu0 %880
        %882 = vrot.lane.b32.xlu0 %v546, 126
        %v883 = vpop.permute.xlu0 %882
        %884 = vrot.lane.b32.xlu0 %v547, 126
        %v885 = vpop.permute.xlu0 %884
        %886 = vrot.lane.b32.xlu0 %v548, 126
        %v887 = vpop.permute.xlu0 %886
        %888 = vrot.lane.b32.xlu0 %v549, 126
        %v889 = vpop.permute.xlu0 %888
        %890 = vrot.lane.b32.xlu0 %v550, 126
        %v891 = vpop.permute.xlu0 %890
        %892 = vrot.lane.b32.xlu0 %v551, 126
        %v893 = vpop.permute.xlu0 %892
        %894 = vrot.lane.b32.xlu0 %v552, 126
        %v895 = vpop.permute.xlu0 %894
        %896 = vrot.lane.b32.xlu0 %v553, 126
        %v897 = vpop.permute.xlu0 %896
        %898 = vrot.lane.b32.xlu0 %v554, 126
        %v899 = vpop.permute.xlu0 %898
        %900 = vrot.lane.b32.xlu0 %v555, 126
        %v901 = vpop.permute.xlu0 %900
        %902 = vrot.lane.b32.xlu0 %v556, 126
        %v903 = vpop.permute.xlu0 %902
        %904 = vrot.lane.b32.xlu0 %v557, 126
        %v905 = vpop.permute.xlu0 %904
        %906 = vrot.lane.b32.xlu0 %v558, 126
        %v907 = vpop.permute.xlu0 %906
        %908 = vrot.lane.b32.xlu0 %v559, 126
        %v909 = vpop.permute.xlu0 %908
        %910 = vrot.lane.b32.xlu0 %v560, 126
        %v911 = vpop.permute.xlu0 %910
        %912 = vrot.lane.b32.xlu0 %v561, 126
        %v913 = vpop.permute.xlu0 %912
        %vm914 = vcmp.ne.s32.totalorder %v851, 0
        %vm915 = vcmp.ne.s32.totalorder %v853, 0
        %vm916 = vcmp.ne.s32.totalorder %v855, 0
        %vm917 = vcmp.ne.s32.totalorder %v857, 0
        %vm918 = vcmp.ne.s32.totalorder %v859, 0
        %vm919 = vcmp.ne.s32.totalorder %v861, 0
        %vm920 = vcmp.ne.s32.totalorder %v863, 0
        %vm921 = vcmp.ne.s32.totalorder %v865, 0
        %vm922 = vcmp.ne.s32.totalorder %v867, 0
        %vm923 = vcmp.ne.s32.totalorder %v869, 0
        %vm924 = vcmp.ne.s32.totalorder %v871, 0
        %vm925 = vcmp.ne.s32.totalorder %v873, 0
        %vm926 = vcmp.ne.s32.totalorder %v875, 0
        %vm927 = vcmp.ne.s32.totalorder %v877, 0
        %vm928 = vcmp.ne.s32.totalorder %v879, 0
        %vm929 = vcmp.ne.s32.totalorder %v881, 0
        %vm930 = vcmp.ne.s32.totalorder %v883, 0
        %vm931 = vcmp.ne.s32.totalorder %v885, 0
        %vm932 = vcmp.ne.s32.totalorder %v887, 0
        %vm933 = vcmp.ne.s32.totalorder %v889, 0
        %vm934 = vcmp.ne.s32.totalorder %v891, 0
        %vm935 = vcmp.ne.s32.totalorder %v893, 0
        %vm936 = vcmp.ne.s32.totalorder %v895, 0
        %vm937 = vcmp.ne.s32.totalorder %v897, 0
        %vm938 = vcmp.ne.s32.totalorder %v899, 0
        %vm939 = vcmp.ne.s32.totalorder %v901, 0
        %vm940 = vcmp.ne.s32.totalorder %v903, 0
        %vm941 = vcmp.ne.s32.totalorder %v905, 0
        %vm942 = vcmp.ne.s32.totalorder %v907, 0
        %vm943 = vcmp.ne.s32.totalorder %v909, 0
        %vm944 = vcmp.ne.s32.totalorder %v911, 0
        %vm945 = vcmp.ne.s32.totalorder %v913, 0
        %vm946 = vmand %vm818, %vm914
        %vm947 = vmand %vm819, %vm915
        %vm948 = vmand %vm820, %vm916
        %vm949 = vmand %vm821, %vm917
        %vm950 = vmand %vm822, %vm918
        %vm951 = vmand %vm823, %vm919
        %vm952 = vmand %vm824, %vm920
        %vm953 = vmand %vm825, %vm921
        %vm954 = vmand %vm826, %vm922
        %vm955 = vmand %vm827, %vm923
        %vm956 = vmand %vm828, %vm924
        %vm957 = vmand %vm829, %vm925
        %vm958 = vmand %vm830, %vm926
        %vm959 = vmand %vm831, %vm927
        %vm960 = vmand %vm832, %vm928
        %vm961 = vmand %vm833, %vm929
        %vm962 = vmand %vm834, %vm930
        %vm963 = vmand %vm835, %vm931
        %vm964 = vmand %vm836, %vm932
        %vm965 = vmand %vm837, %vm933
        %vm966 = vmand %vm838, %vm934
        %vm967 = vmand %vm839, %vm935
        %vm968 = vmand %vm840, %vm936
        %vm969 = vmand %vm841, %vm937
        %vm970 = vmand %vm842, %vm938
        %vm971 = vmand %vm843, %vm939
        %vm972 = vmand %vm844, %vm940
        %vm973 = vmand %vm845, %vm941
        %vm974 = vmand %vm846, %vm942
        %vm975 = vmand %vm847, %vm943
        %vm976 = vmand %vm848, %vm944
        %vm977 = vmand %vm849, %vm945
        %978 = vrot.lane.b32.xlu0 %v690, 126
        %v979 = vpop.permute.xlu0 %978
        %980 = vrot.lane.b32.xlu0 %v691, 126
        %v981 = vpop.permute.xlu0 %980
        %982 = vrot.lane.b32.xlu0 %v692, 126
        %v983 = vpop.permute.xlu0 %982
        %984 = vrot.lane.b32.xlu0 %v693, 126
        %v985 = vpop.permute.xlu0 %984
        %986 = vrot.lane.b32.xlu0 %v694, 126
        %v987 = vpop.permute.xlu0 %986
        %988 = vrot.lane.b32.xlu0 %v695, 126
        %v989 = vpop.permute.xlu0 %988
        %990 = vrot.lane.b32.xlu0 %v696, 126
        %v991 = vpop.permute.xlu0 %990
        %992 = vrot.lane.b32.xlu0 %v697, 126
        %v993 = vpop.permute.xlu0 %992
        %994 = vrot.lane.b32.xlu0 %v698, 126
        %v995 = vpop.permute.xlu0 %994
        %996 = vrot.lane.b32.xlu0 %v699, 126
        %v997 = vpop.permute.xlu0 %996
        %998 = vrot.lane.b32.xlu0 %v700, 126
        %v999 = vpop.permute.xlu0 %998
        %1000 = vrot.lane.b32.xlu0 %v701, 126
        %v1001 = vpop.permute.xlu0 %1000
        %1002 = vrot.lane.b32.xlu0 %v702, 126
        %v1003 = vpop.permute.xlu0 %1002
        %1004 = vrot.lane.b32.xlu0 %v703, 126
        %v1005 = vpop.permute.xlu0 %1004
        %1006 = vrot.lane.b32.xlu0 %v704, 126
        %v1007 = vpop.permute.xlu0 %1006
        %1008 = vrot.lane.b32.xlu0 %v705, 126
        %v1009 = vpop.permute.xlu0 %1008
        %1010 = vrot.lane.b32.xlu0 %v706, 126
        %v1011 = vpop.permute.xlu0 %1010
        %1012 = vrot.lane.b32.xlu0 %v707, 126
        %v1013 = vpop.permute.xlu0 %1012
        %1014 = vrot.lane.b32.xlu0 %v708, 126
        %v1015 = vpop.permute.xlu0 %1014
        %1016 = vrot.lane.b32.xlu0 %v709, 126
        %v1017 = vpop.permute.xlu0 %1016
        %1018 = vrot.lane.b32.xlu0 %v710, 126
        %v1019 = vpop.permute.xlu0 %1018
        %1020 = vrot.lane.b32.xlu0 %v711, 126
        %v1021 = vpop.permute.xlu0 %1020
        %1022 = vrot.lane.b32.xlu0 %v712, 126
        %v1023 = vpop.permute.xlu0 %1022
        %1024 = vrot.lane.b32.xlu0 %v713, 126
        %v1025 = vpop.permute.xlu0 %1024
        %1026 = vrot.lane.b32.xlu0 %v714, 126
        %v1027 = vpop.permute.xlu0 %1026
        %1028 = vrot.lane.b32.xlu0 %v715, 126
        %v1029 = vpop.permute.xlu0 %1028
        %1030 = vrot.lane.b32.xlu0 %v716, 126
        %v1031 = vpop.permute.xlu0 %1030
        %1032 = vrot.lane.b32.xlu0 %v717, 126
        %v1033 = vpop.permute.xlu0 %1032
        %1034 = vrot.lane.b32.xlu0 %v718, 126
        %v1035 = vpop.permute.xlu0 %1034
        %1036 = vrot.lane.b32.xlu0 %v719, 126
        %v1037 = vpop.permute.xlu0 %1036
        %1038 = vrot.lane.b32.xlu0 %v720, 126
        %v1039 = vpop.permute.xlu0 %1038
        %1040 = vrot.lane.b32.xlu0 %v721, 126
        %v1041 = vpop.permute.xlu0 %1040
        %vm1042 = vcmp.ne.s32.totalorder %v979, 0
        %vm1043 = vcmp.ne.s32.totalorder %v981, 0
        %vm1044 = vcmp.ne.s32.totalorder %v983, 0
        %vm1045 = vcmp.ne.s32.totalorder %v985, 0
        %vm1046 = vcmp.ne.s32.totalorder %v987, 0
        %vm1047 = vcmp.ne.s32.totalorder %v989, 0
        %vm1048 = vcmp.ne.s32.totalorder %v991, 0
        %vm1049 = vcmp.ne.s32.totalorder %v993, 0
        %vm1050 = vcmp.ne.s32.totalorder %v995, 0
        %vm1051 = vcmp.ne.s32.totalorder %v997, 0
        %vm1052 = vcmp.ne.s32.totalorder %v999, 0
        %vm1053 = vcmp.ne.s32.totalorder %v1001, 0
        %vm1054 = vcmp.ne.s32.totalorder %v1003, 0
        %vm1055 = vcmp.ne.s32.totalorder %v1005, 0
        %vm1056 = vcmp.ne.s32.totalorder %v1007, 0
        %vm1057 = vcmp.ne.s32.totalorder %v1009, 0
        %vm1058 = vcmp.ne.s32.totalorder %v1011, 0
        %vm1059 = vcmp.ne.s32.totalorder %v1013, 0
        %vm1060 = vcmp.ne.s32.totalorder %v1015, 0
        %vm1061 = vcmp.ne.s32.totalorder %v1017, 0
        %vm1062 = vcmp.ne.s32.totalorder %v1019, 0
        %vm1063 = vcmp.ne.s32.totalorder %v1021, 0
        %vm1064 = vcmp.ne.s32.totalorder %v1023, 0
        %vm1065 = vcmp.ne.s32.totalorder %v1025, 0
        %vm1066 = vcmp.ne.s32.totalorder %v1027, 0
        %vm1067 = vcmp.ne.s32.totalorder %v1029, 0
        %vm1068 = vcmp.ne.s32.totalorder %v1031, 0
        %vm1069 = vcmp.ne.s32.totalorder %v1033, 0
        %vm1070 = vcmp.ne.s32.totalorder %v1035, 0
        %vm1071 = vcmp.ne.s32.totalorder %v1037, 0
        %vm1072 = vcmp.ne.s32.totalorder %v1039, 0
        %vm1073 = vcmp.ne.s32.totalorder %v1041, 0
        %vm1074 = vmand %vm946, %vm1042
        %vm1075 = vmand %vm947, %vm1043
        %vm1076 = vmand %vm948, %vm1044
        %vm1077 = vmand %vm949, %vm1045
        %vm1078 = vmand %vm950, %vm1046
        %vm1079 = vmand %vm951, %vm1047
        %vm1080 = vmand %vm952, %vm1048
        %vm1081 = vmand %vm953, %vm1049
        %vm1082 = vmand %vm954, %vm1050
        %vm1083 = vmand %vm955, %vm1051
        %vm1084 = vmand %vm956, %vm1052
        %vm1085 = vmand %vm957, %vm1053
        %vm1086 = vmand %vm958, %vm1054
        %vm1087 = vmand %vm959, %vm1055
        %vm1088 = vmand %vm960, %vm1056
        %vm1089 = vmand %vm961, %vm1057
        %vm1090 = vmand %vm962, %vm1058
        %vm1091 = vmand %vm963, %vm1059
        %vm1092 = vmand %vm964, %vm1060
        %vm1093 = vmand %vm965, %vm1061
        %vm1094 = vmand %vm966, %vm1062
        %vm1095 = vmand %vm967, %vm1063
        %vm1096 = vmand %vm968, %vm1064
        %vm1097 = vmand %vm969, %vm1065
        %vm1098 = vmand %vm970, %vm1066
        %vm1099 = vmand %vm971, %vm1067
        %vm1100 = vmand %vm972, %vm1068
        %vm1101 = vmand %vm973, %vm1069
        %vm1102 = vmand %vm974, %vm1070
        %vm1103 = vmand %vm975, %vm1071
        %vm1104 = vmand %vm976, %vm1072
        %vm1105 = vmand %vm977, %vm1073
        %v1106 = vmul.u32 %v402, 256
        %v1107 = vmul.u32 %v403, 256
        %v1108 = vmul.u32 %v404, 256
        %v1109 = vmul.u32 %v405, 256
        %v1110 = vmul.u32 %v406, 256
        %v1111 = vmul.u32 %v407, 256
        %v1112 = vmul.u32 %v408, 256
        %v1113 = vmul.u32 %v409, 256
        %v1114 = vmul.u32 %v410, 256
        %v1115 = vmul.u32 %v411, 256
        %v1116 = vmul.u32 %v412, 256
        %v1117 = vmul.u32 %v413, 256
        %v1118 = vmul.u32 %v414, 256
        %v1119 = vmul.u32 %v415, 256
        %v1120 = vmul.u32 %v416, 256
        %v1121 = vmul.u32 %v417, 256
        %v1122 = vmul.u32 %v418, 256
        %v1123 = vmul.u32 %v419, 256
        %v1124 = vmul.u32 %v420, 256
        %v1125 = vmul.u32 %v421, 256
        %v1126 = vmul.u32 %v422, 256
        %v1127 = vmul.u32 %v423, 256
        %v1128 = vmul.u32 %v424, 256
        %v1129 = vmul.u32 %v425, 256
        %v1130 = vmul.u32 %v426, 256
        %v1131 = vmul.u32 %v427, 256
        %v1132 = vmul.u32 %v428, 256
        %v1133 = vmul.u32 %v429, 256
        %v1134 = vmul.u32 %v430, 256
        %v1135 = vmul.u32 %v431, 256
        %v1136 = vmul.u32 %v432, 256
        %v1137 = vmul.u32 %v433, 256
        %v1138 = vmul.u32 %v402, 16
        %v1139 = vmul.u32 %v403, 16
        %v1140 = vmul.u32 %v404, 16
        %v1141 = vmul.u32 %v405, 16
        %v1142 = vmul.u32 %v406, 16
        %v1143 = vmul.u32 %v407, 16
        %v1144 = vmul.u32 %v408, 16
        %v1145 = vmul.u32 %v409, 16
        %v1146 = vmul.u32 %v410, 16
        %v1147 = vmul.u32 %v411, 16
        %v1148 = vmul.u32 %v412, 16
        %v1149 = vmul.u32 %v413, 16
        %v1150 = vmul.u32 %v414, 16
        %v1151 = vmul.u32 %v415, 16
        %v1152 = vmul.u32 %v416, 16
        %v1153 = vmul.u32 %v417, 16
        %v1154 = vmul.u32 %v418, 16
        %v1155 = vmul.u32 %v419, 16
        %v1156 = vmul.u32 %v420, 16
        %v1157 = vmul.u32 %v421, 16
        %v1158 = vmul.u32 %v422, 16
        %v1159 = vmul.u32 %v423, 16
        %v1160 = vmul.u32 %v424, 16
        %v1161 = vmul.u32 %v425, 16
        %v1162 = vmul.u32 %v426, 16
        %v1163 = vmul.u32 %v427, 16
        %v1164 = vmul.u32 %v428, 16
        %v1165 = vmul.u32 %v429, 16
        %v1166 = vmul.u32 %v430, 16
        %v1167 = vmul.u32 %v431, 16
        %v1168 = vmul.u32 %v432, 16
        %v1169 = vmul.u32 %v433, 16
        %1170 = vrot.lane.b32.xlu0 %v1138, 127
        %v1171 = vpop.permute.xlu0 %1170
        %1172 = vrot.lane.b32.xlu0 %v1139, 127
        %v1173 = vpop.permute.xlu0 %1172
        %1174 = vrot.lane.b32.xlu0 %v1140, 127
        %v1175 = vpop.permute.xlu0 %1174
        %1176 = vrot.lane.b32.xlu0 %v1141, 127
        %v1177 = vpop.permute.xlu0 %1176
        %1178 = vrot.lane.b32.xlu0 %v1142, 127
        %v1179 = vpop.permute.xlu0 %1178
        %1180 = vrot.lane.b32.xlu0 %v1143, 127
        %v1181 = vpop.permute.xlu0 %1180
        %1182 = vrot.lane.b32.xlu0 %v1144, 127
        %v1183 = vpop.permute.xlu0 %1182
        %1184 = vrot.lane.b32.xlu0 %v1145, 127
        %v1185 = vpop.permute.xlu0 %1184
        %1186 = vrot.lane.b32.xlu0 %v1146, 127
        %v1187 = vpop.permute.xlu0 %1186
        %1188 = vrot.lane.b32.xlu0 %v1147, 127
        %v1189 = vpop.permute.xlu0 %1188
        %1190 = vrot.lane.b32.xlu0 %v1148, 127
        %v1191 = vpop.permute.xlu0 %1190
        %1192 = vrot.lane.b32.xlu0 %v1149, 127
        %v1193 = vpop.permute.xlu0 %1192
        %1194 = vrot.lane.b32.xlu0 %v1150, 127
        %v1195 = vpop.permute.xlu0 %1194
        %1196 = vrot.lane.b32.xlu0 %v1151, 127
        %v1197 = vpop.permute.xlu0 %1196
        %1198 = vrot.lane.b32.xlu0 %v1152, 127
        %v1199 = vpop.permute.xlu0 %1198
        %1200 = vrot.lane.b32.xlu0 %v1153, 127
        %v1201 = vpop.permute.xlu0 %1200
        %1202 = vrot.lane.b32.xlu0 %v1154, 127
        %v1203 = vpop.permute.xlu0 %1202
        %1204 = vrot.lane.b32.xlu0 %v1155, 127
        %v1205 = vpop.permute.xlu0 %1204
        %1206 = vrot.lane.b32.xlu0 %v1156, 127
        %v1207 = vpop.permute.xlu0 %1206
        %1208 = vrot.lane.b32.xlu0 %v1157, 127
        %v1209 = vpop.permute.xlu0 %1208
        %1210 = vrot.lane.b32.xlu0 %v1158, 127
        %v1211 = vpop.permute.xlu0 %1210
        %1212 = vrot.lane.b32.xlu0 %v1159, 127
        %v1213 = vpop.permute.xlu0 %1212
        %1214 = vrot.lane.b32.xlu0 %v1160, 127
        %v1215 = vpop.permute.xlu0 %1214
        %1216 = vrot.lane.b32.xlu0 %v1161, 127
        %v1217 = vpop.permute.xlu0 %1216
        %1218 = vrot.lane.b32.xlu0 %v1162, 127
        %v1219 = vpop.permute.xlu0 %1218
        %1220 = vrot.lane.b32.xlu0 %v1163, 127
        %v1221 = vpop.permute.xlu0 %1220
        %1222 = vrot.lane.b32.xlu0 %v1164, 127
        %v1223 = vpop.permute.xlu0 %1222
        %1224 = vrot.lane.b32.xlu0 %v1165, 127
        %v1225 = vpop.permute.xlu0 %1224
        %1226 = vrot.lane.b32.xlu0 %v1166, 127
        %v1227 = vpop.permute.xlu0 %1226
        %1228 = vrot.lane.b32.xlu0 %v1167, 127
        %v1229 = vpop.permute.xlu0 %1228
        %1230 = vrot.lane.b32.xlu0 %v1168, 127
        %v1231 = vpop.permute.xlu0 %1230
        %1232 = vrot.lane.b32.xlu0 %v1169, 127
        %v1233 = vpop.permute.xlu0 %1232
        %v1234 = vadd.s32 %v1106, %v1171
        %v1235 = vadd.s32 %v1107, %v1173
        %v1236 = vadd.s32 %v1108, %v1175
        %v1237 = vadd.s32 %v1109, %v1177
        %v1238 = vadd.s32 %v1110, %v1179
        %v1239 = vadd.s32 %v1111, %v1181
        %v1240 = vadd.s32 %v1112, %v1183
        %v1241 = vadd.s32 %v1113, %v1185
        %v1242 = vadd.s32 %v1114, %v1187
        %v1243 = vadd.s32 %v1115, %v1189
        %v1244 = vadd.s32 %v1116, %v1191
        %v1245 = vadd.s32 %v1117, %v1193
        %v1246 = vadd.s32 %v1118, %v1195
        %v1247 = vadd.s32 %v1119, %v1197
        %v1248 = vadd.s32 %v1120, %v1199
        %v1249 = vadd.s32 %v1121, %v1201
        %v1250 = vadd.s32 %v1122, %v1203
        %v1251 = vadd.s32 %v1123, %v1205
        %v1252 = vadd.s32 %v1124, %v1207
        %v1253 = vadd.s32 %v1125, %v1209
        %v1254 = vadd.s32 %v1126, %v1211
        %v1255 = vadd.s32 %v1127, %v1213
        %v1256 = vadd.s32 %v1128, %v1215
        %v1257 = vadd.s32 %v1129, %v1217
        %v1258 = vadd.s32 %v1130, %v1219
        %v1259 = vadd.s32 %v1131, %v1221
        %v1260 = vadd.s32 %v1132, %v1223
        %v1261 = vadd.s32 %v1133, %v1225
        %v1262 = vadd.s32 %v1134, %v1227
        %v1263 = vadd.s32 %v1135, %v1229
        %v1264 = vadd.s32 %v1136, %v1231
        %v1265 = vadd.s32 %v1137, %v1233
        %1266 = vrot.lane.b32.xlu0 %v402, 126
        %v1267 = vpop.permute.xlu0 %1266
        %1268 = vrot.lane.b32.xlu0 %v403, 126
        %v1269 = vpop.permute.xlu0 %1268
        %1270 = vrot.lane.b32.xlu0 %v404, 126
        %v1271 = vpop.permute.xlu0 %1270
        %1272 = vrot.lane.b32.xlu0 %v405, 126
        %v1273 = vpop.permute.xlu0 %1272
        %1274 = vrot.lane.b32.xlu0 %v406, 126
        %v1275 = vpop.permute.xlu0 %1274
        %1276 = vrot.lane.b32.xlu0 %v407, 126
        %v1277 = vpop.permute.xlu0 %1276
        %1278 = vrot.lane.b32.xlu0 %v408, 126
        %v1279 = vpop.permute.xlu0 %1278
        %1280 = vrot.lane.b32.xlu0 %v409, 126
        %v1281 = vpop.permute.xlu0 %1280
        %1282 = vrot.lane.b32.xlu0 %v410, 126
        %v1283 = vpop.permute.xlu0 %1282
        %1284 = vrot.lane.b32.xlu0 %v411, 126
        %v1285 = vpop.permute.xlu0 %1284
        %1286 = vrot.lane.b32.xlu0 %v412, 126
        %v1287 = vpop.permute.xlu0 %1286
        %1288 = vrot.lane.b32.xlu0 %v413, 126
        %v1289 = vpop.permute.xlu0 %1288
        %1290 = vrot.lane.b32.xlu0 %v414, 126
        %v1291 = vpop.permute.xlu0 %1290
        %1292 = vrot.lane.b32.xlu0 %v415, 126
        %v1293 = vpop.permute.xlu0 %1292
        %1294 = vrot.lane.b32.xlu0 %v416, 126
        %v1295 = vpop.permute.xlu0 %1294
        %1296 = vrot.lane.b32.xlu0 %v417, 126
        %v1297 = vpop.permute.xlu0 %1296
        %1298 = vrot.lane.b32.xlu0 %v418, 126
        %v1299 = vpop.permute.xlu0 %1298
        %1300 = vrot.lane.b32.xlu0 %v419, 126
        %v1301 = vpop.permute.xlu0 %1300
        %1302 = vrot.lane.b32.xlu0 %v420, 126
        %v1303 = vpop.permute.xlu0 %1302
        %1304 = vrot.lane.b32.xlu0 %v421, 126
        %v1305 = vpop.permute.xlu0 %1304
        %1306 = vrot.lane.b32.xlu0 %v422, 126
        %v1307 = vpop.permute.xlu0 %1306
        %1308 = vrot.lane.b32.xlu0 %v423, 126
        %v1309 = vpop.permute.xlu0 %1308
        %1310 = vrot.lane.b32.xlu0 %v424, 126
        %v1311 = vpop.permute.xlu0 %1310
        %1312 = vrot.lane.b32.xlu0 %v425, 126
        %v1313 = vpop.permute.xlu0 %1312
        %1314 = vrot.lane.b32.xlu0 %v426, 126
        %v1315 = vpop.permute.xlu0 %1314
        %1316 = vrot.lane.b32.xlu0 %v427, 126
        %v1317 = vpop.permute.xlu0 %1316
        %1318 = vrot.lane.b32.xlu0 %v428, 126
        %v1319 = vpop.permute.xlu0 %1318
        %1320 = vrot.lane.b32.xlu0 %v429, 126
        %v1321 = vpop.permute.xlu0 %1320
        %1322 = vrot.lane.b32.xlu0 %v430, 126
        %v1323 = vpop.permute.xlu0 %1322
        %1324 = vrot.lane.b32.xlu0 %v431, 126
        %v1325 = vpop.permute.xlu0 %1324
        %1326 = vrot.lane.b32.xlu0 %v432, 126
        %v1327 = vpop.permute.xlu0 %1326
        %1328 = vrot.lane.b32.xlu0 %v433, 126
        %v1329 = vpop.permute.xlu0 %1328
        %v1330 = vadd.s32 %v1234, %v1267
        %v1331 = vadd.s32 %v1235, %v1269
        %v1332 = vadd.s32 %v1236, %v1271
        %v1333 = vadd.s32 %v1237, %v1273
        %v1334 = vadd.s32 %v1238, %v1275
        %v1335 = vadd.s32 %v1239, %v1277
        %v1336 = vadd.s32 %v1240, %v1279
        %v1337 = vadd.s32 %v1241, %v1281
        %v1338 = vadd.s32 %v1242, %v1283
        %v1339 = vadd.s32 %v1243, %v1285
        %v1340 = vadd.s32 %v1244, %v1287
        %v1341 = vadd.s32 %v1245, %v1289
        %v1342 = vadd.s32 %v1246, %v1291
        %v1343 = vadd.s32 %v1247, %v1293
        %v1344 = vadd.s32 %v1248, %v1295
        %v1345 = vadd.s32 %v1249, %v1297
        %v1346 = vadd.s32 %v1250, %v1299
        %v1347 = vadd.s32 %v1251, %v1301
        %v1348 = vadd.s32 %v1252, %v1303
        %v1349 = vadd.s32 %v1253, %v1305
        %v1350 = vadd.s32 %v1254, %v1307
        %v1351 = vadd.s32 %v1255, %v1309
        %v1352 = vadd.s32 %v1256, %v1311
        %v1353 = vadd.s32 %v1257, %v1313
        %v1354 = vadd.s32 %v1258, %v1315
        %v1355 = vadd.s32 %v1259, %v1317
        %v1356 = vadd.s32 %v1260, %v1319
        %v1357 = vadd.s32 %v1261, %v1321
        %v1358 = vadd.s32 %v1262, %v1323
        %v1359 = vadd.s32 %v1263, %v1325
        %v1360 = vadd.s32 %v1264, %v1327
        %v1361 = vadd.s32 %v1265, %v1329
        %v1362 = vstv %s327
        %v1363 = vsub.s32 %v1330, %v1362
        %v1364 = vsub.s32 %v1331, %v1362
        %v1365 = vsub.s32 %v1332, %v1362
        %v1366 = vsub.s32 %v1333, %v1362
        %v1367 = vsub.s32 %v1334, %v1362
        %v1368 = vsub.s32 %v1335, %v1362
        %v1369 = vsub.s32 %v1336, %v1362
        %v1370 = vsub.s32 %v1337, %v1362
        %v1371 = vsub.s32 %v1338, %v1362
        %v1372 = vsub.s32 %v1339, %v1362
        %v1373 = vsub.s32 %v1340, %v1362
        %v1374 = vsub.s32 %v1341, %v1362
        %v1375 = vsub.s32 %v1342, %v1362
        %v1376 = vsub.s32 %v1343, %v1362
        %v1377 = vsub.s32 %v1344, %v1362
        %v1378 = vsub.s32 %v1345, %v1362
        %v1379 = vsub.s32 %v1346, %v1362
        %v1380 = vsub.s32 %v1347, %v1362
        %v1381 = vsub.s32 %v1348, %v1362
        %v1382 = vsub.s32 %v1349, %v1362
        %v1383 = vsub.s32 %v1350, %v1362
        %v1384 = vsub.s32 %v1351, %v1362
        %v1385 = vsub.s32 %v1352, %v1362
        %v1386 = vsub.s32 %v1353, %v1362
        %v1387 = vsub.s32 %v1354, %v1362
        %v1388 = vsub.s32 %v1355, %v1362
        %v1389 = vsub.s32 %v1356, %v1362
        %v1390 = vsub.s32 %v1357, %v1362
        %v1391 = vsub.s32 %v1358, %v1362
        %v1392 = vsub.s32 %v1359, %v1362
        %v1393 = vsub.s32 %v1360, %v1362
        %v1394 = vsub.s32 %v1361, %v1362
        %v1395 = vsel %vm1074, %v1363, 4294967295
        %v1396 = vsel %vm1075, %v1364, 4294967295
        %v1397 = vsel %vm1076, %v1365, 4294967295
        %v1398 = vsel %vm1077, %v1366, 4294967295
        %v1399 = vsel %vm1078, %v1367, 4294967295
        %v1400 = vsel %vm1079, %v1368, 4294967295
        %v1401 = vsel %vm1080, %v1369, 4294967295
        %v1402 = vsel %vm1081, %v1370, 4294967295
        %v1403 = vsel %vm1082, %v1371, 4294967295
        %v1404 = vsel %vm1083, %v1372, 4294967295
        %v1405 = vsel %vm1084, %v1373, 4294967295
        %v1406 = vsel %vm1085, %v1374, 4294967295
        %v1407 = vsel %vm1086, %v1375, 4294967295
        %v1408 = vsel %vm1087, %v1376, 4294967295
        %v1409 = vsel %vm1088, %v1377, 4294967295
        %v1410 = vsel %vm1089, %v1378, 4294967295
        %v1411 = vsel %vm1090, %v1379, 4294967295
        %v1412 = vsel %vm1091, %v1380, 4294967295
        %v1413 = vsel %vm1092, %v1381, 4294967295
        %v1414 = vsel %vm1093, %v1382, 4294967295
        %v1415 = vsel %vm1094, %v1383, 4294967295
        %v1416 = vsel %vm1095, %v1384, 4294967295
        %v1417 = vsel %vm1096, %v1385, 4294967295
        %v1418 = vsel %vm1097, %v1386, 4294967295
        %v1419 = vsel %vm1098, %v1387, 4294967295
        %v1420 = vsel %vm1099, %v1388, 4294967295
        %v1421 = vsel %vm1100, %v1389, 4294967295
        %v1422 = vsel %vm1101, %v1390, 4294967295
        %v1423 = vsel %vm1102, %v1391, 4294967295
        %v1424 = vsel %vm1103, %v1392, 4294967295
        %v1425 = vsel %vm1104, %v1393, 4294967295
        %v1426 = vsel %vm1105, %v1394, 4294967295
        %v1427 = vlaneseq
        %v1428 = vand.u32 %v1427, 127
        %v1429 = vadd.s32 %v1428, 128
        %v1430 = vadd.s32 %v1428, 256
        %v1431 = vadd.s32 %v1428, 384
        %1432 = vset.pattern.permute.xlu0 0
        %1433 = vperm.xlu0 %1432, %v1395
        %v1434 = vpop.permute.xlu0 %1433
        %1435 = vset.pattern.permute.xlu0 0
        %1436 = vperm.xlu0 %1435, %v1396
        %v1437 = vpop.permute.xlu0 %1436
        %1438 = vset.pattern.permute.xlu0 0
        %1439 = vperm.xlu0 %1438, %v1397
        %v1440 = vpop.permute.xlu0 %1439
        %1441 = vset.pattern.permute.xlu0 0
        %1442 = vperm.xlu0 %1441, %v1398
        %v1443 = vpop.permute.xlu0 %1442
        %1444 = vset.pattern.permute.xlu0 0
        %1445 = vperm.xlu0 %1444, %v1399
        %v1446 = vpop.permute.xlu0 %1445
        %1447 = vset.pattern.permute.xlu0 0
        %1448 = vperm.xlu0 %1447, %v1400
        %v1449 = vpop.permute.xlu0 %1448
        %1450 = vset.pattern.permute.xlu0 0
        %1451 = vperm.xlu0 %1450, %v1401
        %v1452 = vpop.permute.xlu0 %1451
        %1453 = vset.pattern.permute.xlu0 0
        %1454 = vperm.xlu0 %1453, %v1402
        %v1455 = vpop.permute.xlu0 %1454
        %1456 = vset.pattern.permute.xlu0 0
        %1457 = vperm.xlu0 %1456, %v1403
        %v1458 = vpop.permute.xlu0 %1457
        %1459 = vset.pattern.permute.xlu0 0
        %1460 = vperm.xlu0 %1459, %v1404
        %v1461 = vpop.permute.xlu0 %1460
        %1462 = vset.pattern.permute.xlu0 0
        %1463 = vperm.xlu0 %1462, %v1405
        %v1464 = vpop.permute.xlu0 %1463
        %1465 = vset.pattern.permute.xlu0 0
        %1466 = vperm.xlu0 %1465, %v1406
        %v1467 = vpop.permute.xlu0 %1466
        %1468 = vset.pattern.permute.xlu0 0
        %1469 = vperm.xlu0 %1468, %v1407
        %v1470 = vpop.permute.xlu0 %1469
        %1471 = vset.pattern.permute.xlu0 0
        %1472 = vperm.xlu0 %1471, %v1408
        %v1473 = vpop.permute.xlu0 %1472
        %1474 = vset.pattern.permute.xlu0 0
        %1475 = vperm.xlu0 %1474, %v1409
        %v1476 = vpop.permute.xlu0 %1475
        %1477 = vset.pattern.permute.xlu0 0
        %1478 = vperm.xlu0 %1477, %v1410
        %v1479 = vpop.permute.xlu0 %1478
        %1480 = vset.pattern.permute.xlu0 0
        %1481 = vperm.xlu0 %1480, %v1411
        %v1482 = vpop.permute.xlu0 %1481
        %1483 = vset.pattern.permute.xlu0 0
        %1484 = vperm.xlu0 %1483, %v1412
        %v1485 = vpop.permute.xlu0 %1484
        %1486 = vset.pattern.permute.xlu0 0
        %1487 = vperm.xlu0 %1486, %v1413
        %v1488 = vpop.permute.xlu0 %1487
        %1489 = vset.pattern.permute.xlu0 0
        %1490 = vperm.xlu0 %1489, %v1414
        %v1491 = vpop.permute.xlu0 %1490
        %1492 = vset.pattern.permute.xlu0 0
        %1493 = vperm.xlu0 %1492, %v1415
        %v1494 = vpop.permute.xlu0 %1493
        %1495 = vset.pattern.permute.xlu0 0
        %1496 = vperm.xlu0 %1495, %v1416
        %v1497 = vpop.permute.xlu0 %1496
        %1498 = vset.pattern.permute.xlu0 0
        %1499 = vperm.xlu0 %1498, %v1417
        %v1500 = vpop.permute.xlu0 %1499
        %1501 = vset.pattern.permute.xlu0 0
        %1502 = vperm.xlu0 %1501, %v1418
        %v1503 = vpop.permute.xlu0 %1502
        %1504 = vset.pattern.permute.xlu0 0
        %1505 = vperm.xlu0 %1504, %v1419
        %v1506 = vpop.permute.xlu0 %1505
        %1507 = vset.pattern.permute.xlu0 0
        %1508 = vperm.xlu0 %1507, %v1420
        %v1509 = vpop.permute.xlu0 %1508
        %1510 = vset.pattern.permute.xlu0 0
        %1511 = vperm.xlu0 %1510, %v1421
        %v1512 = vpop.permute.xlu0 %1511
        %1513 = vset.pattern.permute.xlu0 0
        %1514 = vperm.xlu0 %1513, %v1422
        %v1515 = vpop.permute.xlu0 %1514
        %1516 = vset.pattern.permute.xlu0 0
        %1517 = vperm.xlu0 %1516, %v1423
        %v1518 = vpop.permute.xlu0 %1517
        %1519 = vset.pattern.permute.xlu0 0
        %1520 = vperm.xlu0 %1519, %v1424
        %v1521 = vpop.permute.xlu0 %1520
        %1522 = vset.pattern.permute.xlu0 0
        %1523 = vperm.xlu0 %1522, %v1425
        %v1524 = vpop.permute.xlu0 %1523
        %1525 = vset.pattern.permute.xlu0 0
        %1526 = vperm.xlu0 %1525, %v1426
        %v1527 = vpop.permute.xlu0 %1526
        %vm1528 = vcmp.eq.s32.totalorder %v1428, %v1434
        %vm1529 = vcmp.eq.s32.totalorder %v1429, %v1434
        %vm1530 = vcmp.eq.s32.totalorder %v1430, %v1434
        %vm1531 = vcmp.eq.s32.totalorder %v1431, %v1434
        %vm1532 = vcmp.eq.s32.totalorder %v1428, %v1437
        %vm1533 = vcmp.eq.s32.totalorder %v1429, %v1437
        %vm1534 = vcmp.eq.s32.totalorder %v1430, %v1437
        %vm1535 = vcmp.eq.s32.totalorder %v1431, %v1437
        %vm1536 = vcmp.eq.s32.totalorder %v1428, %v1440
        %vm1537 = vcmp.eq.s32.totalorder %v1429, %v1440
        %vm1538 = vcmp.eq.s32.totalorder %v1430, %v1440
        %vm1539 = vcmp.eq.s32.totalorder %v1431, %v1440
        %vm1540 = vcmp.eq.s32.totalorder %v1428, %v1443
        %vm1541 = vcmp.eq.s32.totalorder %v1429, %v1443
        %vm1542 = vcmp.eq.s32.totalorder %v1430, %v1443
        %vm1543 = vcmp.eq.s32.totalorder %v1431, %v1443
        %vm1544 = vcmp.eq.s32.totalorder %v1428, %v1446
        %vm1545 = vcmp.eq.s32.totalorder %v1429, %v1446
        %vm1546 = vcmp.eq.s32.totalorder %v1430, %v1446
        %vm1547 = vcmp.eq.s32.totalorder %v1431, %v1446
        %vm1548 = vcmp.eq.s32.totalorder %v1428, %v1449
        %vm1549 = vcmp.eq.s32.totalorder %v1429, %v1449
        %vm1550 = vcmp.eq.s32.totalorder %v1430, %v1449
        %vm1551 = vcmp.eq.s32.totalorder %v1431, %v1449
        %vm1552 = vcmp.eq.s32.totalorder %v1428, %v1452
        %vm1553 = vcmp.eq.s32.totalorder %v1429, %v1452
        %vm1554 = vcmp.eq.s32.totalorder %v1430, %v1452
        %vm1555 = vcmp.eq.s32.totalorder %v1431, %v1452
        %vm1556 = vcmp.eq.s32.totalorder %v1428, %v1455
        %vm1557 = vcmp.eq.s32.totalorder %v1429, %v1455
        %vm1558 = vcmp.eq.s32.totalorder %v1430, %v1455
        %vm1559 = vcmp.eq.s32.totalorder %v1431, %v1455
        %vm1560 = vcmp.eq.s32.totalorder %v1428, %v1458
        %vm1561 = vcmp.eq.s32.totalorder %v1429, %v1458
        %vm1562 = vcmp.eq.s32.totalorder %v1430, %v1458
        %vm1563 = vcmp.eq.s32.totalorder %v1431, %v1458
        %vm1564 = vcmp.eq.s32.totalorder %v1428, %v1461
        %vm1565 = vcmp.eq.s32.totalorder %v1429, %v1461
        %vm1566 = vcmp.eq.s32.totalorder %v1430, %v1461
        %vm1567 = vcmp.eq.s32.totalorder %v1431, %v1461
        %vm1568 = vcmp.eq.s32.totalorder %v1428, %v1464
        %vm1569 = vcmp.eq.s32.totalorder %v1429, %v1464
        %vm1570 = vcmp.eq.s32.totalorder %v1430, %v1464
        %vm1571 = vcmp.eq.s32.totalorder %v1431, %v1464
        %vm1572 = vcmp.eq.s32.totalorder %v1428, %v1467
        %vm1573 = vcmp.eq.s32.totalorder %v1429, %v1467
        %vm1574 = vcmp.eq.s32.totalorder %v1430, %v1467
        %vm1575 = vcmp.eq.s32.totalorder %v1431, %v1467
        %vm1576 = vcmp.eq.s32.totalorder %v1428, %v1470
        %vm1577 = vcmp.eq.s32.totalorder %v1429, %v1470
        %vm1578 = vcmp.eq.s32.totalorder %v1430, %v1470
        %vm1579 = vcmp.eq.s32.totalorder %v1431, %v1470
        %vm1580 = vcmp.eq.s32.totalorder %v1428, %v1473
        %vm1581 = vcmp.eq.s32.totalorder %v1429, %v1473
        %vm1582 = vcmp.eq.s32.totalorder %v1430, %v1473
        %vm1583 = vcmp.eq.s32.totalorder %v1431, %v1473
        %vm1584 = vcmp.eq.s32.totalorder %v1428, %v1476
        %vm1585 = vcmp.eq.s32.totalorder %v1429, %v1476
        %vm1586 = vcmp.eq.s32.totalorder %v1430, %v1476
        %vm1587 = vcmp.eq.s32.totalorder %v1431, %v1476
        %vm1588 = vcmp.eq.s32.totalorder %v1428, %v1479
        %vm1589 = vcmp.eq.s32.totalorder %v1429, %v1479
        %vm1590 = vcmp.eq.s32.totalorder %v1430, %v1479
        %vm1591 = vcmp.eq.s32.totalorder %v1431, %v1479
        %vm1592 = vcmp.eq.s32.totalorder %v1428, %v1482
        %vm1593 = vcmp.eq.s32.totalorder %v1429, %v1482
        %vm1594 = vcmp.eq.s32.totalorder %v1430, %v1482
        %vm1595 = vcmp.eq.s32.totalorder %v1431, %v1482
        %vm1596 = vcmp.eq.s32.totalorder %v1428, %v1485
        %vm1597 = vcmp.eq.s32.totalorder %v1429, %v1485
        %vm1598 = vcmp.eq.s32.totalorder %v1430, %v1485
        %vm1599 = vcmp.eq.s32.totalorder %v1431, %v1485
        %vm1600 = vcmp.eq.s32.totalorder %v1428, %v1488
        %vm1601 = vcmp.eq.s32.totalorder %v1429, %v1488
        %vm1602 = vcmp.eq.s32.totalorder %v1430, %v1488
        %vm1603 = vcmp.eq.s32.totalorder %v1431, %v1488
        %vm1604 = vcmp.eq.s32.totalorder %v1428, %v1491
        %vm1605 = vcmp.eq.s32.totalorder %v1429, %v1491
        %vm1606 = vcmp.eq.s32.totalorder %v1430, %v1491
        %vm1607 = vcmp.eq.s32.totalorder %v1431, %v1491
        %vm1608 = vcmp.eq.s32.totalorder %v1428, %v1494
        %vm1609 = vcmp.eq.s32.totalorder %v1429, %v1494
        %vm1610 = vcmp.eq.s32.totalorder %v1430, %v1494
        %vm1611 = vcmp.eq.s32.totalorder %v1431, %v1494
        %vm1612 = vcmp.eq.s32.totalorder %v1428, %v1497
        %vm1613 = vcmp.eq.s32.totalorder %v1429, %v1497
        %vm1614 = vcmp.eq.s32.totalorder %v1430, %v1497
        %vm1615 = vcmp.eq.s32.totalorder %v1431, %v1497
        %vm1616 = vcmp.eq.s32.totalorder %v1428, %v1500
        %vm1617 = vcmp.eq.s32.totalorder %v1429, %v1500
        %vm1618 = vcmp.eq.s32.totalorder %v1430, %v1500
        %vm1619 = vcmp.eq.s32.totalorder %v1431, %v1500
        %vm1620 = vcmp.eq.s32.totalorder %v1428, %v1503
        %vm1621 = vcmp.eq.s32.totalorder %v1429, %v1503
        %vm1622 = vcmp.eq.s32.totalorder %v1430, %v1503
        %vm1623 = vcmp.eq.s32.totalorder %v1431, %v1503
        %vm1624 = vcmp.eq.s32.totalorder %v1428, %v1506
        %vm1625 = vcmp.eq.s32.totalorder %v1429, %v1506
        %vm1626 = vcmp.eq.s32.totalorder %v1430, %v1506
        %vm1627 = vcmp.eq.s32.totalorder %v1431, %v1506
        %vm1628 = vcmp.eq.s32.totalorder %v1428, %v1509
        %vm1629 = vcmp.eq.s32.totalorder %v1429, %v1509
        %vm1630 = vcmp.eq.s32.totalorder %v1430, %v1509
        %vm1631 = vcmp.eq.s32.totalorder %v1431, %v1509
        %vm1632 = vcmp.eq.s32.totalorder %v1428, %v1512
        %vm1633 = vcmp.eq.s32.totalorder %v1429, %v1512
        %vm1634 = vcmp.eq.s32.totalorder %v1430, %v1512
        %vm1635 = vcmp.eq.s32.totalorder %v1431, %v1512
        %vm1636 = vcmp.eq.s32.totalorder %v1428, %v1515
        %vm1637 = vcmp.eq.s32.totalorder %v1429, %v1515
        %vm1638 = vcmp.eq.s32.totalorder %v1430, %v1515
        %vm1639 = vcmp.eq.s32.totalorder %v1431, %v1515
        %vm1640 = vcmp.eq.s32.totalorder %v1428, %v1518
        %vm1641 = vcmp.eq.s32.totalorder %v1429, %v1518
        %vm1642 = vcmp.eq.s32.totalorder %v1430, %v1518
        %vm1643 = vcmp.eq.s32.totalorder %v1431, %v1518
        %vm1644 = vcmp.eq.s32.totalorder %v1428, %v1521
        %vm1645 = vcmp.eq.s32.totalorder %v1429, %v1521
        %vm1646 = vcmp.eq.s32.totalorder %v1430, %v1521
        %vm1647 = vcmp.eq.s32.totalorder %v1431, %v1521
        %vm1648 = vcmp.eq.s32.totalorder %v1428, %v1524
        %vm1649 = vcmp.eq.s32.totalorder %v1429, %v1524
        %vm1650 = vcmp.eq.s32.totalorder %v1430, %v1524
        %vm1651 = vcmp.eq.s32.totalorder %v1431, %v1524
        %vm1652 = vcmp.eq.s32.totalorder %v1428, %v1527
        %vm1653 = vcmp.eq.s32.totalorder %v1429, %v1527
        %vm1654 = vcmp.eq.s32.totalorder %v1430, %v1527
        %vm1655 = vcmp.eq.s32.totalorder %v1431, %v1527
        %v1656 = vsel %vm1528, 1, 0
        %v1657 = vsel %vm1529, 1, 0
        %v1658 = vsel %vm1530, 1, 0
        %v1659 = vsel %vm1531, 1, 0
        %v1660 = vsel %vm1532, 1, 0
        %v1661 = vsel %vm1533, 1, 0
        %v1662 = vsel %vm1534, 1, 0
        %v1663 = vsel %vm1535, 1, 0
        %v1664 = vsel %vm1536, 1, 0
        %v1665 = vsel %vm1537, 1, 0
        %v1666 = vsel %vm1538, 1, 0
        %v1667 = vsel %vm1539, 1, 0
        %v1668 = vsel %vm1540, 1, 0
        %v1669 = vsel %vm1541, 1, 0
        %v1670 = vsel %vm1542, 1, 0
        %v1671 = vsel %vm1543, 1, 0
        %v1672 = vsel %vm1544, 1, 0
        %v1673 = vsel %vm1545, 1, 0
        %v1674 = vsel %vm1546, 1, 0
        %v1675 = vsel %vm1547, 1, 0
        %v1676 = vsel %vm1548, 1, 0
        %v1677 = vsel %vm1549, 1, 0
        %v1678 = vsel %vm1550, 1, 0
        %v1679 = vsel %vm1551, 1, 0
        %v1680 = vsel %vm1552, 1, 0
        %v1681 = vsel %vm1553, 1, 0
        %v1682 = vsel %vm1554, 1, 0
        %v1683 = vsel %vm1555, 1, 0
        %v1684 = vsel %vm1556, 1, 0
        %v1685 = vsel %vm1557, 1, 0
        %v1686 = vsel %vm1558, 1, 0
        %v1687 = vsel %vm1559, 1, 0
        %v1688 = vsel %vm1560, 1, 0
        %v1689 = vsel %vm1561, 1, 0
        %v1690 = vsel %vm1562, 1, 0
        %v1691 = vsel %vm1563, 1, 0
        %v1692 = vsel %vm1564, 1, 0
        %v1693 = vsel %vm1565, 1, 0
        %v1694 = vsel %vm1566, 1, 0
        %v1695 = vsel %vm1567, 1, 0
        %v1696 = vsel %vm1568, 1, 0
        %v1697 = vsel %vm1569, 1, 0
        %v1698 = vsel %vm1570, 1, 0
        %v1699 = vsel %vm1571, 1, 0
        %v1700 = vsel %vm1572, 1, 0
        %v1701 = vsel %vm1573, 1, 0
        %v1702 = vsel %vm1574, 1, 0
        %v1703 = vsel %vm1575, 1, 0
        %v1704 = vsel %vm1576, 1, 0
        %v1705 = vsel %vm1577, 1, 0
        %v1706 = vsel %vm1578, 1, 0
        %v1707 = vsel %vm1579, 1, 0
        %v1708 = vsel %vm1580, 1, 0
        %v1709 = vsel %vm1581, 1, 0
        %v1710 = vsel %vm1582, 1, 0
        %v1711 = vsel %vm1583, 1, 0
        %v1712 = vsel %vm1584, 1, 0
        %v1713 = vsel %vm1585, 1, 0
        %v1714 = vsel %vm1586, 1, 0
        %v1715 = vsel %vm1587, 1, 0
        %v1716 = vsel %vm1588, 1, 0
        %v1717 = vsel %vm1589, 1, 0
        %v1718 = vsel %vm1590, 1, 0
        %v1719 = vsel %vm1591, 1, 0
        %v1720 = vsel %vm1592, 1, 0
        %v1721 = vsel %vm1593, 1, 0
        %v1722 = vsel %vm1594, 1, 0
        %v1723 = vsel %vm1595, 1, 0
        %v1724 = vsel %vm1596, 1, 0
        %v1725 = vsel %vm1597, 1, 0
        %v1726 = vsel %vm1598, 1, 0
        %v1727 = vsel %vm1599, 1, 0
        %v1728 = vsel %vm1600, 1, 0
        %v1729 = vsel %vm1601, 1, 0
        %v1730 = vsel %vm1602, 1, 0
        %v1731 = vsel %vm1603, 1, 0
        %v1732 = vsel %vm1604, 1, 0
        %v1733 = vsel %vm1605, 1, 0
        %v1734 = vsel %vm1606, 1, 0
        %v1735 = vsel %vm1607, 1, 0
        %v1736 = vsel %vm1608, 1, 0
        %v1737 = vsel %vm1609, 1, 0
        %v1738 = vsel %vm1610, 1, 0
        %v1739 = vsel %vm1611, 1, 0
        %v1740 = vsel %vm1612, 1, 0
        %v1741 = vsel %vm1613, 1, 0
        %v1742 = vsel %vm1614, 1, 0
        %v1743 = vsel %vm1615, 1, 0
        %v1744 = vsel %vm1616, 1, 0
        %v1745 = vsel %vm1617, 1, 0
        %v1746 = vsel %vm1618, 1, 0
        %v1747 = vsel %vm1619, 1, 0
        %v1748 = vsel %vm1620, 1, 0
        %v1749 = vsel %vm1621, 1, 0
        %v1750 = vsel %vm1622, 1, 0
        %v1751 = vsel %vm1623, 1, 0
        %v1752 = vsel %vm1624, 1, 0
        %v1753 = vsel %vm1625, 1, 0
        %v1754 = vsel %vm1626, 1, 0
        %v1755 = vsel %vm1627, 1, 0
        %v1756 = vsel %vm1628, 1, 0
        %v1757 = vsel %vm1629, 1, 0
        %v1758 = vsel %vm1630, 1, 0
        %v1759 = vsel %vm1631, 1, 0
        %v1760 = vsel %vm1632, 1, 0
        %v1761 = vsel %vm1633, 1, 0
        %v1762 = vsel %vm1634, 1, 0
        %v1763 = vsel %vm1635, 1, 0
        %v1764 = vsel %vm1636, 1, 0
        %v1765 = vsel %vm1637, 1, 0
        %v1766 = vsel %vm1638, 1, 0
        %v1767 = vsel %vm1639, 1, 0
        %v1768 = vsel %vm1640, 1, 0
        %v1769 = vsel %vm1641, 1, 0
        %v1770 = vsel %vm1642, 1, 0
        %v1771 = vsel %vm1643, 1, 0
        %v1772 = vsel %vm1644, 1, 0
        %v1773 = vsel %vm1645, 1, 0
        %v1774 = vsel %vm1646, 1, 0
        %v1775 = vsel %vm1647, 1, 0
        %v1776 = vsel %vm1648, 1, 0
        %v1777 = vsel %vm1649, 1, 0
        %v1778 = vsel %vm1650, 1, 0
        %v1779 = vsel %vm1651, 1, 0
        %v1780 = vsel %vm1652, 1, 0
        %v1781 = vsel %vm1653, 1, 0
        %v1782 = vsel %vm1654, 1, 0
        %v1783 = vsel %vm1655, 1, 0
        %v1784 = vcvt.s32.f32 %v1656
        %v1785 = vcvt.s32.f32 %v1657
        %v1786 = vcvt.s32.f32 %v1658
        %v1787 = vcvt.s32.f32 %v1659
        %v1788 = vcvt.s32.f32 %v1660
        %v1789 = vcvt.s32.f32 %v1661
        %v1790 = vcvt.s32.f32 %v1662
        %v1791 = vcvt.s32.f32 %v1663
        %v1792 = vcvt.s32.f32 %v1664
        %v1793 = vcvt.s32.f32 %v1665
        %v1794 = vcvt.s32.f32 %v1666
        %v1795 = vcvt.s32.f32 %v1667
        %v1796 = vcvt.s32.f32 %v1668
        %v1797 = vcvt.s32.f32 %v1669
        %v1798 = vcvt.s32.f32 %v1670
        %v1799 = vcvt.s32.f32 %v1671
        %v1800 = vcvt.s32.f32 %v1672
        %v1801 = vcvt.s32.f32 %v1673
        %v1802 = vcvt.s32.f32 %v1674
        %v1803 = vcvt.s32.f32 %v1675
        %v1804 = vcvt.s32.f32 %v1676
        %v1805 = vcvt.s32.f32 %v1677
        %v1806 = vcvt.s32.f32 %v1678
        %v1807 = vcvt.s32.f32 %v1679
        %v1808 = vcvt.s32.f32 %v1680
        %v1809 = vcvt.s32.f32 %v1681
        %v1810 = vcvt.s32.f32 %v1682
        %v1811 = vcvt.s32.f32 %v1683
        %v1812 = vcvt.s32.f32 %v1684
        %v1813 = vcvt.s32.f32 %v1685
        %v1814 = vcvt.s32.f32 %v1686
        %v1815 = vcvt.s32.f32 %v1687
        %v1816 = vcvt.s32.f32 %v1688
        %v1817 = vcvt.s32.f32 %v1689
        %v1818 = vcvt.s32.f32 %v1690
        %v1819 = vcvt.s32.f32 %v1691
        %v1820 = vcvt.s32.f32 %v1692
        %v1821 = vcvt.s32.f32 %v1693
        %v1822 = vcvt.s32.f32 %v1694
        %v1823 = vcvt.s32.f32 %v1695
        %v1824 = vcvt.s32.f32 %v1696
        %v1825 = vcvt.s32.f32 %v1697
        %v1826 = vcvt.s32.f32 %v1698
        %v1827 = vcvt.s32.f32 %v1699
        %v1828 = vcvt.s32.f32 %v1700
        %v1829 = vcvt.s32.f32 %v1701
        %v1830 = vcvt.s32.f32 %v1702
        %v1831 = vcvt.s32.f32 %v1703
        %v1832 = vcvt.s32.f32 %v1704
        %v1833 = vcvt.s32.f32 %v1705
        %v1834 = vcvt.s32.f32 %v1706
        %v1835 = vcvt.s32.f32 %v1707
        %v1836 = vcvt.s32.f32 %v1708
        %v1837 = vcvt.s32.f32 %v1709
        %v1838 = vcvt.s32.f32 %v1710
        %v1839 = vcvt.s32.f32 %v1711
        %v1840 = vcvt.s32.f32 %v1712
        %v1841 = vcvt.s32.f32 %v1713
        %v1842 = vcvt.s32.f32 %v1714
        %v1843 = vcvt.s32.f32 %v1715
        %v1844 = vcvt.s32.f32 %v1716
        %v1845 = vcvt.s32.f32 %v1717
        %v1846 = vcvt.s32.f32 %v1718
        %v1847 = vcvt.s32.f32 %v1719
        %v1848 = vcvt.s32.f32 %v1720
        %v1849 = vcvt.s32.f32 %v1721
        %v1850 = vcvt.s32.f32 %v1722
        %v1851 = vcvt.s32.f32 %v1723
        %v1852 = vcvt.s32.f32 %v1724
        %v1853 = vcvt.s32.f32 %v1725
        %v1854 = vcvt.s32.f32 %v1726
        %v1855 = vcvt.s32.f32 %v1727
        %v1856 = vcvt.s32.f32 %v1728
        %v1857 = vcvt.s32.f32 %v1729
        %v1858 = vcvt.s32.f32 %v1730
        %v1859 = vcvt.s32.f32 %v1731
        %v1860 = vcvt.s32.f32 %v1732
        %v1861 = vcvt.s32.f32 %v1733
        %v1862 = vcvt.s32.f32 %v1734
        %v1863 = vcvt.s32.f32 %v1735
        %v1864 = vcvt.s32.f32 %v1736
        %v1865 = vcvt.s32.f32 %v1737
        %v1866 = vcvt.s32.f32 %v1738
        %v1867 = vcvt.s32.f32 %v1739
        %v1868 = vcvt.s32.f32 %v1740
        %v1869 = vcvt.s32.f32 %v1741
        %v1870 = vcvt.s32.f32 %v1742
        %v1871 = vcvt.s32.f32 %v1743
        %v1872 = vcvt.s32.f32 %v1744
        %v1873 = vcvt.s32.f32 %v1745
        %v1874 = vcvt.s32.f32 %v1746
        %v1875 = vcvt.s32.f32 %v1747
        %v1876 = vcvt.s32.f32 %v1748
        %v1877 = vcvt.s32.f32 %v1749
        %v1878 = vcvt.s32.f32 %v1750
        %v1879 = vcvt.s32.f32 %v1751
        %v1880 = vcvt.s32.f32 %v1752
        %v1881 = vcvt.s32.f32 %v1753
        %v1882 = vcvt.s32.f32 %v1754
        %v1883 = vcvt.s32.f32 %v1755
        %v1884 = vcvt.s32.f32 %v1756
        %v1885 = vcvt.s32.f32 %v1757
        %v1886 = vcvt.s32.f32 %v1758
        %v1887 = vcvt.s32.f32 %v1759
        %v1888 = vcvt.s32.f32 %v1760
        %v1889 = vcvt.s32.f32 %v1761
        %v1890 = vcvt.s32.f32 %v1762
        %v1891 = vcvt.s32.f32 %v1763
        %v1892 = vcvt.s32.f32 %v1764
        %v1893 = vcvt.s32.f32 %v1765
        %v1894 = vcvt.s32.f32 %v1766
        %v1895 = vcvt.s32.f32 %v1767
        %v1896 = vcvt.s32.f32 %v1768
        %v1897 = vcvt.s32.f32 %v1769
        %v1898 = vcvt.s32.f32 %v1770
        %v1899 = vcvt.s32.f32 %v1771
        %v1900 = vcvt.s32.f32 %v1772
        %v1901 = vcvt.s32.f32 %v1773
        %v1902 = vcvt.s32.f32 %v1774
        %v1903 = vcvt.s32.f32 %v1775
        %v1904 = vcvt.s32.f32 %v1776
        %v1905 = vcvt.s32.f32 %v1777
        %v1906 = vcvt.s32.f32 %v1778
        %v1907 = vcvt.s32.f32 %v1779
        %v1908 = vcvt.s32.f32 %v1780
        %v1909 = vcvt.s32.f32 %v1781
        %v1910 = vcvt.s32.f32 %v1782
        %v1911 = vcvt.s32.f32 %v1783
        %v1912 = vld [vmem:[%s295] sm:$0xff]
        %v1913 = vld [vmem:[%s295 + $0x8] sm:$0xff]
        %v1914 = vld [vmem:[%s295 + $0x10] sm:$0xff]
        %v1915 = vld [vmem:[%s295 + $0x18] sm:$0xff]
        %v1916 = vld [vmem:[%s295 + $0x20] sm:$0xff]
        %v1917 = vld [vmem:[%s295 + $0x28] sm:$0xff]
        %v1918 = vld [vmem:[%s295 + $0x30] sm:$0xff]
        %v1919 = vld [vmem:[%s295 + $0x38] sm:$0xff]
        %v1920 = vld [vmem:[%s295 + $0x40] sm:$0xff]
        %v1921 = vld [vmem:[%s295 + $0x48] sm:$0xff]
        %v1922 = vld [vmem:[%s295 + $0x50] sm:$0xff]
        %v1923 = vld [vmem:[%s295 + $0x58] sm:$0xff]
        %v1924 = vld [vmem:[%s295 + $0x60] sm:$0xff]
        %v1925 = vld [vmem:[%s295 + $0x68] sm:$0xff]
        %v1926 = vld [vmem:[%s295 + $0x70] sm:$0xff]
        %v1927 = vld [vmem:[%s295 + $0x78] sm:$0xff]
        %v1928 = vld [vmem:[%s295 + $0x80] sm:$0xff]
        %v1929 = vld [vmem:[%s295 + $0x88] sm:$0xff]
        %v1930 = vld [vmem:[%s295 + $0x90] sm:$0xff]
        %v1931 = vld [vmem:[%s295 + $0x98] sm:$0xff]
        %v1932 = vld [vmem:[%s295 + $0xa0] sm:$0xff]
        %v1933 = vld [vmem:[%s295 + $0xa8] sm:$0xff]
        %v1934 = vld [vmem:[%s295 + $0xb0] sm:$0xff]
        %v1935 = vld [vmem:[%s295 + $0xb8] sm:$0xff]
        %v1936 = vld [vmem:[%s295 + $0xc0] sm:$0xff]
        %v1937 = vld [vmem:[%s295 + $0xc8] sm:$0xff]
        %v1938 = vld [vmem:[%s295 + $0xd0] sm:$0xff]
        %v1939 = vld [vmem:[%s295 + $0xd8] sm:$0xff]
        %v1940 = vld [vmem:[%s295 + $0xe0] sm:$0xff]
        %v1941 = vld [vmem:[%s295 + $0xe8] sm:$0xff]
        %v1942 = vld [vmem:[%s295 + $0xf0] sm:$0xff]
        %v1943 = vld [vmem:[%s295 + $0xf8] sm:$0xff]
        %v1944 = vld [vmem:[#allocation2] sm:$0xff]
        %v1945 = vld [vmem:[#allocation2 + $0x8] sm:$0xff]
        %v1946 = vld [vmem:[#allocation2 + $0x10] sm:$0xff]
        %v1947 = vld [vmem:[#allocation2 + $0x18] sm:$0xff]
        %v1948 = vld [vmem:[#allocation2 + $0x20] sm:$0xff]
        %v1949 = vld [vmem:[#allocation2 + $0x28] sm:$0xff]
        %v1950 = vld [vmem:[#allocation2 + $0x30] sm:$0xff]
        %v1951 = vld [vmem:[#allocation2 + $0x38] sm:$0xff]
        %v1952 = vld [vmem:[#allocation2 + $0x40] sm:$0xff]
        %v1953 = vld [vmem:[#allocation2 + $0x48] sm:$0xff]
        %v1954 = vld [vmem:[#allocation2 + $0x50] sm:$0xff]
        %v1955 = vld [vmem:[#allocation2 + $0x58] sm:$0xff]
        %v1956 = vld [vmem:[#allocation2 + $0x60] sm:$0xff]
        %v1957 = vld [vmem:[#allocation2 + $0x68] sm:$0xff]
        %v1958 = vld [vmem:[#allocation2 + $0x70] sm:$0xff]
        %v1959 = vld [vmem:[#allocation2 + $0x78] sm:$0xff]
        %v1960 = vld [vmem:[#allocation2 + $0x80] sm:$0xff]
        %v1961 = vld [vmem:[#allocation2 + $0x88] sm:$0xff]
        %v1962 = vld [vmem:[#allocation2 + $0x90] sm:$0xff]
        %v1963 = vld [vmem:[#allocation2 + $0x98] sm:$0xff]
        %v1964 = vld [vmem:[#allocation2 + $0xa0] sm:$0xff]
        %v1965 = vld [vmem:[#allocation2 + $0xa8] sm:$0xff]
        %v1966 = vld [vmem:[#allocation2 + $0xb0] sm:$0xff]
        %v1967 = vld [vmem:[#allocation2 + $0xb8] sm:$0xff]
        %v1968 = vld [vmem:[#allocation2 + $0xc0] sm:$0xff]
        %v1969 = vld [vmem:[#allocation2 + $0xc8] sm:$0xff]
        %v1970 = vld [vmem:[#allocation2 + $0xd0] sm:$0xff]
        %v1971 = vld [vmem:[#allocation2 + $0xd8] sm:$0xff]
        %v1972 = vld [vmem:[#allocation2 + $0xe0] sm:$0xff]
        %v1973 = vld [vmem:[#allocation2 + $0xe8] sm:$0xff]
        %v1974 = vld [vmem:[#allocation2 + $0xf0] sm:$0xff]
        %v1975 = vld [vmem:[#allocation2 + $0xf8] sm:$0xff]
        %v1976 = vld [vmem:[#allocation2 + $0x100] sm:$0xff]
        %v1977 = vld [vmem:[#allocation2 + $0x108] sm:$0xff]
        %v1978 = vld [vmem:[#allocation2 + $0x110] sm:$0xff]
        %v1979 = vld [vmem:[#allocation2 + $0x118] sm:$0xff]
        %v1980 = vld [vmem:[#allocation2 + $0x120] sm:$0xff]
        %v1981 = vld [vmem:[#allocation2 + $0x128] sm:$0xff]
        %v1982 = vld [vmem:[#allocation2 + $0x130] sm:$0xff]
        %v1983 = vld [vmem:[#allocation2 + $0x138] sm:$0xff]
        %v1984 = vld [vmem:[#allocation2 + $0x140] sm:$0xff]
        %v1985 = vld [vmem:[#allocation2 + $0x148] sm:$0xff]
        %v1986 = vld [vmem:[#allocation2 + $0x150] sm:$0xff]
        %v1987 = vld [vmem:[#allocation2 + $0x158] sm:$0xff]
        %v1988 = vld [vmem:[#allocation2 + $0x160] sm:$0xff]
        %v1989 = vld [vmem:[#allocation2 + $0x168] sm:$0xff]
        %v1990 = vld [vmem:[#allocation2 + $0x170] sm:$0xff]
        %v1991 = vld [vmem:[#allocation2 + $0x178] sm:$0xff]
        %v1992 = vld [vmem:[#allocation2 + $0x180] sm:$0xff]
        %v1993 = vld [vmem:[#allocation2 + $0x188] sm:$0xff]
        %v1994 = vld [vmem:[#allocation2 + $0x190] sm:$0xff]
        %v1995 = vld [vmem:[#allocation2 + $0x198] sm:$0xff]
        %v1996 = vld [vmem:[#allocation2 + $0x1a0] sm:$0xff]
        %v1997 = vld [vmem:[#allocation2 + $0x1a8] sm:$0xff]
        %v1998 = vld [vmem:[#allocation2 + $0x1b0] sm:$0xff]
        %v1999 = vld [vmem:[#allocation2 + $0x1b8] sm:$0xff]
        %v2000 = vld [vmem:[#allocation2 + $0x1c0] sm:$0xff]
        %v2001 = vld [vmem:[#allocation2 + $0x1c8] sm:$0xff]
        %v2002 = vld [vmem:[#allocation2 + $0x1d0] sm:$0xff]
        %v2003 = vld [vmem:[#allocation2 + $0x1d8] sm:$0xff]
        %v2004 = vld [vmem:[#allocation2 + $0x1e0] sm:$0xff]
        %v2005 = vld [vmem:[#allocation2 + $0x1e8] sm:$0xff]
        %v2006 = vld [vmem:[#allocation2 + $0x1f0] sm:$0xff]
        %v2007 = vld [vmem:[#allocation2 + $0x1f8] sm:$0xff]
        %2008 = vxpose.xlu0.b32.start [1/16] %v1784, 128
        %2009 = vxpose.xlu0.b32.cont [2/16] %v1788, 128
        %2010 = vxpose.xlu0.b32.cont [3/16] %v1792, 128
        %2011 = vxpose.xlu0.b32.cont [4/16] %v1796, 128
        %2012 = vxpose.xlu0.b32.cont [5/16] %v1800, 128
        %2013 = vxpose.xlu0.b32.cont [6/16] %v1804, 128
        %2014 = vxpose.xlu0.b32.cont [7/16] %v1808, 128
        %2015 = vxpose.xlu0.b32.cont [8/16] %v1812, 128
        %2016 = vxpose.xlu0.b32.cont [9/16] %v1816, 128
        %2017 = vxpose.xlu0.b32.cont [10/16] %v1820, 128
        %2018 = vxpose.xlu0.b32.cont [11/16] %v1824, 128
        %2019 = vxpose.xlu0.b32.cont [12/16] %v1828, 128
        %2020 = vxpose.xlu0.b32.cont [13/16] %v1832, 128
        %2021 = vxpose.xlu0.b32.cont [14/16] %v1836, 128
        %2022 = vxpose.xlu0.b32.cont [15/16] %v1840, 128
        %2023 = vxpose.xlu0.b32.end [16/16] %v1844, 128
        %v2024 = vpop.trf.xlu0
        %v2025 = vpop.trf.xlu0
        %v2026 = vpop.trf.xlu0
        %v2027 = vpop.trf.xlu0
        %v2028 = vpop.trf.xlu0
        %v2029 = vpop.trf.xlu0
        %v2030 = vpop.trf.xlu0
        %v2031 = vpop.trf.xlu0
        %v2032 = vpop.trf.xlu0
        %v2033 = vpop.trf.xlu0
        %v2034 = vpop.trf.xlu0
        %v2035 = vpop.trf.xlu0
        %v2036 = vpop.trf.xlu0
        %v2037 = vpop.trf.xlu0
        %v2038 = vpop.trf.xlu0
        %v2039 = vpop.trf.xlu0
        %2040 = vxpose.xlu0.b32.start [1/16] %v1785, 128
        %2041 = vxpose.xlu0.b32.cont [2/16] %v1789, 128
        %2042 = vxpose.xlu0.b32.cont [3/16] %v1793, 128
        %2043 = vxpose.xlu0.b32.cont [4/16] %v1797, 128
        %2044 = vxpose.xlu0.b32.cont [5/16] %v1801, 128
        %2045 = vxpose.xlu0.b32.cont [6/16] %v1805, 128
        %2046 = vxpose.xlu0.b32.cont [7/16] %v1809, 128
        %2047 = vxpose.xlu0.b32.cont [8/16] %v1813, 128
        %2048 = vxpose.xlu0.b32.cont [9/16] %v1817, 128
        %2049 = vxpose.xlu0.b32.cont [10/16] %v1821, 128
        %2050 = vxpose.xlu0.b32.cont [11/16] %v1825, 128
        %2051 = vxpose.xlu0.b32.cont [12/16] %v1829, 128
        %2052 = vxpose.xlu0.b32.cont [13/16] %v1833, 128
        %2053 = vxpose.xlu0.b32.cont [14/16] %v1837, 128
        %2054 = vxpose.xlu0.b32.cont [15/16] %v1841, 128
        %2055 = vxpose.xlu0.b32.end [16/16] %v1845, 128
        %v2056 = vpop.trf.xlu0
        %v2057 = vpop.trf.xlu0
        %v2058 = vpop.trf.xlu0
        %v2059 = vpop.trf.xlu0
        %v2060 = vpop.trf.xlu0
        %v2061 = vpop.trf.xlu0
        %v2062 = vpop.trf.xlu0
        %v2063 = vpop.trf.xlu0
        %v2064 = vpop.trf.xlu0
        %v2065 = vpop.trf.xlu0
        %v2066 = vpop.trf.xlu0
        %v2067 = vpop.trf.xlu0
        %v2068 = vpop.trf.xlu0
        %v2069 = vpop.trf.xlu0
        %v2070 = vpop.trf.xlu0
        %v2071 = vpop.trf.xlu0
        %2072 = vxpose.xlu0.b32.start [1/16] %v1786, 128
        %2073 = vxpose.xlu0.b32.cont [2/16] %v1790, 128
        %2074 = vxpose.xlu0.b32.cont [3/16] %v1794, 128
        %2075 = vxpose.xlu0.b32.cont [4/16] %v1798, 128
        %2076 = vxpose.xlu0.b32.cont [5/16] %v1802, 128
        %2077 = vxpose.xlu0.b32.cont [6/16] %v1806, 128
        %2078 = vxpose.xlu0.b32.cont [7/16] %v1810, 128
        %2079 = vxpose.xlu0.b32.cont [8/16] %v1814, 128
        %2080 = vxpose.xlu0.b32.cont [9/16] %v1818, 128
        %2081 = vxpose.xlu0.b32.cont [10/16] %v1822, 128
        %2082 = vxpose.xlu0.b32.cont [11/16] %v1826, 128
        %2083 = vxpose.xlu0.b32.cont [12/16] %v1830, 128
        %2084 = vxpose.xlu0.b32.cont [13/16] %v1834, 128
        %2085 = vxpose.xlu0.b32.cont [14/16] %v1838, 128
        %2086 = vxpose.xlu0.b32.cont [15/16] %v1842, 128
        %2087 = vxpose.xlu0.b32.end [16/16] %v1846, 128
        %v2088 = vpop.trf.xlu0
        %v2089 = vpop.trf.xlu0
        %v2090 = vpop.trf.xlu0
        %v2091 = vpop.trf.xlu0
        %v2092 = vpop.trf.xlu0
        %v2093 = vpop.trf.xlu0
        %v2094 = vpop.trf.xlu0
        %v2095 = vpop.trf.xlu0
        %v2096 = vpop.trf.xlu0
        %v2097 = vpop.trf.xlu0
        %v2098 = vpop.trf.xlu0
        %v2099 = vpop.trf.xlu0
        %v2100 = vpop.trf.xlu0
        %v2101 = vpop.trf.xlu0
        %v2102 = vpop.trf.xlu0
        %v2103 = vpop.trf.xlu0
        %2104 = vxpose.xlu0.b32.start [1/16] %v1787, 128
        %2105 = vxpose.xlu0.b32.cont [2/16] %v1791, 128
        %2106 = vxpose.xlu0.b32.cont [3/16] %v1795, 128
        %2107 = vxpose.xlu0.b32.cont [4/16] %v1799, 128
        %2108 = vxpose.xlu0.b32.cont [5/16] %v1803, 128
        %2109 = vxpose.xlu0.b32.cont [6/16] %v1807, 128
        %2110 = vxpose.xlu0.b32.cont [7/16] %v1811, 128
        %2111 = vxpose.xlu0.b32.cont [8/16] %v1815, 128
        %2112 = vxpose.xlu0.b32.cont [9/16] %v1819, 128
        %2113 = vxpose.xlu0.b32.cont [10/16] %v1823, 128
        %2114 = vxpose.xlu0.b32.cont [11/16] %v1827, 128
        %2115 = vxpose.xlu0.b32.cont [12/16] %v1831, 128
        %2116 = vxpose.xlu0.b32.cont [13/16] %v1835, 128
        %2117 = vxpose.xlu0.b32.cont [14/16] %v1839, 128
        %2118 = vxpose.xlu0.b32.cont [15/16] %v1843, 128
        %2119 = vxpose.xlu0.b32.end [16/16] %v1847, 128
        %v2120 = vpop.trf.xlu0
        %v2121 = vpop.trf.xlu0
        %v2122 = vpop.trf.xlu0
        %v2123 = vpop.trf.xlu0
        %v2124 = vpop.trf.xlu0
        %v2125 = vpop.trf.xlu0
        %v2126 = vpop.trf.xlu0
        %v2127 = vpop.trf.xlu0
        %v2128 = vpop.trf.xlu0
        %v2129 = vpop.trf.xlu0
        %v2130 = vpop.trf.xlu0
        %v2131 = vpop.trf.xlu0
        %v2132 = vpop.trf.xlu0
        %v2133 = vpop.trf.xlu0
        %v2134 = vpop.trf.xlu0
        %v2135 = vpop.trf.xlu0
        %2136 = vxpose.xlu0.b32.start [1/16] %v1848, 128
        %2137 = vxpose.xlu0.b32.cont [2/16] %v1852, 128
        %2138 = vxpose.xlu0.b32.cont [3/16] %v1856, 128
        %2139 = vxpose.xlu0.b32.cont [4/16] %v1860, 128
        %2140 = vxpose.xlu0.b32.cont [5/16] %v1864, 128
        %2141 = vxpose.xlu0.b32.cont [6/16] %v1868, 128
        %2142 = vxpose.xlu0.b32.cont [7/16] %v1872, 128
        %2143 = vxpose.xlu0.b32.cont [8/16] %v1876, 128
        %2144 = vxpose.xlu0.b32.cont [9/16] %v1880, 128
        %2145 = vxpose.xlu0.b32.cont [10/16] %v1884, 128
        %2146 = vxpose.xlu0.b32.cont [11/16] %v1888, 128
        %2147 = vxpose.xlu0.b32.cont [12/16] %v1892, 128
        %2148 = vxpose.xlu0.b32.cont [13/16] %v1896, 128
        %2149 = vxpose.xlu0.b32.cont [14/16] %v1900, 128
        %2150 = vxpose.xlu0.b32.cont [15/16] %v1904, 128
        %2151 = vxpose.xlu0.b32.end [16/16] %v1908, 128
        %v2152 = vpop.trf.xlu0
        %v2153 = vpop.trf.xlu0
        %v2154 = vpop.trf.xlu0
        %v2155 = vpop.trf.xlu0
        %v2156 = vpop.trf.xlu0
        %v2157 = vpop.trf.xlu0
        %v2158 = vpop.trf.xlu0
        %v2159 = vpop.trf.xlu0
        %v2160 = vpop.trf.xlu0
        %v2161 = vpop.trf.xlu0
        %v2162 = vpop.trf.xlu0
        %v2163 = vpop.trf.xlu0
        %v2164 = vpop.trf.xlu0
        %v2165 = vpop.trf.xlu0
        %v2166 = vpop.trf.xlu0
        %v2167 = vpop.trf.xlu0
        %2168 = vxpose.xlu0.b32.start [1/16] %v1849, 128
        %2169 = vxpose.xlu0.b32.cont [2/16] %v1853, 128
        %2170 = vxpose.xlu0.b32.cont [3/16] %v1857, 128
        %2171 = vxpose.xlu0.b32.cont [4/16] %v1861, 128
        %2172 = vxpose.xlu0.b32.cont [5/16] %v1865, 128
        %2173 = vxpose.xlu0.b32.cont [6/16] %v1869, 128
        %2174 = vxpose.xlu0.b32.cont [7/16] %v1873, 128
        %2175 = vxpose.xlu0.b32.cont [8/16] %v1877, 128
        %2176 = vxpose.xlu0.b32.cont [9/16] %v1881, 128
        %2177 = vxpose.xlu0.b32.cont [10/16] %v1885, 128
        %2178 = vxpose.xlu0.b32.cont [11/16] %v1889, 128
        %2179 = vxpose.xlu0.b32.cont [12/16] %v1893, 128
        %2180 = vxpose.xlu0.b32.cont [13/16] %v1897, 128
        %2181 = vxpose.xlu0.b32.cont [14/16] %v1901, 128
        %2182 = vxpose.xlu0.b32.cont [15/16] %v1905, 128
        %2183 = vxpose.xlu0.b32.end [16/16] %v1909, 128
        %v2184 = vpop.trf.xlu0
        %v2185 = vpop.trf.xlu0
        %v2186 = vpop.trf.xlu0
        %v2187 = vpop.trf.xlu0
        %v2188 = vpop.trf.xlu0
        %v2189 = vpop.trf.xlu0
        %v2190 = vpop.trf.xlu0
        %v2191 = vpop.trf.xlu0
        %v2192 = vpop.trf.xlu0
        %v2193 = vpop.trf.xlu0
        %v2194 = vpop.trf.xlu0
        %v2195 = vpop.trf.xlu0
        %v2196 = vpop.trf.xlu0
        %v2197 = vpop.trf.xlu0
        %v2198 = vpop.trf.xlu0
        %v2199 = vpop.trf.xlu0
        %2200 = vxpose.xlu0.b32.start [1/16] %v1850, 128
        %2201 = vxpose.xlu0.b32.cont [2/16] %v1854, 128
        %2202 = vxpose.xlu0.b32.cont [3/16] %v1858, 128
        %2203 = vxpose.xlu0.b32.cont [4/16] %v1862, 128
        %2204 = vxpose.xlu0.b32.cont [5/16] %v1866, 128
        %2205 = vxpose.xlu0.b32.cont [6/16] %v1870, 128
        %2206 = vxpose.xlu0.b32.cont [7/16] %v1874, 128
        %2207 = vxpose.xlu0.b32.cont [8/16] %v1878, 128
        %2208 = vxpose.xlu0.b32.cont [9/16] %v1882, 128
        %2209 = vxpose.xlu0.b32.cont [10/16] %v1886, 128
        %2210 = vxpose.xlu0.b32.cont [11/16] %v1890, 128
        %2211 = vxpose.xlu0.b32.cont [12/16] %v1894, 128
        %2212 = vxpose.xlu0.b32.cont [13/16] %v1898, 128
        %2213 = vxpose.xlu0.b32.cont [14/16] %v1902, 128
        %2214 = vxpose.xlu0.b32.cont [15/16] %v1906, 128
        %2215 = vxpose.xlu0.b32.end [16/16] %v1910, 128
        %v2216 = vpop.trf.xlu0
        %v2217 = vpop.trf.xlu0
        %v2218 = vpop.trf.xlu0
        %v2219 = vpop.trf.xlu0
        %v2220 = vpop.trf.xlu0
        %v2221 = vpop.trf.xlu0
        %v2222 = vpop.trf.xlu0
        %v2223 = vpop.trf.xlu0
        %v2224 = vpop.trf.xlu0
        %v2225 = vpop.trf.xlu0
        %v2226 = vpop.trf.xlu0
        %v2227 = vpop.trf.xlu0
        %v2228 = vpop.trf.xlu0
        %v2229 = vpop.trf.xlu0
        %v2230 = vpop.trf.xlu0
        %v2231 = vpop.trf.xlu0
        %2232 = vxpose.xlu0.b32.start [1/16] %v1851, 128
        %2233 = vxpose.xlu0.b32.cont [2/16] %v1855, 128
        %2234 = vxpose.xlu0.b32.cont [3/16] %v1859, 128
        %2235 = vxpose.xlu0.b32.cont [4/16] %v1863, 128
        %2236 = vxpose.xlu0.b32.cont [5/16] %v1867, 128
        %2237 = vxpose.xlu0.b32.cont [6/16] %v1871, 128
        %2238 = vxpose.xlu0.b32.cont [7/16] %v1875, 128
        %2239 = vxpose.xlu0.b32.cont [8/16] %v1879, 128
        %2240 = vxpose.xlu0.b32.cont [9/16] %v1883, 128
        %2241 = vxpose.xlu0.b32.cont [10/16] %v1887, 128
        %2242 = vxpose.xlu0.b32.cont [11/16] %v1891, 128
        %2243 = vxpose.xlu0.b32.cont [12/16] %v1895, 128
        %2244 = vxpose.xlu0.b32.cont [13/16] %v1899, 128
        %2245 = vxpose.xlu0.b32.cont [14/16] %v1903, 128
        %2246 = vxpose.xlu0.b32.cont [15/16] %v1907, 128
        %2247 = vxpose.xlu0.b32.end [16/16] %v1911, 128
        %v2248 = vpop.trf.xlu0
        %v2249 = vpop.trf.xlu0
        %v2250 = vpop.trf.xlu0
        %v2251 = vpop.trf.xlu0
        %v2252 = vpop.trf.xlu0
        %v2253 = vpop.trf.xlu0
        %v2254 = vpop.trf.xlu0
        %v2255 = vpop.trf.xlu0
        %v2256 = vpop.trf.xlu0
        %v2257 = vpop.trf.xlu0
        %v2258 = vpop.trf.xlu0
        %v2259 = vpop.trf.xlu0
        %v2260 = vpop.trf.xlu0
        %v2261 = vpop.trf.xlu0
        %v2262 = vpop.trf.xlu0
        %v2263 = vpop.trf.xlu0
        %2264 = vmatprep.subr.mxu0 0.0
        %2265 = vmatpush1.msra.mxu0 %v1927
        %2266 = vmatprep.subr.mxu0 0.0
        %2267 = vmatpush1.msra.mxu0 %v1926
        %2268 = vmatprep.subr.mxu0 0.0
        %2269 = vmatpush1.msra.mxu0 %v1925
        %2270 = vmatprep.subr.mxu0 0.0
        %2271 = vmatpush1.msra.mxu0 %v1924
        %2272 = vmatprep.subr.mxu0 0.0
        %2273 = vmatpush1.msra.mxu0 %v1923
        %2274 = vmatprep.subr.mxu0 0.0
        %2275 = vmatpush1.msra.mxu0 %v1922
        %2276 = vmatprep.subr.mxu0 0.0
        %2277 = vmatpush1.msra.mxu0 %v1921
        %2278 = vmatprep.subr.mxu0 0.0
        %2279 = vmatpush1.msra.mxu0 %v1920
        %2280 = vmatprep.subr.mxu0 0.0
        %2281 = vmatpush1.msra.mxu0 %v1919
        %2282 = vmatprep.subr.mxu0 0.0
        %2283 = vmatpush1.msra.mxu0 %v1918
        %2284 = vmatprep.subr.mxu0 0.0
        %2285 = vmatpush1.msra.mxu0 %v1917
        %2286 = vmatprep.subr.mxu0 0.0
        %2287 = vmatpush1.msra.mxu0 %v1916
        %2288 = vmatprep.subr.mxu0 0.0
        %2289 = vmatpush1.msra.mxu0 %v1915
        %2290 = vmatprep.subr.mxu0 0.0
        %2291 = vmatpush1.msra.mxu0 %v1914
        %2292 = vmatprep.subr.mxu0 0.0
        %2293 = vmatpush1.msra.mxu0 %v1913
        %2294 = vmatprep.subr.mxu0 0.0
        %2295 = vmatpush1.msra.mxu0 %v1912
        %2296 = vmatprep.subr.mxu0 0.0
        %2297 = vmatpush2.msra.mxu0 %v1943
        %2298 = vmatprep.subr.mxu0 0.0
        %2299 = vmatpush2.msra.mxu0 %v1942
        %2300 = vmatprep.subr.mxu0 0.0
        %2301 = vmatpush2.msra.mxu0 %v1941
        %2302 = vmatprep.subr.mxu0 0.0
        %2303 = vmatpush2.msra.mxu0 %v1940
        %2304 = vmatprep.subr.mxu0 0.0
        %2305 = vmatpush2.msra.mxu0 %v1939
        %2306 = vmatprep.subr.mxu0 0.0
        %2307 = vmatpush2.msra.mxu0 %v1938
        %2308 = vmatprep.subr.mxu0 0.0
        %2309 = vmatpush2.msra.mxu0 %v1937
        %2310 = vmatprep.subr.mxu0 0.0
        %2311 = vmatpush2.msra.mxu0 %v1936
        %2312 = vmatprep.subr.mxu0 0.0
        %2313 = vmatpush2.msra.mxu0 %v1935
        %2314 = vmatprep.subr.mxu0 0.0
        %2315 = vmatpush2.msra.mxu0 %v1934
        %2316 = vmatprep.subr.mxu0 0.0
        %2317 = vmatpush2.msra.mxu0 %v1933
        %2318 = vmatprep.subr.mxu0 0.0
        %2319 = vmatpush2.msra.mxu0 %v1932
        %2320 = vmatprep.subr.mxu0 0.0
        %2321 = vmatpush2.msra.mxu0 %v1931
        %2322 = vmatprep.subr.mxu0 0.0
        %2323 = vmatpush2.msra.mxu0 %v1930
        %2324 = vmatprep.subr.mxu0 0.0
        %2325 = vmatpush2.msra.mxu0 %v1929
        %2326 = vmatprep.subr.mxu0 0.0
        %2327 = vmatpush2.msra.mxu0 %v1928
        %2328 = vmatprep.mubr.f32.mxu0 %v2152
        %2329 = vmatmul.mubr.f32.gmra.mxu0 %v2024
        %v2330 = vpop.f32.mrf.mxu0
        %v2331 = vadd.f32 0.0, %v2330
        %v2332 = vpop.f32.mrf.mxu0
        %2333 = vmatprep.mubr.f32.mxu0 %v2153
        %2334 = vmatmul.mubr.f32.gmra.mxu0 %v2025
        %v2335 = vpop.f32.mrf.mxu0
        %v2336 = vadd.f32 0.0, %v2335
        %v2337 = vpop.f32.mrf.mxu0
        %2338 = vmatprep.mubr.f32.mxu0 %v2154
        %2339 = vmatmul.mubr.f32.gmra.mxu0 %v2026
        %v2340 = vpop.f32.mrf.mxu0
        %v2341 = vadd.f32 0.0, %v2340
        %v2342 = vpop.f32.mrf.mxu0
        %2343 = vmatprep.mubr.f32.mxu0 %v2155
        %2344 = vmatmul.mubr.f32.gmra.mxu0 %v2027
        %v2345 = vpop.f32.mrf.mxu0
        %v2346 = vadd.f32 0.0, %v2345
        %v2347 = vpop.f32.mrf.mxu0
        %2348 = vmatprep.mubr.f32.mxu0 %v2156
        %2349 = vmatmul.mubr.f32.gmra.mxu0 %v2028
        %v2350 = vpop.f32.mrf.mxu0
        %v2351 = vadd.f32 0.0, %v2350
        %v2352 = vpop.f32.mrf.mxu0
        %2353 = vmatprep.mubr.f32.mxu0 %v2157
        %2354 = vmatmul.mubr.f32.gmra.mxu0 %v2029
        %v2355 = vpop.f32.mrf.mxu0
        %v2356 = vadd.f32 0.0, %v2355
        %v2357 = vpop.f32.mrf.mxu0
        %2358 = vmatprep.mubr.f32.mxu0 %v2158
        %2359 = vmatmul.mubr.f32.gmra.mxu0 %v2030
        %v2360 = vpop.f32.mrf.mxu0
        %v2361 = vadd.f32 0.0, %v2360
        %v2362 = vpop.f32.mrf.mxu0
        %2363 = vmatprep.mubr.f32.mxu0 %v2159
        %2364 = vmatmul.mubr.f32.gmra.mxu0 %v2031
        %v2365 = vpop.f32.mrf.mxu0
        %v2366 = vadd.f32 0.0, %v2365
        %v2367 = vpop.f32.mrf.mxu0
        %2368 = vmatprep.mubr.f32.mxu0 %v2160
        %2369 = vmatmul.mubr.f32.gmra.mxu0 %v2032
        %v2370 = vpop.f32.mrf.mxu0
        %v2371 = vadd.f32 0.0, %v2370
        %v2372 = vpop.f32.mrf.mxu0
        %2373 = vmatprep.mubr.f32.mxu0 %v2161
        %2374 = vmatmul.mubr.f32.gmra.mxu0 %v2033
        %v2375 = vpop.f32.mrf.mxu0
        %v2376 = vadd.f32 0.0, %v2375
        %v2377 = vpop.f32.mrf.mxu0
        %2378 = vmatprep.mubr.f32.mxu0 %v2162
        %2379 = vmatmul.mubr.f32.gmra.mxu0 %v2034
        %v2380 = vpop.f32.mrf.mxu0
        %v2381 = vadd.f32 0.0, %v2380
        %v2382 = vpop.f32.mrf.mxu0
        %2383 = vmatprep.mubr.f32.mxu0 %v2163
        %2384 = vmatmul.mubr.f32.gmra.mxu0 %v2035
        %v2385 = vpop.f32.mrf.mxu0
        %v2386 = vadd.f32 0.0, %v2385
        %v2387 = vpop.f32.mrf.mxu0
        %2388 = vmatprep.mubr.f32.mxu0 %v2164
        %2389 = vmatmul.mubr.f32.gmra.mxu0 %v2036
        %v2390 = vpop.f32.mrf.mxu0
        %v2391 = vadd.f32 0.0, %v2390
        %v2392 = vpop.f32.mrf.mxu0
        %2393 = vmatprep.mubr.f32.mxu0 %v2165
        %2394 = vmatmul.mubr.f32.gmra.mxu0 %v2037
        %v2395 = vpop.f32.mrf.mxu0
        %v2396 = vadd.f32 0.0, %v2395
        %v2397 = vpop.f32.mrf.mxu0
        %2398 = vmatprep.mubr.f32.mxu0 %v2166
        %2399 = vmatmul.mubr.f32.gmra.mxu0 %v2038
        %v2400 = vpop.f32.mrf.mxu0
        %v2401 = vadd.f32 0.0, %v2400
        %v2402 = vpop.f32.mrf.mxu0
        %2403 = vmatprep.mubr.f32.mxu0 %v2167
        %2404 = vmatmul.mubr.f32.gmra.mxu0 %v2039
        %v2405 = vpop.f32.mrf.mxu0
        %v2406 = vadd.f32 0.0, %v2405
        %v2407 = vpop.f32.mrf.mxu0
        %2408 = vmatprep.mubr.f32.mxu0 %v2184
        %2409 = vmatmul.mubr.f32.gmra.mxu0 %v2056
        %v2410 = vpop.f32.mrf.mxu0
        %v2411 = vadd.f32 0.0, %v2410
        %v2412 = vpop.f32.mrf.mxu0
        %2413 = vmatprep.mubr.f32.mxu0 %v2185
        %2414 = vmatmul.mubr.f32.gmra.mxu0 %v2057
        %v2415 = vpop.f32.mrf.mxu0
        %v2416 = vadd.f32 0.0, %v2415
        %v2417 = vpop.f32.mrf.mxu0
        %2418 = vmatprep.mubr.f32.mxu0 %v2186
        %2419 = vmatmul.mubr.f32.gmra.mxu0 %v2058
        %v2420 = vpop.f32.mrf.mxu0
        %v2421 = vadd.f32 0.0, %v2420
        %v2422 = vpop.f32.mrf.mxu0
        %2423 = vmatprep.mubr.f32.mxu0 %v2187
        %2424 = vmatmul.mubr.f32.gmra.mxu0 %v2059
        %v2425 = vpop.f32.mrf.mxu0
        %v2426 = vadd.f32 0.0, %v2425
        %v2427 = vpop.f32.mrf.mxu0
        %2428 = vmatprep.mubr.f32.mxu0 %v2188
        %2429 = vmatmul.mubr.f32.gmra.mxu0 %v2060
        %v2430 = vpop.f32.mrf.mxu0
        %v2431 = vadd.f32 0.0, %v2430
        %v2432 = vpop.f32.mrf.mxu0
        %2433 = vmatprep.mubr.f32.mxu0 %v2189
        %2434 = vmatmul.mubr.f32.gmra.mxu0 %v2061
        %v2435 = vpop.f32.mrf.mxu0
        %v2436 = vadd.f32 0.0, %v2435
        %v2437 = vpop.f32.mrf.mxu0
        %2438 = vmatprep.mubr.f32.mxu0 %v2190
        %2439 = vmatmul.mubr.f32.gmra.mxu0 %v2062
        %v2440 = vpop.f32.mrf.mxu0
        %v2441 = vadd.f32 0.0, %v2440
        %v2442 = vpop.f32.mrf.mxu0
        %2443 = vmatprep.mubr.f32.mxu0 %v2191
        %2444 = vmatmul.mubr.f32.gmra.mxu0 %v2063
        %v2445 = vpop.f32.mrf.mxu0
        %v2446 = vadd.f32 0.0, %v2445
        %v2447 = vpop.f32.mrf.mxu0
        %2448 = vmatprep.mubr.f32.mxu0 %v2192
        %2449 = vmatmul.mubr.f32.gmra.mxu0 %v2064
        %v2450 = vpop.f32.mrf.mxu0
        %v2451 = vadd.f32 0.0, %v2450
        %v2452 = vpop.f32.mrf.mxu0
        %2453 = vmatprep.mubr.f32.mxu0 %v2193
        %2454 = vmatmul.mubr.f32.gmra.mxu0 %v2065
        %v2455 = vpop.f32.mrf.mxu0
        %v2456 = vadd.f32 0.0, %v2455
        %v2457 = vpop.f32.mrf.mxu0
        %2458 = vmatprep.mubr.f32.mxu0 %v2194
        %2459 = vmatmul.mubr.f32.gmra.mxu0 %v2066
        %v2460 = vpop.f32.mrf.mxu0
        %v2461 = vadd.f32 0.0, %v2460
        %v2462 = vpop.f32.mrf.mxu0
        %2463 = vmatprep.mubr.f32.mxu0 %v2195
        %2464 = vmatmul.mubr.f32.gmra.mxu0 %v2067
        %v2465 = vpop.f32.mrf.mxu0
        %v2466 = vadd.f32 0.0, %v2465
        %v2467 = vpop.f32.mrf.mxu0
        %2468 = vmatprep.mubr.f32.mxu0 %v2196
        %2469 = vmatmul.mubr.f32.gmra.mxu0 %v2068
        %v2470 = vpop.f32.mrf.mxu0
        %v2471 = vadd.f32 0.0, %v2470
        %v2472 = vpop.f32.mrf.mxu0
        %2473 = vmatprep.mubr.f32.mxu0 %v2197
        %2474 = vmatmul.mubr.f32.gmra.mxu0 %v2069
        %v2475 = vpop.f32.mrf.mxu0
        %v2476 = vadd.f32 0.0, %v2475
        %v2477 = vpop.f32.mrf.mxu0
        %2478 = vmatprep.mubr.f32.mxu0 %v2198
        %2479 = vmatmul.mubr.f32.gmra.mxu0 %v2070
        %v2480 = vpop.f32.mrf.mxu0
        %v2481 = vadd.f32 0.0, %v2480
        %v2482 = vpop.f32.mrf.mxu0
        %2483 = vmatprep.mubr.f32.mxu0 %v2199
        %2484 = vmatmul.mubr.f32.gmra.mxu0 %v2071
        %v2485 = vpop.f32.mrf.mxu0
        %v2486 = vadd.f32 0.0, %v2485
        %v2487 = vpop.f32.mrf.mxu0
        %2488 = vmatprep.mubr.f32.mxu0 %v2216
        %2489 = vmatmul.mubr.f32.gmra.mxu0 %v2088
        %v2490 = vpop.f32.mrf.mxu0
        %v2491 = vadd.f32 0.0, %v2490
        %v2492 = vpop.f32.mrf.mxu0
        %2493 = vmatprep.mubr.f32.mxu0 %v2217
        %2494 = vmatmul.mubr.f32.gmra.mxu0 %v2089
        %v2495 = vpop.f32.mrf.mxu0
        %v2496 = vadd.f32 0.0, %v2495
        %v2497 = vpop.f32.mrf.mxu0
        %2498 = vmatprep.mubr.f32.mxu0 %v2218
        %2499 = vmatmul.mubr.f32.gmra.mxu0 %v2090
        %v2500 = vpop.f32.mrf.mxu0
        %v2501 = vadd.f32 0.0, %v2500
        %v2502 = vpop.f32.mrf.mxu0
        %2503 = vmatprep.mubr.f32.mxu0 %v2219
        %2504 = vmatmul.mubr.f32.gmra.mxu0 %v2091
        %v2505 = vpop.f32.mrf.mxu0
        %v2506 = vadd.f32 0.0, %v2505
        %v2507 = vpop.f32.mrf.mxu0
        %2508 = vmatprep.mubr.f32.mxu0 %v2220
        %2509 = vmatmul.mubr.f32.gmra.mxu0 %v2092
        %v2510 = vpop.f32.mrf.mxu0
        %v2511 = vadd.f32 0.0, %v2510
        %v2512 = vpop.f32.mrf.mxu0
        %2513 = vmatprep.mubr.f32.mxu0 %v2221
        %2514 = vmatmul.mubr.f32.gmra.mxu0 %v2093
        %v2515 = vpop.f32.mrf.mxu0
        %v2516 = vadd.f32 0.0, %v2515
        %v2517 = vpop.f32.mrf.mxu0
        %2518 = vmatprep.mubr.f32.mxu0 %v2222
        %2519 = vmatmul.mubr.f32.gmra.mxu0 %v2094
        %v2520 = vpop.f32.mrf.mxu0
        %v2521 = vadd.f32 0.0, %v2520
        %v2522 = vpop.f32.mrf.mxu0
        %2523 = vmatprep.mubr.f32.mxu0 %v2223
        %2524 = vmatmul.mubr.f32.gmra.mxu0 %v2095
        %v2525 = vpop.f32.mrf.mxu0
        %v2526 = vadd.f32 0.0, %v2525
        %v2527 = vpop.f32.mrf.mxu0
        %2528 = vmatprep.mubr.f32.mxu0 %v2224
        %2529 = vmatmul.mubr.f32.gmra.mxu0 %v2096
        %v2530 = vpop.f32.mrf.mxu0
        %v2531 = vadd.f32 0.0, %v2530
        %v2532 = vpop.f32.mrf.mxu0
        %2533 = vmatprep.mubr.f32.mxu0 %v2225
        %2534 = vmatmul.mubr.f32.gmra.mxu0 %v2097
        %v2535 = vpop.f32.mrf.mxu0
        %v2536 = vadd.f32 0.0, %v2535
        %v2537 = vpop.f32.mrf.mxu0
        %2538 = vmatprep.mubr.f32.mxu0 %v2226
        %2539 = vmatmul.mubr.f32.gmra.mxu0 %v2098
        %v2540 = vpop.f32.mrf.mxu0
        %v2541 = vadd.f32 0.0, %v2540
        %v2542 = vpop.f32.mrf.mxu0
        %2543 = vmatprep.mubr.f32.mxu0 %v2227
        %2544 = vmatmul.mubr.f32.gmra.mxu0 %v2099
        %v2545 = vpop.f32.mrf.mxu0
        %v2546 = vadd.f32 0.0, %v2545
        %v2547 = vpop.f32.mrf.mxu0
        %2548 = vmatprep.mubr.f32.mxu0 %v2228
        %2549 = vmatmul.mubr.f32.gmra.mxu0 %v2100
        %v2550 = vpop.f32.mrf.mxu0
        %v2551 = vadd.f32 0.0, %v2550
        %v2552 = vpop.f32.mrf.mxu0
        %2553 = vmatprep.mubr.f32.mxu0 %v2229
        %2554 = vmatmul.mubr.f32.gmra.mxu0 %v2101
        %v2555 = vpop.f32.mrf.mxu0
        %v2556 = vadd.f32 0.0, %v2555
        %v2557 = vpop.f32.mrf.mxu0
        %2558 = vmatprep.mubr.f32.mxu0 %v2230
        %2559 = vmatmul.mubr.f32.gmra.mxu0 %v2102
        %v2560 = vpop.f32.mrf.mxu0
        %v2561 = vadd.f32 0.0, %v2560
        %v2562 = vpop.f32.mrf.mxu0
        %2563 = vmatprep.mubr.f32.mxu0 %v2231
        %2564 = vmatmul.mubr.f32.gmra.mxu0 %v2103
        %v2565 = vpop.f32.mrf.mxu0
        %v2566 = vadd.f32 0.0, %v2565
        %v2567 = vpop.f32.mrf.mxu0
        %2568 = vmatprep.mubr.f32.mxu0 %v2248
        %2569 = vmatmul.mubr.f32.gmra.mxu0 %v2120
        %v2570 = vpop.f32.mrf.mxu0
        %v2571 = vadd.f32 0.0, %v2570
        %v2572 = vpop.f32.mrf.mxu0
        %2573 = vmatprep.mubr.f32.mxu0 %v2249
        %2574 = vmatmul.mubr.f32.gmra.mxu0 %v2121
        %v2575 = vpop.f32.mrf.mxu0
        %v2576 = vadd.f32 0.0, %v2575
        %v2577 = vpop.f32.mrf.mxu0
        %2578 = vmatprep.mubr.f32.mxu0 %v2250
        %2579 = vmatmul.mubr.f32.gmra.mxu0 %v2122
        %v2580 = vpop.f32.mrf.mxu0
        %v2581 = vadd.f32 0.0, %v2580
        %v2582 = vpop.f32.mrf.mxu0
        %2583 = vmatprep.mubr.f32.mxu0 %v2251
        %2584 = vmatmul.mubr.f32.gmra.mxu0 %v2123
        %v2585 = vpop.f32.mrf.mxu0
        %v2586 = vadd.f32 0.0, %v2585
        %v2587 = vpop.f32.mrf.mxu0
        %2588 = vmatprep.mubr.f32.mxu0 %v2252
        %2589 = vmatmul.mubr.f32.gmra.mxu0 %v2124
        %v2590 = vpop.f32.mrf.mxu0
        %v2591 = vadd.f32 0.0, %v2590
        %v2592 = vpop.f32.mrf.mxu0
        %2593 = vmatprep.mubr.f32.mxu0 %v2253
        %2594 = vmatmul.mubr.f32.gmra.mxu0 %v2125
        %v2595 = vpop.f32.mrf.mxu0
        %v2596 = vadd.f32 0.0, %v2595
        %v2597 = vpop.f32.mrf.mxu0
        %2598 = vmatprep.mubr.f32.mxu0 %v2254
        %2599 = vmatmul.mubr.f32.gmra.mxu0 %v2126
        %v2600 = vpop.f32.mrf.mxu0
        %v2601 = vadd.f32 0.0, %v2600
        %v2602 = vpop.f32.mrf.mxu0
        %2603 = vmatprep.mubr.f32.mxu0 %v2255
        %2604 = vmatmul.mubr.f32.gmra.mxu0 %v2127
        %v2605 = vpop.f32.mrf.mxu0
        %v2606 = vadd.f32 0.0, %v2605
        %v2607 = vpop.f32.mrf.mxu0
        %2608 = vmatprep.mubr.f32.mxu0 %v2256
        %2609 = vmatmul.mubr.f32.gmra.mxu0 %v2128
        %v2610 = vpop.f32.mrf.mxu0
        %v2611 = vadd.f32 0.0, %v2610
        %v2612 = vpop.f32.mrf.mxu0
        %2613 = vmatprep.mubr.f32.mxu0 %v2257
        %2614 = vmatmul.mubr.f32.gmra.mxu0 %v2129
        %v2615 = vpop.f32.mrf.mxu0
        %v2616 = vadd.f32 0.0, %v2615
        %v2617 = vpop.f32.mrf.mxu0
        %2618 = vmatprep.mubr.f32.mxu0 %v2258
        %2619 = vmatmul.mubr.f32.gmra.mxu0 %v2130
        %v2620 = vpop.f32.mrf.mxu0
        %v2621 = vadd.f32 0.0, %v2620
        %v2622 = vpop.f32.mrf.mxu0
        %2623 = vmatprep.mubr.f32.mxu0 %v2259
        %2624 = vmatmul.mubr.f32.gmra.mxu0 %v2131
        %v2625 = vpop.f32.mrf.mxu0
        %v2626 = vadd.f32 0.0, %v2625
        %v2627 = vpop.f32.mrf.mxu0
        %2628 = vmatprep.mubr.f32.mxu0 %v2260
        %2629 = vmatmul.mubr.f32.gmra.mxu0 %v2132
        %v2630 = vpop.f32.mrf.mxu0
        %v2631 = vadd.f32 0.0, %v2630
        %v2632 = vpop.f32.mrf.mxu0
        %2633 = vmatprep.mubr.f32.mxu0 %v2261
        %2634 = vmatmul.mubr.f32.gmra.mxu0 %v2133
        %v2635 = vpop.f32.mrf.mxu0
        %v2636 = vadd.f32 0.0, %v2635
        %v2637 = vpop.f32.mrf.mxu0
        %2638 = vmatprep.mubr.f32.mxu0 %v2262
        %2639 = vmatmul.mubr.f32.gmra.mxu0 %v2134
        %v2640 = vpop.f32.mrf.mxu0
        %v2641 = vadd.f32 0.0, %v2640
        %v2642 = vpop.f32.mrf.mxu0
        %2643 = vmatprep.mubr.f32.mxu0 %v2263
        %2644 = vmatmul.mubr.f32.gmra.mxu0 %v2135
        %v2645 = vpop.f32.mrf.mxu0
        %v2646 = vadd.f32 0.0, %v2645
        %v2647 = vpop.f32.mrf.mxu0
        %2648 = vdwg.mxu0
        %v2649 = vadd.f32 %v1944, %v2331
        %v2650 = vadd.f32 %v1945, %v2336
        %v2651 = vadd.f32 %v1946, %v2341
        %v2652 = vadd.f32 %v1947, %v2346
        %v2653 = vadd.f32 %v1948, %v2351
        %v2654 = vadd.f32 %v1949, %v2356
        %v2655 = vadd.f32 %v1950, %v2361
        %v2656 = vadd.f32 %v1951, %v2366
        %v2657 = vadd.f32 %v1952, %v2371
        %v2658 = vadd.f32 %v1953, %v2376
        %v2659 = vadd.f32 %v1954, %v2381
        %v2660 = vadd.f32 %v1955, %v2386
        %v2661 = vadd.f32 %v1956, %v2391
        %v2662 = vadd.f32 %v1957, %v2396
        %v2663 = vadd.f32 %v1958, %v2401
        %v2664 = vadd.f32 %v1959, %v2406
        %v2665 = vadd.f32 %v1960, %v2411
        %v2666 = vadd.f32 %v1961, %v2416
        %v2667 = vadd.f32 %v1962, %v2421
        %v2668 = vadd.f32 %v1963, %v2426
        %v2669 = vadd.f32 %v1964, %v2431
        %v2670 = vadd.f32 %v1965, %v2436
        %v2671 = vadd.f32 %v1966, %v2441
        %v2672 = vadd.f32 %v1967, %v2446
        %v2673 = vadd.f32 %v1968, %v2451
        %v2674 = vadd.f32 %v1969, %v2456
        %v2675 = vadd.f32 %v1970, %v2461
        %v2676 = vadd.f32 %v1971, %v2466
        %v2677 = vadd.f32 %v1972, %v2471
        %v2678 = vadd.f32 %v1973, %v2476
        %v2679 = vadd.f32 %v1974, %v2481
        %v2680 = vadd.f32 %v1975, %v2486
        %v2681 = vadd.f32 %v1976, %v2491
        %v2682 = vadd.f32 %v1977, %v2496
        %v2683 = vadd.f32 %v1978, %v2501
        %v2684 = vadd.f32 %v1979, %v2506
        %v2685 = vadd.f32 %v1980, %v2511
        %v2686 = vadd.f32 %v1981, %v2516
        %v2687 = vadd.f32 %v1982, %v2521
        %v2688 = vadd.f32 %v1983, %v2526
        %v2689 = vadd.f32 %v1984, %v2531
        %v2690 = vadd.f32 %v1985, %v2536
        %v2691 = vadd.f32 %v1986, %v2541
        %v2692 = vadd.f32 %v1987, %v2546
        %v2693 = vadd.f32 %v1988, %v2551
        %v2694 = vadd.f32 %v1989, %v2556
        %v2695 = vadd.f32 %v1990, %v2561
        %v2696 = vadd.f32 %v1991, %v2566
        %v2697 = vadd.f32 %v1992, %v2571
        %v2698 = vadd.f32 %v1993, %v2576
        %v2699 = vadd.f32 %v1994, %v2581
        %v2700 = vadd.f32 %v1995, %v2586
        %v2701 = vadd.f32 %v1996, %v2591
        %v2702 = vadd.f32 %v1997, %v2596
        %v2703 = vadd.f32 %v1998, %v2601
        %v2704 = vadd.f32 %v1999, %v2606
        %v2705 = vadd.f32 %v2000, %v2611
        %v2706 = vadd.f32 %v2001, %v2616
        %v2707 = vadd.f32 %v2002, %v2621
        %v2708 = vadd.f32 %v2003, %v2626
        %v2709 = vadd.f32 %v2004, %v2631
        %v2710 = vadd.f32 %v2005, %v2636
        %v2711 = vadd.f32 %v2006, %v2641
        %v2712 = vadd.f32 %v2007, %v2646
        %vm2713 = vcmask 72704
        %2714 = vst.msk [vmem:[#allocation2] sm:$0xff] %vm2713, %v2649
        %2715 = vst.msk [vmem:[#allocation2 + $0x8] sm:$0xff] %vm2713, %v2650
        %2716 = vst.msk [vmem:[#allocation2 + $0x10] sm:$0xff] %vm2713, %v2651
        %2717 = vst.msk [vmem:[#allocation2 + $0x18] sm:$0xff] %vm2713, %v2652
        %2718 = vst.msk [vmem:[#allocation2 + $0x20] sm:$0xff] %vm2713, %v2653
        %2719 = vst.msk [vmem:[#allocation2 + $0x28] sm:$0xff] %vm2713, %v2654
        %2720 = vst.msk [vmem:[#allocation2 + $0x30] sm:$0xff] %vm2713, %v2655
        %2721 = vst.msk [vmem:[#allocation2 + $0x38] sm:$0xff] %vm2713, %v2656
        %2722 = vst.msk [vmem:[#allocation2 + $0x40] sm:$0xff] %vm2713, %v2657
        %2723 = vst.msk [vmem:[#allocation2 + $0x48] sm:$0xff] %vm2713, %v2658
        %2724 = vst.msk [vmem:[#allocation2 + $0x50] sm:$0xff] %vm2713, %v2659
        %2725 = vst.msk [vmem:[#allocation2 + $0x58] sm:$0xff] %vm2713, %v2660
        %2726 = vst.msk [vmem:[#allocation2 + $0x60] sm:$0xff] %vm2713, %v2661
        %2727 = vst.msk [vmem:[#allocation2 + $0x68] sm:$0xff] %vm2713, %v2662
        %2728 = vst.msk [vmem:[#allocation2 + $0x70] sm:$0xff] %vm2713, %v2663
        %2729 = vst.msk [vmem:[#allocation2 + $0x78] sm:$0xff] %vm2713, %v2664
        %2730 = vst.msk [vmem:[#allocation2 + $0x80] sm:$0xff] %vm2713, %v2665
        %2731 = vst.msk [vmem:[#allocation2 + $0x88] sm:$0xff] %vm2713, %v2666
        %2732 = vst.msk [vmem:[#allocation2 + $0x90] sm:$0xff] %vm2713, %v2667
        %2733 = vst.msk [vmem:[#allocation2 + $0x98] sm:$0xff] %vm2713, %v2668
        %2734 = vst.msk [vmem:[#allocation2 + $0xa0] sm:$0xff] %vm2713, %v2669
        %2735 = vst.msk [vmem:[#allocation2 + $0xa8] sm:$0xff] %vm2713, %v2670
        %2736 = vst.msk [vmem:[#allocation2 + $0xb0] sm:$0xff] %vm2713, %v2671
        %2737 = vst.msk [vmem:[#allocation2 + $0xb8] sm:$0xff] %vm2713, %v2672
        %2738 = vst.msk [vmem:[#allocation2 + $0xc0] sm:$0xff] %vm2713, %v2673
        %2739 = vst.msk [vmem:[#allocation2 + $0xc8] sm:$0xff] %vm2713, %v2674
        %2740 = vst.msk [vmem:[#allocation2 + $0xd0] sm:$0xff] %vm2713, %v2675
        %2741 = vst.msk [vmem:[#allocation2 + $0xd8] sm:$0xff] %vm2713, %v2676
        %2742 = vst.msk [vmem:[#allocation2 + $0xe0] sm:$0xff] %vm2713, %v2677
        %2743 = vst.msk [vmem:[#allocation2 + $0xe8] sm:$0xff] %vm2713, %v2678
        %2744 = vst.msk [vmem:[#allocation2 + $0xf0] sm:$0xff] %vm2713, %v2679
        %2745 = vst.msk [vmem:[#allocation2 + $0xf8] sm:$0xff] %vm2713, %v2680
        %2746 = vst.msk [vmem:[#allocation2 + $0x100] sm:$0xff] %vm2713, %v2681
        %2747 = vst.msk [vmem:[#allocation2 + $0x108] sm:$0xff] %vm2713, %v2682
        %2748 = vst.msk [vmem:[#allocation2 + $0x110] sm:$0xff] %vm2713, %v2683
        %2749 = vst.msk [vmem:[#allocation2 + $0x118] sm:$0xff] %vm2713, %v2684
        %2750 = vst.msk [vmem:[#allocation2 + $0x120] sm:$0xff] %vm2713, %v2685
        %2751 = vst.msk [vmem:[#allocation2 + $0x128] sm:$0xff] %vm2713, %v2686
        %2752 = vst.msk [vmem:[#allocation2 + $0x130] sm:$0xff] %vm2713, %v2687
        %2753 = vst.msk [vmem:[#allocation2 + $0x138] sm:$0xff] %vm2713, %v2688
        %2754 = vst.msk [vmem:[#allocation2 + $0x140] sm:$0xff] %vm2713, %v2689
        %2755 = vst.msk [vmem:[#allocation2 + $0x148] sm:$0xff] %vm2713, %v2690
        %2756 = vst.msk [vmem:[#allocation2 + $0x150] sm:$0xff] %vm2713, %v2691
        %2757 = vst.msk [vmem:[#allocation2 + $0x158] sm:$0xff] %vm2713, %v2692
        %2758 = vst.msk [vmem:[#allocation2 + $0x160] sm:$0xff] %vm2713, %v2693
        %2759 = vst.msk [vmem:[#allocation2 + $0x168] sm:$0xff] %vm2713, %v2694
        %2760 = vst.msk [vmem:[#allocation2 + $0x170] sm:$0xff] %vm2713, %v2695
        %2761 = vst.msk [vmem:[#allocation2 + $0x178] sm:$0xff] %vm2713, %v2696
        %2762 = vst.msk [vmem:[#allocation2 + $0x180] sm:$0xff] %vm2713, %v2697
        %2763 = vst.msk [vmem:[#allocation2 + $0x188] sm:$0xff] %vm2713, %v2698
        %2764 = vst.msk [vmem:[#allocation2 + $0x190] sm:$0xff] %vm2713, %v2699
        %2765 = vst.msk [vmem:[#allocation2 + $0x198] sm:$0xff] %vm2713, %v2700
        %2766 = vst.msk [vmem:[#allocation2 + $0x1a0] sm:$0xff] %vm2713, %v2701
        %2767 = vst.msk [vmem:[#allocation2 + $0x1a8] sm:$0xff] %vm2713, %v2702
        %2768 = vst.msk [vmem:[#allocation2 + $0x1b0] sm:$0xff] %vm2713, %v2703
        %2769 = vst.msk [vmem:[#allocation2 + $0x1b8] sm:$0xff] %vm2713, %v2704
        %2770 = vst.msk [vmem:[#allocation2 + $0x1c0] sm:$0xff] %vm2713, %v2705
        %2771 = vst.msk [vmem:[#allocation2 + $0x1c8] sm:$0xff] %vm2713, %v2706
        %2772 = vst.msk [vmem:[#allocation2 + $0x1d0] sm:$0xff] %vm2713, %v2707
        %2773 = vst.msk [vmem:[#allocation2 + $0x1d8] sm:$0xff] %vm2713, %v2708
        %2774 = vst.msk [vmem:[#allocation2 + $0x1e0] sm:$0xff] %vm2713, %v2709
        %2775 = vst.msk [vmem:[#allocation2 + $0x1e8] sm:$0xff] %vm2713, %v2710
        %2776 = vst.msk [vmem:[#allocation2 + $0x1f0] sm:$0xff] %vm2713, %v2711
        %2777 = vst.msk [vmem:[#allocation2 + $0x1f8] sm:$0xff] %vm2713, %v2712
        // Predicated region
        $region45: #{tpu_custom_call.1} parent=39 // pred_check
          %p2778 = pneg %p333
        $region46: #{tpu_custom_call.1} parent=39 // pred_check_branch
          %2780 = sbr.rel (%p2778) target = $region48
        $region47: #{tpu_custom_call.1} parent=39 // pred_region
          %v2781 = vld [vmem:[#allocation2] sm:$0xff]
          %v2782 = vld [vmem:[#allocation2 + $0x8] sm:$0xff]
          %v2783 = vld [vmem:[#allocation2 + $0x10] sm:$0xff]
          %v2784 = vld [vmem:[#allocation2 + $0x18] sm:$0xff]
          %v2785 = vld [vmem:[#allocation2 + $0x20] sm:$0xff]
          %v2786 = vld [vmem:[#allocation2 + $0x28] sm:$0xff]
          %v2787 = vld [vmem:[#allocation2 + $0x30] sm:$0xff]
          %v2788 = vld [vmem:[#allocation2 + $0x38] sm:$0xff]
          %v2789 = vld [vmem:[#allocation2 + $0x40] sm:$0xff]
          %v2790 = vld [vmem:[#allocation2 + $0x48] sm:$0xff]
          %v2791 = vld [vmem:[#allocation2 + $0x50] sm:$0xff]
          %v2792 = vld [vmem:[#allocation2 + $0x58] sm:$0xff]
          %v2793 = vld [vmem:[#allocation2 + $0x60] sm:$0xff]
          %v2794 = vld [vmem:[#allocation2 + $0x68] sm:$0xff]
          %v2795 = vld [vmem:[#allocation2 + $0x70] sm:$0xff]
          %v2796 = vld [vmem:[#allocation2 + $0x78] sm:$0xff]
          %v2797 = vld [vmem:[#allocation2 + $0x80] sm:$0xff]
          %v2798 = vld [vmem:[#allocation2 + $0x88] sm:$0xff]
          %v2799 = vld [vmem:[#allocation2 + $0x90] sm:$0xff]
          %v2800 = vld [vmem:[#allocation2 + $0x98] sm:$0xff]
          %v2801 = vld [vmem:[#allocation2 + $0xa0] sm:$0xff]
          %v2802 = vld [vmem:[#allocation2 + $0xa8] sm:$0xff]
          %v2803 = vld [vmem:[#allocation2 + $0xb0] sm:$0xff]
          %v2804 = vld [vmem:[#allocation2 + $0xb8] sm:$0xff]
          %v2805 = vld [vmem:[#allocation2 + $0xc0] sm:$0xff]
          %v2806 = vld [vmem:[#allocation2 + $0xc8] sm:$0xff]
          %v2807 = vld [vmem:[#allocation2 + $0xd0] sm:$0xff]
          %v2808 = vld [vmem:[#allocation2 + $0xd8] sm:$0xff]
          %v2809 = vld [vmem:[#allocation2 + $0xe0] sm:$0xff]
          %v2810 = vld [vmem:[#allocation2 + $0xe8] sm:$0xff]
          %v2811 = vld [vmem:[#allocation2 + $0xf0] sm:$0xff]
          %v2812 = vld [vmem:[#allocation2 + $0xf8] sm:$0xff]
          %v2813 = vld [vmem:[#allocation2 + $0x100] sm:$0xff]
          %v2814 = vld [vmem:[#allocation2 + $0x108] sm:$0xff]
          %v2815 = vld [vmem:[#allocation2 + $0x110] sm:$0xff]
          %v2816 = vld [vmem:[#allocation2 + $0x118] sm:$0xff]
          %v2817 = vld [vmem:[#allocation2 + $0x120] sm:$0xff]
          %v2818 = vld [vmem:[#allocation2 + $0x128] sm:$0xff]
          %v2819 = vld [vmem:[#allocation2 + $0x130] sm:$0xff]
          %v2820 = vld [vmem:[#allocation2 + $0x138] sm:$0xff]
          %v2821 = vld [vmem:[#allocation2 + $0x140] sm:$0xff]
          %v2822 = vld [vmem:[#allocation2 + $0x148] sm:$0xff]
          %v2823 = vld [vmem:[#allocation2 + $0x150] sm:$0xff]
          %v2824 = vld [vmem:[#allocation2 + $0x158] sm:$0xff]
          %v2825 = vld [vmem:[#allocation2 + $0x160] sm:$0xff]
          %v2826 = vld [vmem:[#allocation2 + $0x168] sm:$0xff]
          %v2827 = vld [vmem:[#allocation2 + $0x170] sm:$0xff]
          %v2828 = vld [vmem:[#allocation2 + $0x178] sm:$0xff]
          %v2829 = vld [vmem:[#allocation2 + $0x180] sm:$0xff]
          %v2830 = vld [vmem:[#allocation2 + $0x188] sm:$0xff]
          %v2831 = vld [vmem:[#allocation2 + $0x190] sm:$0xff]
          %v2832 = vld [vmem:[#allocation2 + $0x198] sm:$0xff]
          %v2833 = vld [vmem:[#allocation2 + $0x1a0] sm:$0xff]
          %v2834 = vld [vmem:[#allocation2 + $0x1a8] sm:$0xff]
          %v2835 = vld [vmem:[#allocation2 + $0x1b0] sm:$0xff]
          %v2836 = vld [vmem:[#allocation2 + $0x1b8] sm:$0xff]
          %v2837 = vld [vmem:[#allocation2 + $0x1c0] sm:$0xff]
          %v2838 = vld [vmem:[#allocation2 + $0x1c8] sm:$0xff]
          %v2839 = vld [vmem:[#allocation2 + $0x1d0] sm:$0xff]
          %v2840 = vld [vmem:[#allocation2 + $0x1d8] sm:$0xff]
          %v2841 = vld [vmem:[#allocation2 + $0x1e0] sm:$0xff]
          %v2842 = vld [vmem:[#allocation2 + $0x1e8] sm:$0xff]
          %v2843 = vld [vmem:[#allocation2 + $0x1f0] sm:$0xff]
          %v2844 = vld [vmem:[#allocation2 + $0x1f8] sm:$0xff]
          %vm2845 = vcmp.gt.f32.partialorder %v2781, 0.0
          %vm2846 = vcmp.gt.f32.partialorder %v2782, 0.0
          %vm2847 = vcmp.gt.f32.partialorder %v2783, 0.0
          %vm2848 = vcmp.gt.f32.partialorder %v2784, 0.0
          %vm2849 = vcmp.gt.f32.partialorder %v2785, 0.0
          %vm2850 = vcmp.gt.f32.partialorder %v2786, 0.0
          %vm2851 = vcmp.gt.f32.partialorder %v2787, 0.0
          %vm2852 = vcmp.gt.f32.partialorder %v2788, 0.0
          %vm2853 = vcmp.gt.f32.partialorder %v2789, 0.0
          %vm2854 = vcmp.gt.f32.partialorder %v2790, 0.0
          %vm2855 = vcmp.gt.f32.partialorder %v2791, 0.0
          %vm2856 = vcmp.gt.f32.partialorder %v2792, 0.0
          %vm2857 = vcmp.gt.f32.partialorder %v2793, 0.0
          %vm2858 = vcmp.gt.f32.partialorder %v2794, 0.0
          %vm2859 = vcmp.gt.f32.partialorder %v2795, 0.0
          %vm2860 = vcmp.gt.f32.partialorder %v2796, 0.0
          %vm2861 = vcmp.gt.f32.partialorder %v2797, 0.0
          %vm2862 = vcmp.gt.f32.partialorder %v2798, 0.0
          %vm2863 = vcmp.gt.f32.partialorder %v2799, 0.0
          %vm2864 = vcmp.gt.f32.partialorder %v2800, 0.0
          %vm2865 = vcmp.gt.f32.partialorder %v2801, 0.0
          %vm2866 = vcmp.gt.f32.partialorder %v2802, 0.0
          %vm2867 = vcmp.gt.f32.partialorder %v2803, 0.0
          %vm2868 = vcmp.gt.f32.partialorder %v2804, 0.0
          %vm2869 = vcmp.gt.f32.partialorder %v2805, 0.0
          %vm2870 = vcmp.gt.f32.partialorder %v2806, 0.0
          %vm2871 = vcmp.gt.f32.partialorder %v2807, 0.0
          %vm2872 = vcmp.gt.f32.partialorder %v2808, 0.0
          %vm2873 = vcmp.gt.f32.partialorder %v2809, 0.0
          %vm2874 = vcmp.gt.f32.partialorder %v2810, 0.0
          %vm2875 = vcmp.gt.f32.partialorder %v2811, 0.0
          %vm2876 = vcmp.gt.f32.partialorder %v2812, 0.0
          %vm2877 = vcmp.gt.f32.partialorder %v2813, 0.0
          %vm2878 = vcmp.gt.f32.partialorder %v2814, 0.0
          %vm2879 = vcmp.gt.f32.partialorder %v2815, 0.0
          %vm2880 = vcmp.gt.f32.partialorder %v2816, 0.0
          %vm2881 = vcmp.gt.f32.partialorder %v2817, 0.0
          %vm2882 = vcmp.gt.f32.partialorder %v2818, 0.0
          %vm2883 = vcmp.gt.f32.partialorder %v2819, 0.0
          %vm2884 = vcmp.gt.f32.partialorder %v2820, 0.0
          %vm2885 = vcmp.gt.f32.partialorder %v2821, 0.0
          %vm2886 = vcmp.gt.f32.partialorder %v2822, 0.0
          %vm2887 = vcmp.gt.f32.partialorder %v2823, 0.0
          %vm2888 = vcmp.gt.f32.partialorder %v2824, 0.0
          %vm2889 = vcmp.gt.f32.partialorder %v2825, 0.0
          %vm2890 = vcmp.gt.f32.partialorder %v2826, 0.0
          %vm2891 = vcmp.gt.f32.partialorder %v2827, 0.0
          %vm2892 = vcmp.gt.f32.partialorder %v2828, 0.0
          %vm2893 = vcmp.gt.f32.partialorder %v2829, 0.0
          %vm2894 = vcmp.gt.f32.partialorder %v2830, 0.0
          %vm2895 = vcmp.gt.f32.partialorder %v2831, 0.0
          %vm2896 = vcmp.gt.f32.partialorder %v2832, 0.0
          %vm2897 = vcmp.gt.f32.partialorder %v2833, 0.0
          %vm2898 = vcmp.gt.f32.partialorder %v2834, 0.0
          %vm2899 = vcmp.gt.f32.partialorder %v2835, 0.0
          %vm2900 = vcmp.gt.f32.partialorder %v2836, 0.0
          %vm2901 = vcmp.gt.f32.partialorder %v2837, 0.0
          %vm2902 = vcmp.gt.f32.partialorder %v2838, 0.0
          %vm2903 = vcmp.gt.f32.partialorder %v2839, 0.0
          %vm2904 = vcmp.gt.f32.partialorder %v2840, 0.0
          %vm2905 = vcmp.gt.f32.partialorder %v2841, 0.0
          %vm2906 = vcmp.gt.f32.partialorder %v2842, 0.0
          %vm2907 = vcmp.gt.f32.partialorder %v2843, 0.0
          %vm2908 = vcmp.gt.f32.partialorder %v2844, 0.0
          %v2909 = vsel %vm2845, %v2781, 1.0
          %v2910 = vsel %vm2846, %v2782, 1.0
          %v2911 = vsel %vm2847, %v2783, 1.0
          %v2912 = vsel %vm2848, %v2784, 1.0
          %v2913 = vsel %vm2849, %v2785, 1.0
          %v2914 = vsel %vm2850, %v2786, 1.0
          %v2915 = vsel %vm2851, %v2787, 1.0
          %v2916 = vsel %vm2852, %v2788, 1.0
          %v2917 = vsel %vm2853, %v2789, 1.0
          %v2918 = vsel %vm2854, %v2790, 1.0
          %v2919 = vsel %vm2855, %v2791, 1.0
          %v2920 = vsel %vm2856, %v2792, 1.0
          %v2921 = vsel %vm2857, %v2793, 1.0
          %v2922 = vsel %vm2858, %v2794, 1.0
          %v2923 = vsel %vm2859, %v2795, 1.0
          %v2924 = vsel %vm2860, %v2796, 1.0
          %v2925 = vsel %vm2861, %v2797, 1.0
          %v2926 = vsel %vm2862, %v2798, 1.0
          %v2927 = vsel %vm2863, %v2799, 1.0
          %v2928 = vsel %vm2864, %v2800, 1.0
          %v2929 = vsel %vm2865, %v2801, 1.0
          %v2930 = vsel %vm2866, %v2802, 1.0
          %v2931 = vsel %vm2867, %v2803, 1.0
          %v2932 = vsel %vm2868, %v2804, 1.0
          %v2933 = vsel %vm2869, %v2805, 1.0
          %v2934 = vsel %vm2870, %v2806, 1.0
          %v2935 = vsel %vm2871, %v2807, 1.0
          %v2936 = vsel %vm2872, %v2808, 1.0
          %v2937 = vsel %vm2873, %v2809, 1.0
          %v2938 = vsel %vm2874, %v2810, 1.0
          %v2939 = vsel %vm2875, %v2811, 1.0
          %v2940 = vsel %vm2876, %v2812, 1.0
          %v2941 = vsel %vm2877, %v2813, 1.0
          %v2942 = vsel %vm2878, %v2814, 1.0
          %v2943 = vsel %vm2879, %v2815, 1.0
          %v2944 = vsel %vm2880, %v2816, 1.0
          %v2945 = vsel %vm2881, %v2817, 1.0
          %v2946 = vsel %vm2882, %v2818, 1.0
          %v2947 = vsel %vm2883, %v2819, 1.0
          %v2948 = vsel %vm2884, %v2820, 1.0
          %v2949 = vsel %vm2885, %v2821, 1.0
          %v2950 = vsel %vm2886, %v2822, 1.0
          %v2951 = vsel %vm2887, %v2823, 1.0
          %v2952 = vsel %vm2888, %v2824, 1.0
          %v2953 = vsel %vm2889, %v2825, 1.0
          %v2954 = vsel %vm2890, %v2826, 1.0
          %v2955 = vsel %vm2891, %v2827, 1.0
          %v2956 = vsel %vm2892, %v2828, 1.0
          %v2957 = vsel %vm2893, %v2829, 1.0
          %v2958 = vsel %vm2894, %v2830, 1.0
          %v2959 = vsel %vm2895, %v2831, 1.0
          %v2960 = vsel %vm2896, %v2832, 1.0
          %v2961 = vsel %vm2897, %v2833, 1.0
          %v2962 = vsel %vm2898, %v2834, 1.0
          %v2963 = vsel %vm2899, %v2835, 1.0
          %v2964 = vsel %vm2900, %v2836, 1.0
          %v2965 = vsel %vm2901, %v2837, 1.0
          %v2966 = vsel %vm2902, %v2838, 1.0
          %v2967 = vsel %vm2903, %v2839, 1.0
          %v2968 = vsel %vm2904, %v2840, 1.0
          %v2969 = vsel %vm2905, %v2841, 1.0
          %v2970 = vsel %vm2906, %v2842, 1.0
          %v2971 = vsel %vm2907, %v2843, 1.0
          %v2972 = vsel %vm2908, %v2844, 1.0
          %2974 = vset.pattern.permute.xlu0 8
          %2975 = vperm.xlu0 %2974, %v2909
          %v2976 = vpop.permute.xlu0 %2975
          %2979 = vset.pattern.permute.xlu0 8
          %2980 = vperm.xlu0 %2979, %v2910
          %v2981 = vpop.permute.xlu0 %2980
          %2984 = vset.pattern.permute.xlu0 8
          %2985 = vperm.xlu0 %2984, %v2911
          %v2986 = vpop.permute.xlu0 %2985
          %2989 = vset.pattern.permute.xlu0 8
          %2990 = vperm.xlu0 %2989, %v2912
          %v2991 = vpop.permute.xlu0 %2990
          %2994 = vset.pattern.permute.xlu0 8
          %2995 = vperm.xlu0 %2994, %v2913
          %v2996 = vpop.permute.xlu0 %2995
          %2999 = vset.pattern.permute.xlu0 8
          %3000 = vperm.xlu0 %2999, %v2914
          %v3001 = vpop.permute.xlu0 %3000
          %3004 = vset.pattern.permute.xlu0 8
          %3005 = vperm.xlu0 %3004, %v2915
          %v3006 = vpop.permute.xlu0 %3005
          %3009 = vset.pattern.permute.xlu0 8
          %3010 = vperm.xlu0 %3009, %v2916
          %v3011 = vpop.permute.xlu0 %3010
          %3014 = vset.pattern.permute.xlu0 8
          %3015 = vperm.xlu0 %3014, %v2917
          %v3016 = vpop.permute.xlu0 %3015
          %3019 = vset.pattern.permute.xlu0 8
          %3020 = vperm.xlu0 %3019, %v2918
          %v3021 = vpop.permute.xlu0 %3020
          %3024 = vset.pattern.permute.xlu0 8
          %3025 = vperm.xlu0 %3024, %v2919
          %v3026 = vpop.permute.xlu0 %3025
          %3029 = vset.pattern.permute.xlu0 8
          %3030 = vperm.xlu0 %3029, %v2920
          %v3031 = vpop.permute.xlu0 %3030
          %3034 = vset.pattern.permute.xlu0 8
          %3035 = vperm.xlu0 %3034, %v2921
          %v3036 = vpop.permute.xlu0 %3035
          %3039 = vset.pattern.permute.xlu0 8
          %3040 = vperm.xlu0 %3039, %v2922
          %v3041 = vpop.permute.xlu0 %3040
          %3044 = vset.pattern.permute.xlu0 8
          %3045 = vperm.xlu0 %3044, %v2923
          %v3046 = vpop.permute.xlu0 %3045
          %3049 = vset.pattern.permute.xlu0 8
          %3050 = vperm.xlu0 %3049, %v2924
          %v3051 = vpop.permute.xlu0 %3050
          %3054 = vset.pattern.permute.xlu0 8
          %3055 = vperm.xlu0 %3054, %v2925
          %v3056 = vpop.permute.xlu0 %3055
          %3059 = vset.pattern.permute.xlu0 8
          %3060 = vperm.xlu0 %3059, %v2926
          %v3061 = vpop.permute.xlu0 %3060
          %3064 = vset.pattern.permute.xlu0 8
          %3065 = vperm.xlu0 %3064, %v2927
          %v3066 = vpop.permute.xlu0 %3065
          %3069 = vset.pattern.permute.xlu0 8
          %3070 = vperm.xlu0 %3069, %v2928
          %v3071 = vpop.permute.xlu0 %3070
          %3074 = vset.pattern.permute.xlu0 8
          %3075 = vperm.xlu0 %3074, %v2929
          %v3076 = vpop.permute.xlu0 %3075
          %3079 = vset.pattern.permute.xlu0 8
          %3080 = vperm.xlu0 %3079, %v2930
          %v3081 = vpop.permute.xlu0 %3080
          %3084 = vset.pattern.permute.xlu0 8
          %3085 = vperm.xlu0 %3084, %v2931
          %v3086 = vpop.permute.xlu0 %3085
          %3089 = vset.pattern.permute.xlu0 8
          %3090 = vperm.xlu0 %3089, %v2932
          %v3091 = vpop.permute.xlu0 %3090
          %3094 = vset.pattern.permute.xlu0 8
          %3095 = vperm.xlu0 %3094, %v2933
          %v3096 = vpop.permute.xlu0 %3095
          %3099 = vset.pattern.permute.xlu0 8
          %3100 = vperm.xlu0 %3099, %v2934
          %v3101 = vpop.permute.xlu0 %3100
          %3104 = vset.pattern.permute.xlu0 8
          %3105 = vperm.xlu0 %3104, %v2935
          %v3106 = vpop.permute.xlu0 %3105
          %3109 = vset.pattern.permute.xlu0 8
          %3110 = vperm.xlu0 %3109, %v2936
          %v3111 = vpop.permute.xlu0 %3110
          %3114 = vset.pattern.permute.xlu0 8
          %3115 = vperm.xlu0 %3114, %v2937
          %v3116 = vpop.permute.xlu0 %3115
          %3119 = vset.pattern.permute.xlu0 8
          %3120 = vperm.xlu0 %3119, %v2938
          %v3121 = vpop.permute.xlu0 %3120
          %3124 = vset.pattern.permute.xlu0 8
          %3125 = vperm.xlu0 %3124, %v2939
          %v3126 = vpop.permute.xlu0 %3125
          %3129 = vset.pattern.permute.xlu0 8
          %3130 = vperm.xlu0 %3129, %v2940
          %v3131 = vpop.permute.xlu0 %3130
          %3134 = vset.pattern.permute.xlu0 8
          %3135 = vperm.xlu0 %3134, %v2941
          %v3136 = vpop.permute.xlu0 %3135
          %3139 = vset.pattern.permute.xlu0 8
          %3140 = vperm.xlu0 %3139, %v2942
          %v3141 = vpop.permute.xlu0 %3140
          %3144 = vset.pattern.permute.xlu0 8
          %3145 = vperm.xlu0 %3144, %v2943
          %v3146 = vpop.permute.xlu0 %3145
          %3149 = vset.pattern.permute.xlu0 8
          %3150 = vperm.xlu0 %3149, %v2944
          %v3151 = vpop.permute.xlu0 %3150
          %3154 = vset.pattern.permute.xlu0 8
          %3155 = vperm.xlu0 %3154, %v2945
          %v3156 = vpop.permute.xlu0 %3155
          %3159 = vset.pattern.permute.xlu0 8
          %3160 = vperm.xlu0 %3159, %v2946
          %v3161 = vpop.permute.xlu0 %3160
          %3164 = vset.pattern.permute.xlu0 8
          %3165 = vperm.xlu0 %3164, %v2947
          %v3166 = vpop.permute.xlu0 %3165
          %3169 = vset.pattern.permute.xlu0 8
          %3170 = vperm.xlu0 %3169, %v2948
          %v3171 = vpop.permute.xlu0 %3170
          %3174 = vset.pattern.permute.xlu0 8
          %3175 = vperm.xlu0 %3174, %v2949
          %v3176 = vpop.permute.xlu0 %3175
          %3179 = vset.pattern.permute.xlu0 8
          %3180 = vperm.xlu0 %3179, %v2950
          %v3181 = vpop.permute.xlu0 %3180
          %3184 = vset.pattern.permute.xlu0 8
          %3185 = vperm.xlu0 %3184, %v2951
          %v3186 = vpop.permute.xlu0 %3185
          %3189 = vset.pattern.permute.xlu0 8
          %3190 = vperm.xlu0 %3189, %v2952
          %v3191 = vpop.permute.xlu0 %3190
          %3194 = vset.pattern.permute.xlu0 8
          %3195 = vperm.xlu0 %3194, %v2953
          %v3196 = vpop.permute.xlu0 %3195
          %3199 = vset.pattern.permute.xlu0 8
          %3200 = vperm.xlu0 %3199, %v2954
          %v3201 = vpop.permute.xlu0 %3200
          %3204 = vset.pattern.permute.xlu0 8
          %3205 = vperm.xlu0 %3204, %v2955
          %v3206 = vpop.permute.xlu0 %3205
          %3209 = vset.pattern.permute.xlu0 8
          %3210 = vperm.xlu0 %3209, %v2956
          %v3211 = vpop.permute.xlu0 %3210
          %3214 = vset.pattern.permute.xlu0 8
          %3215 = vperm.xlu0 %3214, %v2957
          %v3216 = vpop.permute.xlu0 %3215
          %3219 = vset.pattern.permute.xlu0 8
          %3220 = vperm.xlu0 %3219, %v2958
          %v3221 = vpop.permute.xlu0 %3220
          %3224 = vset.pattern.permute.xlu0 8
          %3225 = vperm.xlu0 %3224, %v2959
          %v3226 = vpop.permute.xlu0 %3225
          %3229 = vset.pattern.permute.xlu0 8
          %3230 = vperm.xlu0 %3229, %v2960
          %v3231 = vpop.permute.xlu0 %3230
          %3234 = vset.pattern.permute.xlu0 8
          %3235 = vperm.xlu0 %3234, %v2961
          %v3236 = vpop.permute.xlu0 %3235
          %3239 = vset.pattern.permute.xlu0 8
          %3240 = vperm.xlu0 %3239, %v2962
          %v3241 = vpop.permute.xlu0 %3240
          %3244 = vset.pattern.permute.xlu0 8
          %3245 = vperm.xlu0 %3244, %v2963
          %v3246 = vpop.permute.xlu0 %3245
          %3249 = vset.pattern.permute.xlu0 8
          %3250 = vperm.xlu0 %3249, %v2964
          %v3251 = vpop.permute.xlu0 %3250
          %3254 = vset.pattern.permute.xlu0 8
          %3255 = vperm.xlu0 %3254, %v2965
          %v3256 = vpop.permute.xlu0 %3255
          %3259 = vset.pattern.permute.xlu0 8
          %3260 = vperm.xlu0 %3259, %v2966
          %v3261 = vpop.permute.xlu0 %3260
          %3264 = vset.pattern.permute.xlu0 8
          %3265 = vperm.xlu0 %3264, %v2967
          %v3266 = vpop.permute.xlu0 %3265
          %3269 = vset.pattern.permute.xlu0 8
          %3270 = vperm.xlu0 %3269, %v2968
          %v3271 = vpop.permute.xlu0 %3270
          %3274 = vset.pattern.permute.xlu0 8
          %3275 = vperm.xlu0 %3274, %v2969
          %v3276 = vpop.permute.xlu0 %3275
          %3279 = vset.pattern.permute.xlu0 8
          %3280 = vperm.xlu0 %3279, %v2970
          %v3281 = vpop.permute.xlu0 %3280
          %3284 = vset.pattern.permute.xlu0 8
          %3285 = vperm.xlu0 %3284, %v2971
          %v3286 = vpop.permute.xlu0 %3285
          %3289 = vset.pattern.permute.xlu0 8
          %3290 = vperm.xlu0 %3289, %v2972
          %v3291 = vpop.permute.xlu0 %3290
          %v3293 = vrcp.pop %v2976
          %v3294 = vmul.f32 %v2781, %v3293
          %v3295 = vrcp.pop %v2981
          %v3296 = vmul.f32 %v2782, %v3295
          %v3297 = vrcp.pop %v2986
          %v3298 = vmul.f32 %v2783, %v3297
          %v3299 = vrcp.pop %v2991
          %v3300 = vmul.f32 %v2784, %v3299
          %v3301 = vrcp.pop %v2996
          %v3302 = vmul.f32 %v2785, %v3301
          %v3303 = vrcp.pop %v3001
          %v3304 = vmul.f32 %v2786, %v3303
          %v3305 = vrcp.pop %v3006
          %v3306 = vmul.f32 %v2787, %v3305
          %v3307 = vrcp.pop %v3011
          %v3308 = vmul.f32 %v2788, %v3307
          %v3309 = vrcp.pop %v3016
          %v3310 = vmul.f32 %v2789, %v3309
          %v3311 = vrcp.pop %v3021
          %v3312 = vmul.f32 %v2790, %v3311
          %v3313 = vrcp.pop %v3026
          %v3314 = vmul.f32 %v2791, %v3313
          %v3315 = vrcp.pop %v3031
          %v3316 = vmul.f32 %v2792, %v3315
          %v3317 = vrcp.pop %v3036
          %v3318 = vmul.f32 %v2793, %v3317
          %v3319 = vrcp.pop %v3041
          %v3320 = vmul.f32 %v2794, %v3319
          %v3321 = vrcp.pop %v3046
          %v3322 = vmul.f32 %v2795, %v3321
          %v3323 = vrcp.pop %v3051
          %v3324 = vmul.f32 %v2796, %v3323
          %v3325 = vrcp.pop %v3056
          %v3326 = vmul.f32 %v2797, %v3325
          %v3327 = vrcp.pop %v3061
          %v3328 = vmul.f32 %v2798, %v3327
          %v3329 = vrcp.pop %v3066
          %v3330 = vmul.f32 %v2799, %v3329
          %v3331 = vrcp.pop %v3071
          %v3332 = vmul.f32 %v2800, %v3331
          %v3333 = vrcp.pop %v3076
          %v3334 = vmul.f32 %v2801, %v3333
          %v3335 = vrcp.pop %v3081
          %v3336 = vmul.f32 %v2802, %v3335
          %v3337 = vrcp.pop %v3086
          %v3338 = vmul.f32 %v2803, %v3337
          %v3339 = vrcp.pop %v3091
          %v3340 = vmul.f32 %v2804, %v3339
          %v3341 = vrcp.pop %v3096
          %v3342 = vmul.f32 %v2805, %v3341
          %v3343 = vrcp.pop %v3101
          %v3344 = vmul.f32 %v2806, %v3343
          %v3345 = vrcp.pop %v3106
          %v3346 = vmul.f32 %v2807, %v3345
          %v3347 = vrcp.pop %v3111
          %v3348 = vmul.f32 %v2808, %v3347
          %v3349 = vrcp.pop %v3116
          %v3350 = vmul.f32 %v2809, %v3349
          %v3351 = vrcp.pop %v3121
          %v3352 = vmul.f32 %v2810, %v3351
          %v3353 = vrcp.pop %v3126
          %v3354 = vmul.f32 %v2811, %v3353
          %v3355 = vrcp.pop %v3131
          %v3356 = vmul.f32 %v2812, %v3355
          %v3357 = vrcp.pop %v3136
          %v3358 = vmul.f32 %v2813, %v3357
          %v3359 = vrcp.pop %v3141
          %v3360 = vmul.f32 %v2814, %v3359
          %v3361 = vrcp.pop %v3146
          %v3362 = vmul.f32 %v2815, %v3361
          %v3363 = vrcp.pop %v3151
          %v3364 = vmul.f32 %v2816, %v3363
          %v3365 = vrcp.pop %v3156
          %v3366 = vmul.f32 %v2817, %v3365
          %v3367 = vrcp.pop %v3161
          %v3368 = vmul.f32 %v2818, %v3367
          %v3369 = vrcp.pop %v3166
          %v3370 = vmul.f32 %v2819, %v3369
          %v3371 = vrcp.pop %v3171
          %v3372 = vmul.f32 %v2820, %v3371
          %v3373 = vrcp.pop %v3176
          %v3374 = vmul.f32 %v2821, %v3373
          %v3375 = vrcp.pop %v3181
          %v3376 = vmul.f32 %v2822, %v3375
          %v3377 = vrcp.pop %v3186
          %v3378 = vmul.f32 %v2823, %v3377
          %v3379 = vrcp.pop %v3191
          %v3380 = vmul.f32 %v2824, %v3379
          %v3381 = vrcp.pop %v3196
          %v3382 = vmul.f32 %v2825, %v3381
          %v3383 = vrcp.pop %v3201
          %v3384 = vmul.f32 %v2826, %v3383
          %v3385 = vrcp.pop %v3206
          %v3386 = vmul.f32 %v2827, %v3385
          %v3387 = vrcp.pop %v3211
          %v3388 = vmul.f32 %v2828, %v3387
          %v3389 = vrcp.pop %v3216
          %v3390 = vmul.f32 %v2829, %v3389
          %v3391 = vrcp.pop %v3221
          %v3392 = vmul.f32 %v2830, %v3391
          %v3393 = vrcp.pop %v3226
          %v3394 = vmul.f32 %v2831, %v3393
          %v3395 = vrcp.pop %v3231
          %v3396 = vmul.f32 %v2832, %v3395
          %v3397 = vrcp.pop %v3236
          %v3398 = vmul.f32 %v2833, %v3397
          %v3399 = vrcp.pop %v3241
          %v3400 = vmul.f32 %v2834, %v3399
          %v3401 = vrcp.pop %v3246
          %v3402 = vmul.f32 %v2835, %v3401
          %v3403 = vrcp.pop %v3251
          %v3404 = vmul.f32 %v2836, %v3403
          %v3405 = vrcp.pop %v3256
          %v3406 = vmul.f32 %v2837, %v3405
          %v3407 = vrcp.pop %v3261
          %v3408 = vmul.f32 %v2838, %v3407
          %v3409 = vrcp.pop %v3266
          %v3410 = vmul.f32 %v2839, %v3409
          %v3411 = vrcp.pop %v3271
          %v3412 = vmul.f32 %v2840, %v3411
          %v3413 = vrcp.pop %v3276
          %v3414 = vmul.f32 %v2841, %v3413
          %v3415 = vrcp.pop %v3281
          %v3416 = vmul.f32 %v2842, %v3415
          %v3417 = vrcp.pop %v3286
          %v3418 = vmul.f32 %v2843, %v3417
          %v3419 = vrcp.pop %v3291
          %v3420 = vmul.f32 %v2844, %v3419
          %v3421 = vld [vmem:[%s307] sm:$0xff]
          %v3422 = vld [vmem:[%s307 + $0x8] sm:$0xff]
          %v3423 = vld [vmem:[%s307 + $0x10] sm:$0xff]
          %v3424 = vld [vmem:[%s307 + $0x18] sm:$0xff]
          %v3425 = vld [vmem:[%s307 + $0x20] sm:$0xff]
          %v3426 = vld [vmem:[%s307 + $0x28] sm:$0xff]
          %v3427 = vld [vmem:[%s307 + $0x30] sm:$0xff]
          %v3428 = vld [vmem:[%s307 + $0x38] sm:$0xff]
          %v3429 = vld [vmem:[%s307 + $0x40] sm:$0xff]
          %v3430 = vld [vmem:[%s307 + $0x48] sm:$0xff]
          %v3431 = vld [vmem:[%s307 + $0x50] sm:$0xff]
          %v3432 = vld [vmem:[%s307 + $0x58] sm:$0xff]
          %v3433 = vld [vmem:[%s307 + $0x60] sm:$0xff]
          %v3434 = vld [vmem:[%s307 + $0x68] sm:$0xff]
          %v3435 = vld [vmem:[%s307 + $0x70] sm:$0xff]
          %v3436 = vld [vmem:[%s307 + $0x78] sm:$0xff]
          %v3437 = vld [vmem:[%s307 + $0x80] sm:$0xff]
          %v3438 = vld [vmem:[%s307 + $0x88] sm:$0xff]
          %v3439 = vld [vmem:[%s307 + $0x90] sm:$0xff]
          %v3440 = vld [vmem:[%s307 + $0x98] sm:$0xff]
          %v3441 = vld [vmem:[%s307 + $0xa0] sm:$0xff]
          %v3442 = vld [vmem:[%s307 + $0xa8] sm:$0xff]
          %v3443 = vld [vmem:[%s307 + $0xb0] sm:$0xff]
          %v3444 = vld [vmem:[%s307 + $0xb8] sm:$0xff]
          %v3445 = vld [vmem:[%s307 + $0xc0] sm:$0xff]
          %v3446 = vld [vmem:[%s307 + $0xc8] sm:$0xff]
          %v3447 = vld [vmem:[%s307 + $0xd0] sm:$0xff]
          %v3448 = vld [vmem:[%s307 + $0xd8] sm:$0xff]
          %v3449 = vld [vmem:[%s307 + $0xe0] sm:$0xff]
          %v3450 = vld [vmem:[%s307 + $0xe8] sm:$0xff]
          %v3451 = vld [vmem:[%s307 + $0xf0] sm:$0xff]
          %v3452 = vld [vmem:[%s307 + $0xf8] sm:$0xff]
          %v3453 = vld [vmem:[%s307 + $0x100] sm:$0xff]
          %v3454 = vld [vmem:[%s307 + $0x108] sm:$0xff]
          %v3455 = vld [vmem:[%s307 + $0x110] sm:$0xff]
          %v3456 = vld [vmem:[%s307 + $0x118] sm:$0xff]
          %v3457 = vld [vmem:[%s307 + $0x120] sm:$0xff]
          %v3458 = vld [vmem:[%s307 + $0x128] sm:$0xff]
          %v3459 = vld [vmem:[%s307 + $0x130] sm:$0xff]
          %v3460 = vld [vmem:[%s307 + $0x138] sm:$0xff]
          %v3461 = vld [vmem:[%s307 + $0x140] sm:$0xff]
          %v3462 = vld [vmem:[%s307 + $0x148] sm:$0xff]
          %v3463 = vld [vmem:[%s307 + $0x150] sm:$0xff]
          %v3464 = vld [vmem:[%s307 + $0x158] sm:$0xff]
          %v3465 = vld [vmem:[%s307 + $0x160] sm:$0xff]
          %v3466 = vld [vmem:[%s307 + $0x168] sm:$0xff]
          %v3467 = vld [vmem:[%s307 + $0x170] sm:$0xff]
          %v3468 = vld [vmem:[%s307 + $0x178] sm:$0xff]
          %v3469 = vld [vmem:[%s307 + $0x180] sm:$0xff]
          %v3470 = vld [vmem:[%s307 + $0x188] sm:$0xff]
          %v3471 = vld [vmem:[%s307 + $0x190] sm:$0xff]
          %v3472 = vld [vmem:[%s307 + $0x198] sm:$0xff]
          %v3473 = vld [vmem:[%s307 + $0x1a0] sm:$0xff]
          %v3474 = vld [vmem:[%s307 + $0x1a8] sm:$0xff]
          %v3475 = vld [vmem:[%s307 + $0x1b0] sm:$0xff]
          %v3476 = vld [vmem:[%s307 + $0x1b8] sm:$0xff]
          %v3477 = vld [vmem:[%s307 + $0x1c0] sm:$0xff]
          %v3478 = vld [vmem:[%s307 + $0x1c8] sm:$0xff]
          %v3479 = vld [vmem:[%s307 + $0x1d0] sm:$0xff]
          %v3480 = vld [vmem:[%s307 + $0x1d8] sm:$0xff]
          %v3481 = vld [vmem:[%s307 + $0x1e0] sm:$0xff]
          %v3482 = vld [vmem:[%s307 + $0x1e8] sm:$0xff]
          %v3483 = vld [vmem:[%s307 + $0x1f0] sm:$0xff]
          %v3484 = vld [vmem:[%s307 + $0x1f8] sm:$0xff]
          %v3485 = vld [vmem:[%s313] sm:$0xff]
          %v3486 = vld [vmem:[%s313 + $0x8] sm:$0xff]
          %v3487 = vld [vmem:[%s313 + $0x10] sm:$0xff]
          %v3488 = vld [vmem:[%s313 + $0x18] sm:$0xff]
          %v3489 = vld [vmem:[%s313 + $0x20] sm:$0xff]
          %v3490 = vld [vmem:[%s313 + $0x28] sm:$0xff]
          %v3491 = vld [vmem:[%s313 + $0x30] sm:$0xff]
          %v3492 = vld [vmem:[%s313 + $0x38] sm:$0xff]
          %v3493 = vld [vmem:[%s313 + $0x40] sm:$0xff]
          %v3494 = vld [vmem:[%s313 + $0x48] sm:$0xff]
          %v3495 = vld [vmem:[%s313 + $0x50] sm:$0xff]
          %v3496 = vld [vmem:[%s313 + $0x58] sm:$0xff]
          %v3497 = vld [vmem:[%s313 + $0x60] sm:$0xff]
          %v3498 = vld [vmem:[%s313 + $0x68] sm:$0xff]
          %v3499 = vld [vmem:[%s313 + $0x70] sm:$0xff]
          %v3500 = vld [vmem:[%s313 + $0x78] sm:$0xff]
          %v3501 = vld [vmem:[%s313 + $0x80] sm:$0xff]
          %v3502 = vld [vmem:[%s313 + $0x88] sm:$0xff]
          %v3503 = vld [vmem:[%s313 + $0x90] sm:$0xff]
          %v3504 = vld [vmem:[%s313 + $0x98] sm:$0xff]
          %v3505 = vld [vmem:[%s313 + $0xa0] sm:$0xff]
          %v3506 = vld [vmem:[%s313 + $0xa8] sm:$0xff]
          %v3507 = vld [vmem:[%s313 + $0xb0] sm:$0xff]
          %v3508 = vld [vmem:[%s313 + $0xb8] sm:$0xff]
          %v3509 = vld [vmem:[%s313 + $0xc0] sm:$0xff]
          %v3510 = vld [vmem:[%s313 + $0xc8] sm:$0xff]
          %v3511 = vld [vmem:[%s313 + $0xd0] sm:$0xff]
          %v3512 = vld [vmem:[%s313 + $0xd8] sm:$0xff]
          %v3513 = vld [vmem:[%s313 + $0xe0] sm:$0xff]
          %v3514 = vld [vmem:[%s313 + $0xe8] sm:$0xff]
          %v3515 = vld [vmem:[%s313 + $0xf0] sm:$0xff]
          %v3516 = vld [vmem:[%s313 + $0xf8] sm:$0xff]
          %v3517 = vld [vmem:[%s313 + $0x100] sm:$0xff]
          %v3518 = vld [vmem:[%s313 + $0x108] sm:$0xff]
          %v3519 = vld [vmem:[%s313 + $0x110] sm:$0xff]
          %v3520 = vld [vmem:[%s313 + $0x118] sm:$0xff]
          %v3521 = vld [vmem:[%s313 + $0x120] sm:$0xff]
          %v3522 = vld [vmem:[%s313 + $0x128] sm:$0xff]
          %v3523 = vld [vmem:[%s313 + $0x130] sm:$0xff]
          %v3524 = vld [vmem:[%s313 + $0x138] sm:$0xff]
          %v3525 = vld [vmem:[%s313 + $0x140] sm:$0xff]
          %v3526 = vld [vmem:[%s313 + $0x148] sm:$0xff]
          %v3527 = vld [vmem:[%s313 + $0x150] sm:$0xff]
          %v3528 = vld [vmem:[%s313 + $0x158] sm:$0xff]
          %v3529 = vld [vmem:[%s313 + $0x160] sm:$0xff]
          %v3530 = vld [vmem:[%s313 + $0x168] sm:$0xff]
          %v3531 = vld [vmem:[%s313 + $0x170] sm:$0xff]
          %v3532 = vld [vmem:[%s313 + $0x178] sm:$0xff]
          %v3533 = vld [vmem:[%s313 + $0x180] sm:$0xff]
          %v3534 = vld [vmem:[%s313 + $0x188] sm:$0xff]
          %v3535 = vld [vmem:[%s313 + $0x190] sm:$0xff]
          %v3536 = vld [vmem:[%s313 + $0x198] sm:$0xff]
          %v3537 = vld [vmem:[%s313 + $0x1a0] sm:$0xff]
          %v3538 = vld [vmem:[%s313 + $0x1a8] sm:$0xff]
          %v3539 = vld [vmem:[%s313 + $0x1b0] sm:$0xff]
          %v3540 = vld [vmem:[%s313 + $0x1b8] sm:$0xff]
          %v3541 = vld [vmem:[%s313 + $0x1c0] sm:$0xff]
          %v3542 = vld [vmem:[%s313 + $0x1c8] sm:$0xff]
          %v3543 = vld [vmem:[%s313 + $0x1d0] sm:$0xff]
          %v3544 = vld [vmem:[%s313 + $0x1d8] sm:$0xff]
          %v3545 = vld [vmem:[%s313 + $0x1e0] sm:$0xff]
          %v3546 = vld [vmem:[%s313 + $0x1e8] sm:$0xff]
          %v3547 = vld [vmem:[%s313 + $0x1f0] sm:$0xff]
          %v3548 = vld [vmem:[%s313 + $0x1f8] sm:$0xff]
          %3550 = vset.pattern.permute.xlu0 0
          %3551 = vperm.xlu0 %3550, %v3485
          %v3552 = vpop.permute.xlu0 %3551
          %3555 = vset.pattern.permute.xlu0 0
          %3556 = vperm.xlu0 %3555, %v3486
          %v3557 = vpop.permute.xlu0 %3556
          %3560 = vset.pattern.permute.xlu0 0
          %3561 = vperm.xlu0 %3560, %v3487
          %v3562 = vpop.permute.xlu0 %3561
          %3565 = vset.pattern.permute.xlu0 0
          %3566 = vperm.xlu0 %3565, %v3488
          %v3567 = vpop.permute.xlu0 %3566
          %3570 = vset.pattern.permute.xlu0 0
          %3571 = vperm.xlu0 %3570, %v3489
          %v3572 = vpop.permute.xlu0 %3571
          %3575 = vset.pattern.permute.xlu0 0
          %3576 = vperm.xlu0 %3575, %v3490
          %v3577 = vpop.permute.xlu0 %3576
          %3580 = vset.pattern.permute.xlu0 0
          %3581 = vperm.xlu0 %3580, %v3491
          %v3582 = vpop.permute.xlu0 %3581
          %3585 = vset.pattern.permute.xlu0 0
          %3586 = vperm.xlu0 %3585, %v3492
          %v3587 = vpop.permute.xlu0 %3586
          %3590 = vset.pattern.permute.xlu0 0
          %3591 = vperm.xlu0 %3590, %v3493
          %v3592 = vpop.permute.xlu0 %3591
          %3595 = vset.pattern.permute.xlu0 0
          %3596 = vperm.xlu0 %3595, %v3494
          %v3597 = vpop.permute.xlu0 %3596
          %3600 = vset.pattern.permute.xlu0 0
          %3601 = vperm.xlu0 %3600, %v3495
          %v3602 = vpop.permute.xlu0 %3601
          %3605 = vset.pattern.permute.xlu0 0
          %3606 = vperm.xlu0 %3605, %v3496
          %v3607 = vpop.permute.xlu0 %3606
          %3610 = vset.pattern.permute.xlu0 0
          %3611 = vperm.xlu0 %3610, %v3497
          %v3612 = vpop.permute.xlu0 %3611
          %3615 = vset.pattern.permute.xlu0 0
          %3616 = vperm.xlu0 %3615, %v3498
          %v3617 = vpop.permute.xlu0 %3616
          %3620 = vset.pattern.permute.xlu0 0
          %3621 = vperm.xlu0 %3620, %v3499
          %v3622 = vpop.permute.xlu0 %3621
          %3625 = vset.pattern.permute.xlu0 0
          %3626 = vperm.xlu0 %3625, %v3500
          %v3627 = vpop.permute.xlu0 %3626
          %3630 = vset.pattern.permute.xlu0 0
          %3631 = vperm.xlu0 %3630, %v3501
          %v3632 = vpop.permute.xlu0 %3631
          %3635 = vset.pattern.permute.xlu0 0
          %3636 = vperm.xlu0 %3635, %v3502
          %v3637 = vpop.permute.xlu0 %3636
          %3640 = vset.pattern.permute.xlu0 0
          %3641 = vperm.xlu0 %3640, %v3503
          %v3642 = vpop.permute.xlu0 %3641
          %3645 = vset.pattern.permute.xlu0 0
          %3646 = vperm.xlu0 %3645, %v3504
          %v3647 = vpop.permute.xlu0 %3646
          %3650 = vset.pattern.permute.xlu0 0
          %3651 = vperm.xlu0 %3650, %v3505
          %v3652 = vpop.permute.xlu0 %3651
          %3655 = vset.pattern.permute.xlu0 0
          %3656 = vperm.xlu0 %3655, %v3506
          %v3657 = vpop.permute.xlu0 %3656
          %3660 = vset.pattern.permute.xlu0 0
          %3661 = vperm.xlu0 %3660, %v3507
          %v3662 = vpop.permute.xlu0 %3661
          %3665 = vset.pattern.permute.xlu0 0
          %3666 = vperm.xlu0 %3665, %v3508
          %v3667 = vpop.permute.xlu0 %3666
          %3670 = vset.pattern.permute.xlu0 0
          %3671 = vperm.xlu0 %3670, %v3509
          %v3672 = vpop.permute.xlu0 %3671
          %3675 = vset.pattern.permute.xlu0 0
          %3676 = vperm.xlu0 %3675, %v3510
          %v3677 = vpop.permute.xlu0 %3676
          %3680 = vset.pattern.permute.xlu0 0
          %3681 = vperm.xlu0 %3680, %v3511
          %v3682 = vpop.permute.xlu0 %3681
          %3685 = vset.pattern.permute.xlu0 0
          %3686 = vperm.xlu0 %3685, %v3512
          %v3687 = vpop.permute.xlu0 %3686
          %3690 = vset.pattern.permute.xlu0 0
          %3691 = vperm.xlu0 %3690, %v3513
          %v3692 = vpop.permute.xlu0 %3691
          %3695 = vset.pattern.permute.xlu0 0
          %3696 = vperm.xlu0 %3695, %v3514
          %v3697 = vpop.permute.xlu0 %3696
          %3700 = vset.pattern.permute.xlu0 0
          %3701 = vperm.xlu0 %3700, %v3515
          %v3702 = vpop.permute.xlu0 %3701
          %3705 = vset.pattern.permute.xlu0 0
          %3706 = vperm.xlu0 %3705, %v3516
          %v3707 = vpop.permute.xlu0 %3706
          %3710 = vset.pattern.permute.xlu0 0
          %3711 = vperm.xlu0 %3710, %v3517
          %v3712 = vpop.permute.xlu0 %3711
          %3715 = vset.pattern.permute.xlu0 0
          %3716 = vperm.xlu0 %3715, %v3518
          %v3717 = vpop.permute.xlu0 %3716
          %3720 = vset.pattern.permute.xlu0 0
          %3721 = vperm.xlu0 %3720, %v3519
          %v3722 = vpop.permute.xlu0 %3721
          %3725 = vset.pattern.permute.xlu0 0
          %3726 = vperm.xlu0 %3725, %v3520
          %v3727 = vpop.permute.xlu0 %3726
          %3730 = vset.pattern.permute.xlu0 0
          %3731 = vperm.xlu0 %3730, %v3521
          %v3732 = vpop.permute.xlu0 %3731
          %3735 = vset.pattern.permute.xlu0 0
          %3736 = vperm.xlu0 %3735, %v3522
          %v3737 = vpop.permute.xlu0 %3736
          %3740 = vset.pattern.permute.xlu0 0
          %3741 = vperm.xlu0 %3740, %v3523
          %v3742 = vpop.permute.xlu0 %3741
          %3745 = vset.pattern.permute.xlu0 0
          %3746 = vperm.xlu0 %3745, %v3524
          %v3747 = vpop.permute.xlu0 %3746
          %3750 = vset.pattern.permute.xlu0 0
          %3751 = vperm.xlu0 %3750, %v3525
          %v3752 = vpop.permute.xlu0 %3751
          %3755 = vset.pattern.permute.xlu0 0
          %3756 = vperm.xlu0 %3755, %v3526
          %v3757 = vpop.permute.xlu0 %3756
          %3760 = vset.pattern.permute.xlu0 0
          %3761 = vperm.xlu0 %3760, %v3527
          %v3762 = vpop.permute.xlu0 %3761
          %3765 = vset.pattern.permute.xlu0 0
          %3766 = vperm.xlu0 %3765, %v3528
          %v3767 = vpop.permute.xlu0 %3766
          %3770 = vset.pattern.permute.xlu0 0
          %3771 = vperm.xlu0 %3770, %v3529
          %v3772 = vpop.permute.xlu0 %3771
          %3775 = vset.pattern.permute.xlu0 0
          %3776 = vperm.xlu0 %3775, %v3530
          %v3777 = vpop.permute.xlu0 %3776
          %3780 = vset.pattern.permute.xlu0 0
          %3781 = vperm.xlu0 %3780, %v3531
          %v3782 = vpop.permute.xlu0 %3781
          %3785 = vset.pattern.permute.xlu0 0
          %3786 = vperm.xlu0 %3785, %v3532
          %v3787 = vpop.permute.xlu0 %3786
          %3790 = vset.pattern.permute.xlu0 0
          %3791 = vperm.xlu0 %3790, %v3533
          %v3792 = vpop.permute.xlu0 %3791
          %3795 = vset.pattern.permute.xlu0 0
          %3796 = vperm.xlu0 %3795, %v3534
          %v3797 = vpop.permute.xlu0 %3796
          %3800 = vset.pattern.permute.xlu0 0
          %3801 = vperm.xlu0 %3800, %v3535
          %v3802 = vpop.permute.xlu0 %3801
          %3805 = vset.pattern.permute.xlu0 0
          %3806 = vperm.xlu0 %3805, %v3536
          %v3807 = vpop.permute.xlu0 %3806
          %3810 = vset.pattern.permute.xlu0 0
          %3811 = vperm.xlu0 %3810, %v3537
          %v3812 = vpop.permute.xlu0 %3811
          %3815 = vset.pattern.permute.xlu0 0
          %3816 = vperm.xlu0 %3815, %v3538
          %v3817 = vpop.permute.xlu0 %3816
          %3820 = vset.pattern.permute.xlu0 0
          %3821 = vperm.xlu0 %3820, %v3539
          %v3822 = vpop.permute.xlu0 %3821
          %3825 = vset.pattern.permute.xlu0 0
          %3826 = vperm.xlu0 %3825, %v3540
          %v3827 = vpop.permute.xlu0 %3826
          %3830 = vset.pattern.permute.xlu0 0
          %3831 = vperm.xlu0 %3830, %v3541
          %v3832 = vpop.permute.xlu0 %3831
          %3835 = vset.pattern.permute.xlu0 0
          %3836 = vperm.xlu0 %3835, %v3542
          %v3837 = vpop.permute.xlu0 %3836
          %3840 = vset.pattern.permute.xlu0 0
          %3841 = vperm.xlu0 %3840, %v3543
          %v3842 = vpop.permute.xlu0 %3841
          %3845 = vset.pattern.permute.xlu0 0
          %3846 = vperm.xlu0 %3845, %v3544
          %v3847 = vpop.permute.xlu0 %3846
          %3850 = vset.pattern.permute.xlu0 0
          %3851 = vperm.xlu0 %3850, %v3545
          %v3852 = vpop.permute.xlu0 %3851
          %3855 = vset.pattern.permute.xlu0 0
          %3856 = vperm.xlu0 %3855, %v3546
          %v3857 = vpop.permute.xlu0 %3856
          %3860 = vset.pattern.permute.xlu0 0
          %3861 = vperm.xlu0 %3860, %v3547
          %v3862 = vpop.permute.xlu0 %3861
          %3865 = vset.pattern.permute.xlu0 0
          %3866 = vperm.xlu0 %3865, %v3548
          %v3867 = vpop.permute.xlu0 %3866
          %v3869 = vmul.f32 %v3421, %v3552
          %v3870 = vmul.f32 %v3422, %v3557
          %v3871 = vmul.f32 %v3423, %v3562
          %v3872 = vmul.f32 %v3424, %v3567
          %v3873 = vmul.f32 %v3425, %v3572
          %v3874 = vmul.f32 %v3426, %v3577
          %v3875 = vmul.f32 %v3427, %v3582
          %v3876 = vmul.f32 %v3428, %v3587
          %v3877 = vmul.f32 %v3429, %v3592
          %v3878 = vmul.f32 %v3430, %v3597
          %v3879 = vmul.f32 %v3431, %v3602
          %v3880 = vmul.f32 %v3432, %v3607
          %v3881 = vmul.f32 %v3433, %v3612
          %v3882 = vmul.f32 %v3434, %v3617
          %v3883 = vmul.f32 %v3435, %v3622
          %v3884 = vmul.f32 %v3436, %v3627
          %v3885 = vmul.f32 %v3437, %v3632
          %v3886 = vmul.f32 %v3438, %v3637
          %v3887 = vmul.f32 %v3439, %v3642
          %v3888 = vmul.f32 %v3440, %v3647
          %v3889 = vmul.f32 %v3441, %v3652
          %v3890 = vmul.f32 %v3442, %v3657
          %v3891 = vmul.f32 %v3443, %v3662
          %v3892 = vmul.f32 %v3444, %v3667
          %v3893 = vmul.f32 %v3445, %v3672
          %v3894 = vmul.f32 %v3446, %v3677
          %v3895 = vmul.f32 %v3447, %v3682
          %v3896 = vmul.f32 %v3448, %v3687
          %v3897 = vmul.f32 %v3449, %v3692
          %v3898 = vmul.f32 %v3450, %v3697
          %v3899 = vmul.f32 %v3451, %v3702
          %v3900 = vmul.f32 %v3452, %v3707
          %v3901 = vmul.f32 %v3453, %v3712
          %v3902 = vmul.f32 %v3454, %v3717
          %v3903 = vmul.f32 %v3455, %v3722
          %v3904 = vmul.f32 %v3456, %v3727
          %v3905 = vmul.f32 %v3457, %v3732
          %v3906 = vmul.f32 %v3458, %v3737
          %v3907 = vmul.f32 %v3459, %v3742
          %v3908 = vmul.f32 %v3460, %v3747
          %v3909 = vmul.f32 %v3461, %v3752
          %v3910 = vmul.f32 %v3462, %v3757
          %v3911 = vmul.f32 %v3463, %v3762
          %v3912 = vmul.f32 %v3464, %v3767
          %v3913 = vmul.f32 %v3465, %v3772
          %v3914 = vmul.f32 %v3466, %v3777
          %v3915 = vmul.f32 %v3467, %v3782
          %v3916 = vmul.f32 %v3468, %v3787
          %v3917 = vmul.f32 %v3469, %v3792
          %v3918 = vmul.f32 %v3470, %v3797
          %v3919 = vmul.f32 %v3471, %v3802
          %v3920 = vmul.f32 %v3472, %v3807
          %v3921 = vmul.f32 %v3473, %v3812
          %v3922 = vmul.f32 %v3474, %v3817
          %v3923 = vmul.f32 %v3475, %v3822
          %v3924 = vmul.f32 %v3476, %v3827
          %v3925 = vmul.f32 %v3477, %v3832
          %v3926 = vmul.f32 %v3478, %v3837
          %v3927 = vmul.f32 %v3479, %v3842
          %v3928 = vmul.f32 %v3480, %v3847
          %v3929 = vmul.f32 %v3481, %v3852
          %v3930 = vmul.f32 %v3482, %v3857
          %v3931 = vmul.f32 %v3483, %v3862
          %v3932 = vmul.f32 %v3484, %v3867
          %v3933 = vadd.f32 %v3869, %v3294
          %v3934 = vadd.f32 %v3870, %v3296
          %v3935 = vadd.f32 %v3871, %v3298
          %v3936 = vadd.f32 %v3872, %v3300
          %v3937 = vadd.f32 %v3873, %v3302
          %v3938 = vadd.f32 %v3874, %v3304
          %v3939 = vadd.f32 %v3875, %v3306
          %v3940 = vadd.f32 %v3876, %v3308
          %v3941 = vadd.f32 %v3877, %v3310
          %v3942 = vadd.f32 %v3878, %v3312
          %v3943 = vadd.f32 %v3879, %v3314
          %v3944 = vadd.f32 %v3880, %v3316
          %v3945 = vadd.f32 %v3881, %v3318
          %v3946 = vadd.f32 %v3882, %v3320
          %v3947 = vadd.f32 %v3883, %v3322
          %v3948 = vadd.f32 %v3884, %v3324
          %v3949 = vadd.f32 %v3885, %v3326
          %v3950 = vadd.f32 %v3886, %v3328
          %v3951 = vadd.f32 %v3887, %v3330
          %v3952 = vadd.f32 %v3888, %v3332
          %v3953 = vadd.f32 %v3889, %v3334
          %v3954 = vadd.f32 %v3890, %v3336
          %v3955 = vadd.f32 %v3891, %v3338
          %v3956 = vadd.f32 %v3892, %v3340
          %v3957 = vadd.f32 %v3893, %v3342
          %v3958 = vadd.f32 %v3894, %v3344
          %v3959 = vadd.f32 %v3895, %v3346
          %v3960 = vadd.f32 %v3896, %v3348
          %v3961 = vadd.f32 %v3897, %v3350
          %v3962 = vadd.f32 %v3898, %v3352
          %v3963 = vadd.f32 %v3899, %v3354
          %v3964 = vadd.f32 %v3900, %v3356
          %v3965 = vadd.f32 %v3901, %v3358
          %v3966 = vadd.f32 %v3902, %v3360
          %v3967 = vadd.f32 %v3903, %v3362
          %v3968 = vadd.f32 %v3904, %v3364
          %v3969 = vadd.f32 %v3905, %v3366
          %v3970 = vadd.f32 %v3906, %v3368
          %v3971 = vadd.f32 %v3907, %v3370
          %v3972 = vadd.f32 %v3908, %v3372
          %v3973 = vadd.f32 %v3909, %v3374
          %v3974 = vadd.f32 %v3910, %v3376
          %v3975 = vadd.f32 %v3911, %v3378
          %v3976 = vadd.f32 %v3912, %v3380
          %v3977 = vadd.f32 %v3913, %v3382
          %v3978 = vadd.f32 %v3914, %v3384
          %v3979 = vadd.f32 %v3915, %v3386
          %v3980 = vadd.f32 %v3916, %v3388
          %v3981 = vadd.f32 %v3917, %v3390
          %v3982 = vadd.f32 %v3918, %v3392
          %v3983 = vadd.f32 %v3919, %v3394
          %v3984 = vadd.f32 %v3920, %v3396
          %v3985 = vadd.f32 %v3921, %v3398
          %v3986 = vadd.f32 %v3922, %v3400
          %v3987 = vadd.f32 %v3923, %v3402
          %v3988 = vadd.f32 %v3924, %v3404
          %v3989 = vadd.f32 %v3925, %v3406
          %v3990 = vadd.f32 %v3926, %v3408
          %v3991 = vadd.f32 %v3927, %v3410
          %v3992 = vadd.f32 %v3928, %v3412
          %v3993 = vadd.f32 %v3929, %v3414
          %v3994 = vadd.f32 %v3930, %v3416
          %v3995 = vadd.f32 %v3931, %v3418
          %v3996 = vadd.f32 %v3932, %v3420
          %v3997 = vadd.f32 %v3485, 1.0
          %v3998 = vadd.f32 %v3486, 1.0
          %v3999 = vadd.f32 %v3487, 1.0
          %v4000 = vadd.f32 %v3488, 1.0
          %v4001 = vadd.f32 %v3489, 1.0
          %v4002 = vadd.f32 %v3490, 1.0
          %v4003 = vadd.f32 %v3491, 1.0
          %v4004 = vadd.f32 %v3492, 1.0
          %v4005 = vadd.f32 %v3493, 1.0
          %v4006 = vadd.f32 %v3494, 1.0
          %v4007 = vadd.f32 %v3495, 1.0
          %v4008 = vadd.f32 %v3496, 1.0
          %v4009 = vadd.f32 %v3497, 1.0
          %v4010 = vadd.f32 %v3498, 1.0
          %v4011 = vadd.f32 %v3499, 1.0
          %v4012 = vadd.f32 %v3500, 1.0
          %v4013 = vadd.f32 %v3501, 1.0
          %v4014 = vadd.f32 %v3502, 1.0
          %v4015 = vadd.f32 %v3503, 1.0
          %v4016 = vadd.f32 %v3504, 1.0
          %v4017 = vadd.f32 %v3505, 1.0
          %v4018 = vadd.f32 %v3506, 1.0
          %v4019 = vadd.f32 %v3507, 1.0
          %v4020 = vadd.f32 %v3508, 1.0
          %v4021 = vadd.f32 %v3509, 1.0
          %v4022 = vadd.f32 %v3510, 1.0
          %v4023 = vadd.f32 %v3511, 1.0
          %v4024 = vadd.f32 %v3512, 1.0
          %v4025 = vadd.f32 %v3513, 1.0
          %v4026 = vadd.f32 %v3514, 1.0
          %v4027 = vadd.f32 %v3515, 1.0
          %v4028 = vadd.f32 %v3516, 1.0
          %v4029 = vadd.f32 %v3517, 1.0
          %v4030 = vadd.f32 %v3518, 1.0
          %v4031 = vadd.f32 %v3519, 1.0
          %v4032 = vadd.f32 %v3520, 1.0
          %v4033 = vadd.f32 %v3521, 1.0
          %v4034 = vadd.f32 %v3522, 1.0
          %v4035 = vadd.f32 %v3523, 1.0
          %v4036 = vadd.f32 %v3524, 1.0
          %v4037 = vadd.f32 %v3525, 1.0
          %v4038 = vadd.f32 %v3526, 1.0
          %v4039 = vadd.f32 %v3527, 1.0
          %v4040 = vadd.f32 %v3528, 1.0
          %v4041 = vadd.f32 %v3529, 1.0
          %v4042 = vadd.f32 %v3530, 1.0
          %v4043 = vadd.f32 %v3531, 1.0
          %v4044 = vadd.f32 %v3532, 1.0
          %v4045 = vadd.f32 %v3533, 1.0
          %v4046 = vadd.f32 %v3534, 1.0
          %v4047 = vadd.f32 %v3535, 1.0
          %v4048 = vadd.f32 %v3536, 1.0
          %v4049 = vadd.f32 %v3537, 1.0
          %v4050 = vadd.f32 %v3538, 1.0
          %v4051 = vadd.f32 %v3539, 1.0
          %v4052 = vadd.f32 %v3540, 1.0
          %v4053 = vadd.f32 %v3541, 1.0
          %v4054 = vadd.f32 %v3542, 1.0
          %v4055 = vadd.f32 %v3543, 1.0
          %v4056 = vadd.f32 %v3544, 1.0
          %v4057 = vadd.f32 %v3545, 1.0
          %v4058 = vadd.f32 %v3546, 1.0
          %v4059 = vadd.f32 %v3547, 1.0
          %v4060 = vadd.f32 %v3548, 1.0
          %4062 = vset.pattern.permute.xlu0 0
          %4063 = vperm.xlu0 %4062, %v3997
          %v4064 = vpop.permute.xlu0 %4063
          %4067 = vset.pattern.permute.xlu0 0
          %4068 = vperm.xlu0 %4067, %v3998
          %v4069 = vpop.permute.xlu0 %4068
          %4072 = vset.pattern.permute.xlu0 0
          %4073 = vperm.xlu0 %4072, %v3999
          %v4074 = vpop.permute.xlu0 %4073
          %4077 = vset.pattern.permute.xlu0 0
          %4078 = vperm.xlu0 %4077, %v4000
          %v4079 = vpop.permute.xlu0 %4078
          %4082 = vset.pattern.permute.xlu0 0
          %4083 = vperm.xlu0 %4082, %v4001
          %v4084 = vpop.permute.xlu0 %4083
          %4087 = vset.pattern.permute.xlu0 0
          %4088 = vperm.xlu0 %4087, %v4002
          %v4089 = vpop.permute.xlu0 %4088
          %4092 = vset.pattern.permute.xlu0 0
          %4093 = vperm.xlu0 %4092, %v4003
          %v4094 = vpop.permute.xlu0 %4093
          %4097 = vset.pattern.permute.xlu0 0
          %4098 = vperm.xlu0 %4097, %v4004
          %v4099 = vpop.permute.xlu0 %4098
          %4102 = vset.pattern.permute.xlu0 0
          %4103 = vperm.xlu0 %4102, %v4005
          %v4104 = vpop.permute.xlu0 %4103
          %4107 = vset.pattern.permute.xlu0 0
          %4108 = vperm.xlu0 %4107, %v4006
          %v4109 = vpop.permute.xlu0 %4108
          %4112 = vset.pattern.permute.xlu0 0
          %4113 = vperm.xlu0 %4112, %v4007
          %v4114 = vpop.permute.xlu0 %4113
          %4117 = vset.pattern.permute.xlu0 0
          %4118 = vperm.xlu0 %4117, %v4008
          %v4119 = vpop.permute.xlu0 %4118
          %4122 = vset.pattern.permute.xlu0 0
          %4123 = vperm.xlu0 %4122, %v4009
          %v4124 = vpop.permute.xlu0 %4123
          %4127 = vset.pattern.permute.xlu0 0
          %4128 = vperm.xlu0 %4127, %v4010
          %v4129 = vpop.permute.xlu0 %4128
          %4132 = vset.pattern.permute.xlu0 0
          %4133 = vperm.xlu0 %4132, %v4011
          %v4134 = vpop.permute.xlu0 %4133
          %4137 = vset.pattern.permute.xlu0 0
          %4138 = vperm.xlu0 %4137, %v4012
          %v4139 = vpop.permute.xlu0 %4138
          %4142 = vset.pattern.permute.xlu0 0
          %4143 = vperm.xlu0 %4142, %v4013
          %v4144 = vpop.permute.xlu0 %4143
          %4147 = vset.pattern.permute.xlu0 0
          %4148 = vperm.xlu0 %4147, %v4014
          %v4149 = vpop.permute.xlu0 %4148
          %4152 = vset.pattern.permute.xlu0 0
          %4153 = vperm.xlu0 %4152, %v4015
          %v4154 = vpop.permute.xlu0 %4153
          %4157 = vset.pattern.permute.xlu0 0
          %4158 = vperm.xlu0 %4157, %v4016
          %v4159 = vpop.permute.xlu0 %4158
          %4162 = vset.pattern.permute.xlu0 0
          %4163 = vperm.xlu0 %4162, %v4017
          %v4164 = vpop.permute.xlu0 %4163
          %4167 = vset.pattern.permute.xlu0 0
          %4168 = vperm.xlu0 %4167, %v4018
          %v4169 = vpop.permute.xlu0 %4168
          %4172 = vset.pattern.permute.xlu0 0
          %4173 = vperm.xlu0 %4172, %v4019
          %v4174 = vpop.permute.xlu0 %4173
          %4177 = vset.pattern.permute.xlu0 0
          %4178 = vperm.xlu0 %4177, %v4020
          %v4179 = vpop.permute.xlu0 %4178
          %4182 = vset.pattern.permute.xlu0 0
          %4183 = vperm.xlu0 %4182, %v4021
          %v4184 = vpop.permute.xlu0 %4183
          %4187 = vset.pattern.permute.xlu0 0
          %4188 = vperm.xlu0 %4187, %v4022
          %v4189 = vpop.permute.xlu0 %4188
          %4192 = vset.pattern.permute.xlu0 0
          %4193 = vperm.xlu0 %4192, %v4023
          %v4194 = vpop.permute.xlu0 %4193
          %4197 = vset.pattern.permute.xlu0 0
          %4198 = vperm.xlu0 %4197, %v4024
          %v4199 = vpop.permute.xlu0 %4198
          %4202 = vset.pattern.permute.xlu0 0
          %4203 = vperm.xlu0 %4202, %v4025
          %v4204 = vpop.permute.xlu0 %4203
          %4207 = vset.pattern.permute.xlu0 0
          %4208 = vperm.xlu0 %4207, %v4026
          %v4209 = vpop.permute.xlu0 %4208
          %4212 = vset.pattern.permute.xlu0 0
          %4213 = vperm.xlu0 %4212, %v4027
          %v4214 = vpop.permute.xlu0 %4213
          %4217 = vset.pattern.permute.xlu0 0
          %4218 = vperm.xlu0 %4217, %v4028
          %v4219 = vpop.permute.xlu0 %4218
          %4222 = vset.pattern.permute.xlu0 0
          %4223 = vperm.xlu0 %4222, %v4029
          %v4224 = vpop.permute.xlu0 %4223
          %4227 = vset.pattern.permute.xlu0 0
          %4228 = vperm.xlu0 %4227, %v4030
          %v4229 = vpop.permute.xlu0 %4228
          %4232 = vset.pattern.permute.xlu0 0
          %4233 = vperm.xlu0 %4232, %v4031
          %v4234 = vpop.permute.xlu0 %4233
          %4237 = vset.pattern.permute.xlu0 0
          %4238 = vperm.xlu0 %4237, %v4032
          %v4239 = vpop.permute.xlu0 %4238
          %4242 = vset.pattern.permute.xlu0 0
          %4243 = vperm.xlu0 %4242, %v4033
          %v4244 = vpop.permute.xlu0 %4243
          %4247 = vset.pattern.permute.xlu0 0
          %4248 = vperm.xlu0 %4247, %v4034
          %v4249 = vpop.permute.xlu0 %4248
          %4252 = vset.pattern.permute.xlu0 0
          %4253 = vperm.xlu0 %4252, %v4035
          %v4254 = vpop.permute.xlu0 %4253
          %4257 = vset.pattern.permute.xlu0 0
          %4258 = vperm.xlu0 %4257, %v4036
          %v4259 = vpop.permute.xlu0 %4258
          %4262 = vset.pattern.permute.xlu0 0
          %4263 = vperm.xlu0 %4262, %v4037
          %v4264 = vpop.permute.xlu0 %4263
          %4267 = vset.pattern.permute.xlu0 0
          %4268 = vperm.xlu0 %4267, %v4038
          %v4269 = vpop.permute.xlu0 %4268
          %4272 = vset.pattern.permute.xlu0 0
          %4273 = vperm.xlu0 %4272, %v4039
          %v4274 = vpop.permute.xlu0 %4273
          %4277 = vset.pattern.permute.xlu0 0
          %4278 = vperm.xlu0 %4277, %v4040
          %v4279 = vpop.permute.xlu0 %4278
          %4282 = vset.pattern.permute.xlu0 0
          %4283 = vperm.xlu0 %4282, %v4041
          %v4284 = vpop.permute.xlu0 %4283
          %4287 = vset.pattern.permute.xlu0 0
          %4288 = vperm.xlu0 %4287, %v4042
          %v4289 = vpop.permute.xlu0 %4288
          %4292 = vset.pattern.permute.xlu0 0
          %4293 = vperm.xlu0 %4292, %v4043
          %v4294 = vpop.permute.xlu0 %4293
          %4297 = vset.pattern.permute.xlu0 0
          %4298 = vperm.xlu0 %4297, %v4044
          %v4299 = vpop.permute.xlu0 %4298
          %4302 = vset.pattern.permute.xlu0 0
          %4303 = vperm.xlu0 %4302, %v4045
          %v4304 = vpop.permute.xlu0 %4303
          %4307 = vset.pattern.permute.xlu0 0
          %4308 = vperm.xlu0 %4307, %v4046
          %v4309 = vpop.permute.xlu0 %4308
          %4312 = vset.pattern.permute.xlu0 0
          %4313 = vperm.xlu0 %4312, %v4047
          %v4314 = vpop.permute.xlu0 %4313
          %4317 = vset.pattern.permute.xlu0 0
          %4318 = vperm.xlu0 %4317, %v4048
          %v4319 = vpop.permute.xlu0 %4318
          %4322 = vset.pattern.permute.xlu0 0
          %4323 = vperm.xlu0 %4322, %v4049
          %v4324 = vpop.permute.xlu0 %4323
          %4327 = vset.pattern.permute.xlu0 0
          %4328 = vperm.xlu0 %4327, %v4050
          %v4329 = vpop.permute.xlu0 %4328
          %4332 = vset.pattern.permute.xlu0 0
          %4333 = vperm.xlu0 %4332, %v4051
          %v4334 = vpop.permute.xlu0 %4333
          %4337 = vset.pattern.permute.xlu0 0
          %4338 = vperm.xlu0 %4337, %v4052
          %v4339 = vpop.permute.xlu0 %4338
          %4342 = vset.pattern.permute.xlu0 0
          %4343 = vperm.xlu0 %4342, %v4053
          %v4344 = vpop.permute.xlu0 %4343
          %4347 = vset.pattern.permute.xlu0 0
          %4348 = vperm.xlu0 %4347, %v4054
          %v4349 = vpop.permute.xlu0 %4348
          %4352 = vset.pattern.permute.xlu0 0
          %4353 = vperm.xlu0 %4352, %v4055
          %v4354 = vpop.permute.xlu0 %4353
          %4357 = vset.pattern.permute.xlu0 0
          %4358 = vperm.xlu0 %4357, %v4056
          %v4359 = vpop.permute.xlu0 %4358
          %4362 = vset.pattern.permute.xlu0 0
          %4363 = vperm.xlu0 %4362, %v4057
          %v4364 = vpop.permute.xlu0 %4363
          %4367 = vset.pattern.permute.xlu0 0
          %4368 = vperm.xlu0 %4367, %v4058
          %v4369 = vpop.permute.xlu0 %4368
          %4372 = vset.pattern.permute.xlu0 0
          %4373 = vperm.xlu0 %4372, %v4059
          %v4374 = vpop.permute.xlu0 %4373
          %4377 = vset.pattern.permute.xlu0 0
          %4378 = vperm.xlu0 %4377, %v4060
          %v4379 = vpop.permute.xlu0 %4378
          %v4381 = vrcp.pop %v4064
          %v4382 = vmul.f32 %v3933, %v4381
          %v4383 = vrcp.pop %v4069
          %v4384 = vmul.f32 %v3934, %v4383
          %v4385 = vrcp.pop %v4074
          %v4386 = vmul.f32 %v3935, %v4385
          %v4387 = vrcp.pop %v4079
          %v4388 = vmul.f32 %v3936, %v4387
          %v4389 = vrcp.pop %v4084
          %v4390 = vmul.f32 %v3937, %v4389
          %v4391 = vrcp.pop %v4089
          %v4392 = vmul.f32 %v3938, %v4391
          %v4393 = vrcp.pop %v4094
          %v4394 = vmul.f32 %v3939, %v4393
          %v4395 = vrcp.pop %v4099
          %v4396 = vmul.f32 %v3940, %v4395
          %v4397 = vrcp.pop %v4104
          %v4398 = vmul.f32 %v3941, %v4397
          %v4399 = vrcp.pop %v4109
          %v4400 = vmul.f32 %v3942, %v4399
          %v4401 = vrcp.pop %v4114
          %v4402 = vmul.f32 %v3943, %v4401
          %v4403 = vrcp.pop %v4119
          %v4404 = vmul.f32 %v3944, %v4403
          %v4405 = vrcp.pop %v4124
          %v4406 = vmul.f32 %v3945, %v4405
          %v4407 = vrcp.pop %v4129
          %v4408 = vmul.f32 %v3946, %v4407
          %v4409 = vrcp.pop %v4134
          %v4410 = vmul.f32 %v3947, %v4409
          %v4411 = vrcp.pop %v4139
          %v4412 = vmul.f32 %v3948, %v4411
          %v4413 = vrcp.pop %v4144
          %v4414 = vmul.f32 %v3949, %v4413
          %v4415 = vrcp.pop %v4149
          %v4416 = vmul.f32 %v3950, %v4415
          %v4417 = vrcp.pop %v4154
          %v4418 = vmul.f32 %v3951, %v4417
          %v4419 = vrcp.pop %v4159
          %v4420 = vmul.f32 %v3952, %v4419
          %v4421 = vrcp.pop %v4164
          %v4422 = vmul.f32 %v3953, %v4421
          %v4423 = vrcp.pop %v4169
          %v4424 = vmul.f32 %v3954, %v4423
          %v4425 = vrcp.pop %v4174
          %v4426 = vmul.f32 %v3955, %v4425
          %v4427 = vrcp.pop %v4179
          %v4428 = vmul.f32 %v3956, %v4427
          %v4429 = vrcp.pop %v4184
          %v4430 = vmul.f32 %v3957, %v4429
          %v4431 = vrcp.pop %v4189
          %v4432 = vmul.f32 %v3958, %v4431
          %v4433 = vrcp.pop %v4194
          %v4434 = vmul.f32 %v3959, %v4433
          %v4435 = vrcp.pop %v4199
          %v4436 = vmul.f32 %v3960, %v4435
          %v4437 = vrcp.pop %v4204
          %v4438 = vmul.f32 %v3961, %v4437
          %v4439 = vrcp.pop %v4209
          %v4440 = vmul.f32 %v3962, %v4439
          %v4441 = vrcp.pop %v4214
          %v4442 = vmul.f32 %v3963, %v4441
          %v4443 = vrcp.pop %v4219
          %v4444 = vmul.f32 %v3964, %v4443
          %v4445 = vrcp.pop %v4224
          %v4446 = vmul.f32 %v3965, %v4445
          %v4447 = vrcp.pop %v4229
          %v4448 = vmul.f32 %v3966, %v4447
          %v4449 = vrcp.pop %v4234
          %v4450 = vmul.f32 %v3967, %v4449
          %v4451 = vrcp.pop %v4239
          %v4452 = vmul.f32 %v3968, %v4451
          %v4453 = vrcp.pop %v4244
          %v4454 = vmul.f32 %v3969, %v4453
          %v4455 = vrcp.pop %v4249
          %v4456 = vmul.f32 %v3970, %v4455
          %v4457 = vrcp.pop %v4254
          %v4458 = vmul.f32 %v3971, %v4457
          %v4459 = vrcp.pop %v4259
          %v4460 = vmul.f32 %v3972, %v4459
          %v4461 = vrcp.pop %v4264
          %v4462 = vmul.f32 %v3973, %v4461
          %v4463 = vrcp.pop %v4269
          %v4464 = vmul.f32 %v3974, %v4463
          %v4465 = vrcp.pop %v4274
          %v4466 = vmul.f32 %v3975, %v4465
          %v4467 = vrcp.pop %v4279
          %v4468 = vmul.f32 %v3976, %v4467
          %v4469 = vrcp.pop %v4284
          %v4470 = vmul.f32 %v3977, %v4469
          %v4471 = vrcp.pop %v4289
          %v4472 = vmul.f32 %v3978, %v4471
          %v4473 = vrcp.pop %v4294
          %v4474 = vmul.f32 %v3979, %v4473
          %v4475 = vrcp.pop %v4299
          %v4476 = vmul.f32 %v3980, %v4475
          %v4477 = vrcp.pop %v4304
          %v4478 = vmul.f32 %v3981, %v4477
          %v4479 = vrcp.pop %v4309
          %v4480 = vmul.f32 %v3982, %v4479
          %v4481 = vrcp.pop %v4314
          %v4482 = vmul.f32 %v3983, %v4481
          %v4483 = vrcp.pop %v4319
          %v4484 = vmul.f32 %v3984, %v4483
          %v4485 = vrcp.pop %v4324
          %v4486 = vmul.f32 %v3985, %v4485
          %v4487 = vrcp.pop %v4329
          %v4488 = vmul.f32 %v3986, %v4487
          %v4489 = vrcp.pop %v4334
          %v4490 = vmul.f32 %v3987, %v4489
          %v4491 = vrcp.pop %v4339
          %v4492 = vmul.f32 %v3988, %v4491
          %v4493 = vrcp.pop %v4344
          %v4494 = vmul.f32 %v3989, %v4493
          %v4495 = vrcp.pop %v4349
          %v4496 = vmul.f32 %v3990, %v4495
          %v4497 = vrcp.pop %v4354
          %v4498 = vmul.f32 %v3991, %v4497
          %v4499 = vrcp.pop %v4359
          %v4500 = vmul.f32 %v3992, %v4499
          %v4501 = vrcp.pop %v4364
          %v4502 = vmul.f32 %v3993, %v4501
          %v4503 = vrcp.pop %v4369
          %v4504 = vmul.f32 %v3994, %v4503
          %v4505 = vrcp.pop %v4374
          %v4506 = vmul.f32 %v3995, %v4505
          %v4507 = vrcp.pop %v4379
          %v4508 = vmul.f32 %v3996, %v4507
          %v4509 = vsel %vm2845, 1, 0
          %v4510 = vsel %vm2846, 1, 0
          %v4511 = vsel %vm2847, 1, 0
          %v4512 = vsel %vm2848, 1, 0
          %v4513 = vsel %vm2849, 1, 0
          %v4514 = vsel %vm2850, 1, 0
          %v4515 = vsel %vm2851, 1, 0
          %v4516 = vsel %vm2852, 1, 0
          %v4517 = vsel %vm2853, 1, 0
          %v4518 = vsel %vm2854, 1, 0
          %v4519 = vsel %vm2855, 1, 0
          %v4520 = vsel %vm2856, 1, 0
          %v4521 = vsel %vm2857, 1, 0
          %v4522 = vsel %vm2858, 1, 0
          %v4523 = vsel %vm2859, 1, 0
          %v4524 = vsel %vm2860, 1, 0
          %v4525 = vsel %vm2861, 1, 0
          %v4526 = vsel %vm2862, 1, 0
          %v4527 = vsel %vm2863, 1, 0
          %v4528 = vsel %vm2864, 1, 0
          %v4529 = vsel %vm2865, 1, 0
          %v4530 = vsel %vm2866, 1, 0
          %v4531 = vsel %vm2867, 1, 0
          %v4532 = vsel %vm2868, 1, 0
          %v4533 = vsel %vm2869, 1, 0
          %v4534 = vsel %vm2870, 1, 0
          %v4535 = vsel %vm2871, 1, 0
          %v4536 = vsel %vm2872, 1, 0
          %v4537 = vsel %vm2873, 1, 0
          %v4538 = vsel %vm2874, 1, 0
          %v4539 = vsel %vm2875, 1, 0
          %v4540 = vsel %vm2876, 1, 0
          %v4541 = vsel %vm2877, 1, 0
          %v4542 = vsel %vm2878, 1, 0
          %v4543 = vsel %vm2879, 1, 0
          %v4544 = vsel %vm2880, 1, 0
          %v4545 = vsel %vm2881, 1, 0
          %v4546 = vsel %vm2882, 1, 0
          %v4547 = vsel %vm2883, 1, 0
          %v4548 = vsel %vm2884, 1, 0
          %v4549 = vsel %vm2885, 1, 0
          %v4550 = vsel %vm2886, 1, 0
          %v4551 = vsel %vm2887, 1, 0
          %v4552 = vsel %vm2888, 1, 0
          %v4553 = vsel %vm2889, 1, 0
          %v4554 = vsel %vm2890, 1, 0
          %v4555 = vsel %vm2891, 1, 0
          %v4556 = vsel %vm2892, 1, 0
          %v4557 = vsel %vm2893, 1, 0
          %v4558 = vsel %vm2894, 1, 0
          %v4559 = vsel %vm2895, 1, 0
          %v4560 = vsel %vm2896, 1, 0
          %v4561 = vsel %vm2897, 1, 0
          %v4562 = vsel %vm2898, 1, 0
          %v4563 = vsel %vm2899, 1, 0
          %v4564 = vsel %vm2900, 1, 0
          %v4565 = vsel %vm2901, 1, 0
          %v4566 = vsel %vm2902, 1, 0
          %v4567 = vsel %vm2903, 1, 0
          %v4568 = vsel %vm2904, 1, 0
          %v4569 = vsel %vm2905, 1, 0
          %v4570 = vsel %vm2906, 1, 0
          %v4571 = vsel %vm2907, 1, 0
          %v4572 = vsel %vm2908, 1, 0
          %4573 = vset.pattern.permute.xlu0 8
          %4574 = vperm.xlu0 %4573, %v4509
          %v4575 = vpop.permute.xlu0 %4574
          %4576 = vset.pattern.permute.xlu0 8
          %4577 = vperm.xlu0 %4576, %v4510
          %v4578 = vpop.permute.xlu0 %4577
          %4579 = vset.pattern.permute.xlu0 8
          %4580 = vperm.xlu0 %4579, %v4511
          %v4581 = vpop.permute.xlu0 %4580
          %4582 = vset.pattern.permute.xlu0 8
          %4583 = vperm.xlu0 %4582, %v4512
          %v4584 = vpop.permute.xlu0 %4583
          %4585 = vset.pattern.permute.xlu0 8
          %4586 = vperm.xlu0 %4585, %v4513
          %v4587 = vpop.permute.xlu0 %4586
          %4588 = vset.pattern.permute.xlu0 8
          %4589 = vperm.xlu0 %4588, %v4514
          %v4590 = vpop.permute.xlu0 %4589
          %4591 = vset.pattern.permute.xlu0 8
          %4592 = vperm.xlu0 %4591, %v4515
          %v4593 = vpop.permute.xlu0 %4592
          %4594 = vset.pattern.permute.xlu0 8
          %4595 = vperm.xlu0 %4594, %v4516
          %v4596 = vpop.permute.xlu0 %4595
          %4597 = vset.pattern.permute.xlu0 8
          %4598 = vperm.xlu0 %4597, %v4517
          %v4599 = vpop.permute.xlu0 %4598
          %4600 = vset.pattern.permute.xlu0 8
          %4601 = vperm.xlu0 %4600, %v4518
          %v4602 = vpop.permute.xlu0 %4601
          %4603 = vset.pattern.permute.xlu0 8
          %4604 = vperm.xlu0 %4603, %v4519
          %v4605 = vpop.permute.xlu0 %4604
          %4606 = vset.pattern.permute.xlu0 8
          %4607 = vperm.xlu0 %4606, %v4520
          %v4608 = vpop.permute.xlu0 %4607
          %4609 = vset.pattern.permute.xlu0 8
          %4610 = vperm.xlu0 %4609, %v4521
          %v4611 = vpop.permute.xlu0 %4610
          %4612 = vset.pattern.permute.xlu0 8
          %4613 = vperm.xlu0 %4612, %v4522
          %v4614 = vpop.permute.xlu0 %4613
          %4615 = vset.pattern.permute.xlu0 8
          %4616 = vperm.xlu0 %4615, %v4523
          %v4617 = vpop.permute.xlu0 %4616
          %4618 = vset.pattern.permute.xlu0 8
          %4619 = vperm.xlu0 %4618, %v4524
          %v4620 = vpop.permute.xlu0 %4619
          %4621 = vset.pattern.permute.xlu0 8
          %4622 = vperm.xlu0 %4621, %v4525
          %v4623 = vpop.permute.xlu0 %4622
          %4624 = vset.pattern.permute.xlu0 8
          %4625 = vperm.xlu0 %4624, %v4526
          %v4626 = vpop.permute.xlu0 %4625
          %4627 = vset.pattern.permute.xlu0 8
          %4628 = vperm.xlu0 %4627, %v4527
          %v4629 = vpop.permute.xlu0 %4628
          %4630 = vset.pattern.permute.xlu0 8
          %4631 = vperm.xlu0 %4630, %v4528
          %v4632 = vpop.permute.xlu0 %4631
          %4633 = vset.pattern.permute.xlu0 8
          %4634 = vperm.xlu0 %4633, %v4529
          %v4635 = vpop.permute.xlu0 %4634
          %4636 = vset.pattern.permute.xlu0 8
          %4637 = vperm.xlu0 %4636, %v4530
          %v4638 = vpop.permute.xlu0 %4637
          %4639 = vset.pattern.permute.xlu0 8
          %4640 = vperm.xlu0 %4639, %v4531
          %v4641 = vpop.permute.xlu0 %4640
          %4642 = vset.pattern.permute.xlu0 8
          %4643 = vperm.xlu0 %4642, %v4532
          %v4644 = vpop.permute.xlu0 %4643
          %4645 = vset.pattern.permute.xlu0 8
          %4646 = vperm.xlu0 %4645, %v4533
          %v4647 = vpop.permute.xlu0 %4646
          %4648 = vset.pattern.permute.xlu0 8
          %4649 = vperm.xlu0 %4648, %v4534
          %v4650 = vpop.permute.xlu0 %4649
          %4651 = vset.pattern.permute.xlu0 8
          %4652 = vperm.xlu0 %4651, %v4535
          %v4653 = vpop.permute.xlu0 %4652
          %4654 = vset.pattern.permute.xlu0 8
          %4655 = vperm.xlu0 %4654, %v4536
          %v4656 = vpop.permute.xlu0 %4655
          %4657 = vset.pattern.permute.xlu0 8
          %4658 = vperm.xlu0 %4657, %v4537
          %v4659 = vpop.permute.xlu0 %4658
          %4660 = vset.pattern.permute.xlu0 8
          %4661 = vperm.xlu0 %4660, %v4538
          %v4662 = vpop.permute.xlu0 %4661
          %4663 = vset.pattern.permute.xlu0 8
          %4664 = vperm.xlu0 %4663, %v4539
          %v4665 = vpop.permute.xlu0 %4664
          %4666 = vset.pattern.permute.xlu0 8
          %4667 = vperm.xlu0 %4666, %v4540
          %v4668 = vpop.permute.xlu0 %4667
          %4669 = vset.pattern.permute.xlu0 8
          %4670 = vperm.xlu0 %4669, %v4541
          %v4671 = vpop.permute.xlu0 %4670
          %4672 = vset.pattern.permute.xlu0 8
          %4673 = vperm.xlu0 %4672, %v4542
          %v4674 = vpop.permute.xlu0 %4673
          %4675 = vset.pattern.permute.xlu0 8
          %4676 = vperm.xlu0 %4675, %v4543
          %v4677 = vpop.permute.xlu0 %4676
          %4678 = vset.pattern.permute.xlu0 8
          %4679 = vperm.xlu0 %4678, %v4544
          %v4680 = vpop.permute.xlu0 %4679
          %4681 = vset.pattern.permute.xlu0 8
          %4682 = vperm.xlu0 %4681, %v4545
          %v4683 = vpop.permute.xlu0 %4682
          %4684 = vset.pattern.permute.xlu0 8
          %4685 = vperm.xlu0 %4684, %v4546
          %v4686 = vpop.permute.xlu0 %4685
          %4687 = vset.pattern.permute.xlu0 8
          %4688 = vperm.xlu0 %4687, %v4547
          %v4689 = vpop.permute.xlu0 %4688
          %4690 = vset.pattern.permute.xlu0 8
          %4691 = vperm.xlu0 %4690, %v4548
          %v4692 = vpop.permute.xlu0 %4691
          %4693 = vset.pattern.permute.xlu0 8
          %4694 = vperm.xlu0 %4693, %v4549
          %v4695 = vpop.permute.xlu0 %4694
          %4696 = vset.pattern.permute.xlu0 8
          %4697 = vperm.xlu0 %4696, %v4550
          %v4698 = vpop.permute.xlu0 %4697
          %4699 = vset.pattern.permute.xlu0 8
          %4700 = vperm.xlu0 %4699, %v4551
          %v4701 = vpop.permute.xlu0 %4700
          %4702 = vset.pattern.permute.xlu0 8
          %4703 = vperm.xlu0 %4702, %v4552
          %v4704 = vpop.permute.xlu0 %4703
          %4705 = vset.pattern.permute.xlu0 8
          %4706 = vperm.xlu0 %4705, %v4553
          %v4707 = vpop.permute.xlu0 %4706
          %4708 = vset.pattern.permute.xlu0 8
          %4709 = vperm.xlu0 %4708, %v4554
          %v4710 = vpop.permute.xlu0 %4709
          %4711 = vset.pattern.permute.xlu0 8
          %4712 = vperm.xlu0 %4711, %v4555
          %v4713 = vpop.permute.xlu0 %4712
          %4714 = vset.pattern.permute.xlu0 8
          %4715 = vperm.xlu0 %4714, %v4556
          %v4716 = vpop.permute.xlu0 %4715
          %4717 = vset.pattern.permute.xlu0 8
          %4718 = vperm.xlu0 %4717, %v4557
          %v4719 = vpop.permute.xlu0 %4718
          %4720 = vset.pattern.permute.xlu0 8
          %4721 = vperm.xlu0 %4720, %v4558
          %v4722 = vpop.permute.xlu0 %4721
          %4723 = vset.pattern.permute.xlu0 8
          %4724 = vperm.xlu0 %4723, %v4559
          %v4725 = vpop.permute.xlu0 %4724
          %4726 = vset.pattern.permute.xlu0 8
          %4727 = vperm.xlu0 %4726, %v4560
          %v4728 = vpop.permute.xlu0 %4727
          %4729 = vset.pattern.permute.xlu0 8
          %4730 = vperm.xlu0 %4729, %v4561
          %v4731 = vpop.permute.xlu0 %4730
          %4732 = vset.pattern.permute.xlu0 8
          %4733 = vperm.xlu0 %4732, %v4562
          %v4734 = vpop.permute.xlu0 %4733
          %4735 = vset.pattern.permute.xlu0 8
          %4736 = vperm.xlu0 %4735, %v4563
          %v4737 = vpop.permute.xlu0 %4736
          %4738 = vset.pattern.permute.xlu0 8
          %4739 = vperm.xlu0 %4738, %v4564
          %v4740 = vpop.permute.xlu0 %4739
          %4741 = vset.pattern.permute.xlu0 8
          %4742 = vperm.xlu0 %4741, %v4565
          %v4743 = vpop.permute.xlu0 %4742
          %4744 = vset.pattern.permute.xlu0 8
          %4745 = vperm.xlu0 %4744, %v4566
          %v4746 = vpop.permute.xlu0 %4745
          %4747 = vset.pattern.permute.xlu0 8
          %4748 = vperm.xlu0 %4747, %v4567
          %v4749 = vpop.permute.xlu0 %4748
          %4750 = vset.pattern.permute.xlu0 8
          %4751 = vperm.xlu0 %4750, %v4568
          %v4752 = vpop.permute.xlu0 %4751
          %4753 = vset.pattern.permute.xlu0 8
          %4754 = vperm.xlu0 %4753, %v4569
          %v4755 = vpop.permute.xlu0 %4754
          %4756 = vset.pattern.permute.xlu0 8
          %4757 = vperm.xlu0 %4756, %v4570
          %v4758 = vpop.permute.xlu0 %4757
          %4759 = vset.pattern.permute.xlu0 8
          %4760 = vperm.xlu0 %4759, %v4571
          %v4761 = vpop.permute.xlu0 %4760
          %4762 = vset.pattern.permute.xlu0 8
          %4763 = vperm.xlu0 %4762, %v4572
          %v4764 = vpop.permute.xlu0 %4763
          %vm4765 = vcmp.eq.s32.totalorder %v4575, 1
          %vm4766 = vcmp.eq.s32.totalorder %v4578, 1
          %vm4767 = vcmp.eq.s32.totalorder %v4581, 1
          %vm4768 = vcmp.eq.s32.totalorder %v4584, 1
          %vm4769 = vcmp.eq.s32.totalorder %v4587, 1
          %vm4770 = vcmp.eq.s32.totalorder %v4590, 1
          %vm4771 = vcmp.eq.s32.totalorder %v4593, 1
          %vm4772 = vcmp.eq.s32.totalorder %v4596, 1
          %vm4773 = vcmp.eq.s32.totalorder %v4599, 1
          %vm4774 = vcmp.eq.s32.totalorder %v4602, 1
          %vm4775 = vcmp.eq.s32.totalorder %v4605, 1
          %vm4776 = vcmp.eq.s32.totalorder %v4608, 1
          %vm4777 = vcmp.eq.s32.totalorder %v4611, 1
          %vm4778 = vcmp.eq.s32.totalorder %v4614, 1
          %vm4779 = vcmp.eq.s32.totalorder %v4617, 1
          %vm4780 = vcmp.eq.s32.totalorder %v4620, 1
          %vm4781 = vcmp.eq.s32.totalorder %v4623, 1
          %vm4782 = vcmp.eq.s32.totalorder %v4626, 1
          %vm4783 = vcmp.eq.s32.totalorder %v4629, 1
          %vm4784 = vcmp.eq.s32.totalorder %v4632, 1
          %vm4785 = vcmp.eq.s32.totalorder %v4635, 1
          %vm4786 = vcmp.eq.s32.totalorder %v4638, 1
          %vm4787 = vcmp.eq.s32.totalorder %v4641, 1
          %vm4788 = vcmp.eq.s32.totalorder %v4644, 1
          %vm4789 = vcmp.eq.s32.totalorder %v4647, 1
          %vm4790 = vcmp.eq.s32.totalorder %v4650, 1
          %vm4791 = vcmp.eq.s32.totalorder %v4653, 1
          %vm4792 = vcmp.eq.s32.totalorder %v4656, 1
          %vm4793 = vcmp.eq.s32.totalorder %v4659, 1
          %vm4794 = vcmp.eq.s32.totalorder %v4662, 1
          %vm4795 = vcmp.eq.s32.totalorder %v4665, 1
          %vm4796 = vcmp.eq.s32.totalorder %v4668, 1
          %vm4797 = vcmp.eq.s32.totalorder %v4671, 1
          %vm4798 = vcmp.eq.s32.totalorder %v4674, 1
          %vm4799 = vcmp.eq.s32.totalorder %v4677, 1
          %vm4800 = vcmp.eq.s32.totalorder %v4680, 1
          %vm4801 = vcmp.eq.s32.totalorder %v4683, 1
          %vm4802 = vcmp.eq.s32.totalorder %v4686, 1
          %vm4803 = vcmp.eq.s32.totalorder %v4689, 1
          %vm4804 = vcmp.eq.s32.totalorder %v4692, 1
          %vm4805 = vcmp.eq.s32.totalorder %v4695, 1
          %vm4806 = vcmp.eq.s32.totalorder %v4698, 1
          %vm4807 = vcmp.eq.s32.totalorder %v4701, 1
          %vm4808 = vcmp.eq.s32.totalorder %v4704, 1
          %vm4809 = vcmp.eq.s32.totalorder %v4707, 1
          %vm4810 = vcmp.eq.s32.totalorder %v4710, 1
          %vm4811 = vcmp.eq.s32.totalorder %v4713, 1
          %vm4812 = vcmp.eq.s32.totalorder %v4716, 1
          %vm4813 = vcmp.eq.s32.totalorder %v4719, 1
          %vm4814 = vcmp.eq.s32.totalorder %v4722, 1
          %vm4815 = vcmp.eq.s32.totalorder %v4725, 1
          %vm4816 = vcmp.eq.s32.totalorder %v4728, 1
          %vm4817 = vcmp.eq.s32.totalorder %v4731, 1
          %vm4818 = vcmp.eq.s32.totalorder %v4734, 1
          %vm4819 = vcmp.eq.s32.totalorder %v4737, 1
          %vm4820 = vcmp.eq.s32.totalorder %v4740, 1
          %vm4821 = vcmp.eq.s32.totalorder %v4743, 1
          %vm4822 = vcmp.eq.s32.totalorder %v4746, 1
          %vm4823 = vcmp.eq.s32.totalorder %v4749, 1
          %vm4824 = vcmp.eq.s32.totalorder %v4752, 1
          %vm4825 = vcmp.eq.s32.totalorder %v4755, 1
          %vm4826 = vcmp.eq.s32.totalorder %v4758, 1
          %vm4827 = vcmp.eq.s32.totalorder %v4761, 1
          %vm4828 = vcmp.eq.s32.totalorder %v4764, 1
          %v4829 = vsel %vm4765, %v4382, %v3421
          %v4830 = vsel %vm4766, %v4384, %v3422
          %v4831 = vsel %vm4767, %v4386, %v3423
          %v4832 = vsel %vm4768, %v4388, %v3424
          %v4833 = vsel %vm4769, %v4390, %v3425
          %v4834 = vsel %vm4770, %v4392, %v3426
          %v4835 = vsel %vm4771, %v4394, %v3427
          %v4836 = vsel %vm4772, %v4396, %v3428
          %v4837 = vsel %vm4773, %v4398, %v3429
          %v4838 = vsel %vm4774, %v4400, %v3430
          %v4839 = vsel %vm4775, %v4402, %v3431
          %v4840 = vsel %vm4776, %v4404, %v3432
          %v4841 = vsel %vm4777, %v4406, %v3433
          %v4842 = vsel %vm4778, %v4408, %v3434
          %v4843 = vsel %vm4779, %v4410, %v3435
          %v4844 = vsel %vm4780, %v4412, %v3436
          %v4845 = vsel %vm4781, %v4414, %v3437
          %v4846 = vsel %vm4782, %v4416, %v3438
          %v4847 = vsel %vm4783, %v4418, %v3439
          %v4848 = vsel %vm4784, %v4420, %v3440
          %v4849 = vsel %vm4785, %v4422, %v3441
          %v4850 = vsel %vm4786, %v4424, %v3442
          %v4851 = vsel %vm4787, %v4426, %v3443
          %v4852 = vsel %vm4788, %v4428, %v3444
          %v4853 = vsel %vm4789, %v4430, %v3445
          %v4854 = vsel %vm4790, %v4432, %v3446
          %v4855 = vsel %vm4791, %v4434, %v3447
          %v4856 = vsel %vm4792, %v4436, %v3448
          %v4857 = vsel %vm4793, %v4438, %v3449
          %v4858 = vsel %vm4794, %v4440, %v3450
          %v4859 = vsel %vm4795, %v4442, %v3451
          %v4860 = vsel %vm4796, %v4444, %v3452
          %v4861 = vsel %vm4797, %v4446, %v3453
          %v4862 = vsel %vm4798, %v4448, %v3454
          %v4863 = vsel %vm4799, %v4450, %v3455
          %v4864 = vsel %vm4800, %v4452, %v3456
          %v4865 = vsel %vm4801, %v4454, %v3457
          %v4866 = vsel %vm4802, %v4456, %v3458
          %v4867 = vsel %vm4803, %v4458, %v3459
          %v4868 = vsel %vm4804, %v4460, %v3460
          %v4869 = vsel %vm4805, %v4462, %v3461
          %v4870 = vsel %vm4806, %v4464, %v3462
          %v4871 = vsel %vm4807, %v4466, %v3463
          %v4872 = vsel %vm4808, %v4468, %v3464
          %v4873 = vsel %vm4809, %v4470, %v3465
          %v4874 = vsel %vm4810, %v4472, %v3466
          %v4875 = vsel %vm4811, %v4474, %v3467
          %v4876 = vsel %vm4812, %v4476, %v3468
          %v4877 = vsel %vm4813, %v4478, %v3469
          %v4878 = vsel %vm4814, %v4480, %v3470
          %v4879 = vsel %vm4815, %v4482, %v3471
          %v4880 = vsel %vm4816, %v4484, %v3472
          %v4881 = vsel %vm4817, %v4486, %v3473
          %v4882 = vsel %vm4818, %v4488, %v3474
          %v4883 = vsel %vm4819, %v4490, %v3475
          %v4884 = vsel %vm4820, %v4492, %v3476
          %v4885 = vsel %vm4821, %v4494, %v3477
          %v4886 = vsel %vm4822, %v4496, %v3478
          %v4887 = vsel %vm4823, %v4498, %v3479
          %v4888 = vsel %vm4824, %v4500, %v3480
          %v4889 = vsel %vm4825, %v4502, %v3481
          %v4890 = vsel %vm4826, %v4504, %v3482
          %v4891 = vsel %vm4827, %v4506, %v3483
          %v4892 = vsel %vm4828, %v4508, %v3484
          %4893 = vrot.lane.b32.xlu0 %v3997, 8
          %v4894 = vpop.permute.xlu0 %4893
          %4895 = vrot.lane.b32.xlu0 %v3998, 8
          %v4896 = vpop.permute.xlu0 %4895
          %4897 = vrot.lane.b32.xlu0 %v3999, 8
          %v4898 = vpop.permute.xlu0 %4897
          %4899 = vrot.lane.b32.xlu0 %v4000, 8
          %v4900 = vpop.permute.xlu0 %4899
          %4901 = vrot.lane.b32.xlu0 %v4001, 8
          %v4902 = vpop.permute.xlu0 %4901
          %4903 = vrot.lane.b32.xlu0 %v4002, 8
          %v4904 = vpop.permute.xlu0 %4903
          %4905 = vrot.lane.b32.xlu0 %v4003, 8
          %v4906 = vpop.permute.xlu0 %4905
          %4907 = vrot.lane.b32.xlu0 %v4004, 8
          %v4908 = vpop.permute.xlu0 %4907
          %4909 = vrot.lane.b32.xlu0 %v4005, 8
          %v4910 = vpop.permute.xlu0 %4909
          %4911 = vrot.lane.b32.xlu0 %v4006, 8
          %v4912 = vpop.permute.xlu0 %4911
          %4913 = vrot.lane.b32.xlu0 %v4007, 8
          %v4914 = vpop.permute.xlu0 %4913
          %4915 = vrot.lane.b32.xlu0 %v4008, 8
          %v4916 = vpop.permute.xlu0 %4915
          %4917 = vrot.lane.b32.xlu0 %v4009, 8
          %v4918 = vpop.permute.xlu0 %4917
          %4919 = vrot.lane.b32.xlu0 %v4010, 8
          %v4920 = vpop.permute.xlu0 %4919
          %4921 = vrot.lane.b32.xlu0 %v4011, 8
          %v4922 = vpop.permute.xlu0 %4921
          %4923 = vrot.lane.b32.xlu0 %v4012, 8
          %v4924 = vpop.permute.xlu0 %4923
          %4925 = vrot.lane.b32.xlu0 %v4013, 8
          %v4926 = vpop.permute.xlu0 %4925
          %4927 = vrot.lane.b32.xlu0 %v4014, 8
          %v4928 = vpop.permute.xlu0 %4927
          %4929 = vrot.lane.b32.xlu0 %v4015, 8
          %v4930 = vpop.permute.xlu0 %4929
          %4931 = vrot.lane.b32.xlu0 %v4016, 8
          %v4932 = vpop.permute.xlu0 %4931
          %4933 = vrot.lane.b32.xlu0 %v4017, 8
          %v4934 = vpop.permute.xlu0 %4933
          %4935 = vrot.lane.b32.xlu0 %v4018, 8
          %v4936 = vpop.permute.xlu0 %4935
          %4937 = vrot.lane.b32.xlu0 %v4019, 8
          %v4938 = vpop.permute.xlu0 %4937
          %4939 = vrot.lane.b32.xlu0 %v4020, 8
          %v4940 = vpop.permute.xlu0 %4939
          %4941 = vrot.lane.b32.xlu0 %v4021, 8
          %v4942 = vpop.permute.xlu0 %4941
          %4943 = vrot.lane.b32.xlu0 %v4022, 8
          %v4944 = vpop.permute.xlu0 %4943
          %4945 = vrot.lane.b32.xlu0 %v4023, 8
          %v4946 = vpop.permute.xlu0 %4945
          %4947 = vrot.lane.b32.xlu0 %v4024, 8
          %v4948 = vpop.permute.xlu0 %4947
          %4949 = vrot.lane.b32.xlu0 %v4025, 8
          %v4950 = vpop.permute.xlu0 %4949
          %4951 = vrot.lane.b32.xlu0 %v4026, 8
          %v4952 = vpop.permute.xlu0 %4951
          %4953 = vrot.lane.b32.xlu0 %v4027, 8
          %v4954 = vpop.permute.xlu0 %4953
          %4955 = vrot.lane.b32.xlu0 %v4028, 8
          %v4956 = vpop.permute.xlu0 %4955
          %4957 = vrot.lane.b32.xlu0 %v4029, 8
          %v4958 = vpop.permute.xlu0 %4957
          %4959 = vrot.lane.b32.xlu0 %v4030, 8
          %v4960 = vpop.permute.xlu0 %4959
          %4961 = vrot.lane.b32.xlu0 %v4031, 8
          %v4962 = vpop.permute.xlu0 %4961
          %4963 = vrot.lane.b32.xlu0 %v4032, 8
          %v4964 = vpop.permute.xlu0 %4963
          %4965 = vrot.lane.b32.xlu0 %v4033, 8
          %v4966 = vpop.permute.xlu0 %4965
          %4967 = vrot.lane.b32.xlu0 %v4034, 8
          %v4968 = vpop.permute.xlu0 %4967
          %4969 = vrot.lane.b32.xlu0 %v4035, 8
          %v4970 = vpop.permute.xlu0 %4969
          %4971 = vrot.lane.b32.xlu0 %v4036, 8
          %v4972 = vpop.permute.xlu0 %4971
          %4973 = vrot.lane.b32.xlu0 %v4037, 8
          %v4974 = vpop.permute.xlu0 %4973
          %4975 = vrot.lane.b32.xlu0 %v4038, 8
          %v4976 = vpop.permute.xlu0 %4975
          %4977 = vrot.lane.b32.xlu0 %v4039, 8
          %v4978 = vpop.permute.xlu0 %4977
          %4979 = vrot.lane.b32.xlu0 %v4040, 8
          %v4980 = vpop.permute.xlu0 %4979
          %4981 = vrot.lane.b32.xlu0 %v4041, 8
          %v4982 = vpop.permute.xlu0 %4981
          %4983 = vrot.lane.b32.xlu0 %v4042, 8
          %v4984 = vpop.permute.xlu0 %4983
          %4985 = vrot.lane.b32.xlu0 %v4043, 8
          %v4986 = vpop.permute.xlu0 %4985
          %4987 = vrot.lane.b32.xlu0 %v4044, 8
          %v4988 = vpop.permute.xlu0 %4987
          %4989 = vrot.lane.b32.xlu0 %v4045, 8
          %v4990 = vpop.permute.xlu0 %4989
          %4991 = vrot.lane.b32.xlu0 %v4046, 8
          %v4992 = vpop.permute.xlu0 %4991
          %4993 = vrot.lane.b32.xlu0 %v4047, 8
          %v4994 = vpop.permute.xlu0 %4993
          %4995 = vrot.lane.b32.xlu0 %v4048, 8
          %v4996 = vpop.permute.xlu0 %4995
          %4997 = vrot.lane.b32.xlu0 %v4049, 8
          %v4998 = vpop.permute.xlu0 %4997
          %4999 = vrot.lane.b32.xlu0 %v4050, 8
          %v5000 = vpop.permute.xlu0 %4999
          %5001 = vrot.lane.b32.xlu0 %v4051, 8
          %v5002 = vpop.permute.xlu0 %5001
          %5003 = vrot.lane.b32.xlu0 %v4052, 8
          %v5004 = vpop.permute.xlu0 %5003
          %5005 = vrot.lane.b32.xlu0 %v4053, 8
          %v5006 = vpop.permute.xlu0 %5005
          %5007 = vrot.lane.b32.xlu0 %v4054, 8
          %v5008 = vpop.permute.xlu0 %5007
          %5009 = vrot.lane.b32.xlu0 %v4055, 8
          %v5010 = vpop.permute.xlu0 %5009
          %5011 = vrot.lane.b32.xlu0 %v4056, 8
          %v5012 = vpop.permute.xlu0 %5011
          %5013 = vrot.lane.b32.xlu0 %v4057, 8
          %v5014 = vpop.permute.xlu0 %5013
          %5015 = vrot.lane.b32.xlu0 %v4058, 8
          %v5016 = vpop.permute.xlu0 %5015
          %5017 = vrot.lane.b32.xlu0 %v4059, 8
          %v5018 = vpop.permute.xlu0 %5017
          %5019 = vrot.lane.b32.xlu0 %v4060, 8
          %v5020 = vpop.permute.xlu0 %5019
          %5085 = vrot.lane.b32.xlu0 %v3485, 8
          %v5086 = vpop.permute.xlu0 %5085
          %5087 = vrot.lane.b32.xlu0 %v3486, 8
          %v5088 = vpop.permute.xlu0 %5087
          %5089 = vrot.lane.b32.xlu0 %v3487, 8
          %v5090 = vpop.permute.xlu0 %5089
          %5091 = vrot.lane.b32.xlu0 %v3488, 8
          %v5092 = vpop.permute.xlu0 %5091
          %5093 = vrot.lane.b32.xlu0 %v3489, 8
          %v5094 = vpop.permute.xlu0 %5093
          %5095 = vrot.lane.b32.xlu0 %v3490, 8
          %v5096 = vpop.permute.xlu0 %5095
          %5097 = vrot.lane.b32.xlu0 %v3491, 8
          %v5098 = vpop.permute.xlu0 %5097
          %5099 = vrot.lane.b32.xlu0 %v3492, 8
          %v5100 = vpop.permute.xlu0 %5099
          %5101 = vrot.lane.b32.xlu0 %v3493, 8
          %v5102 = vpop.permute.xlu0 %5101
          %5103 = vrot.lane.b32.xlu0 %v3494, 8
          %v5104 = vpop.permute.xlu0 %5103
          %5105 = vrot.lane.b32.xlu0 %v3495, 8
          %v5106 = vpop.permute.xlu0 %5105
          %5107 = vrot.lane.b32.xlu0 %v3496, 8
          %v5108 = vpop.permute.xlu0 %5107
          %5109 = vrot.lane.b32.xlu0 %v3497, 8
          %v5110 = vpop.permute.xlu0 %5109
          %5111 = vrot.lane.b32.xlu0 %v3498, 8
          %v5112 = vpop.permute.xlu0 %5111
          %5113 = vrot.lane.b32.xlu0 %v3499, 8
          %v5114 = vpop.permute.xlu0 %5113
          %5115 = vrot.lane.b32.xlu0 %v3500, 8
          %v5116 = vpop.permute.xlu0 %5115
          %5117 = vrot.lane.b32.xlu0 %v3501, 8
          %v5118 = vpop.permute.xlu0 %5117
          %5119 = vrot.lane.b32.xlu0 %v3502, 8
          %v5120 = vpop.permute.xlu0 %5119
          %5121 = vrot.lane.b32.xlu0 %v3503, 8
          %v5122 = vpop.permute.xlu0 %5121
          %5123 = vrot.lane.b32.xlu0 %v3504, 8
          %v5124 = vpop.permute.xlu0 %5123
          %5125 = vrot.lane.b32.xlu0 %v3505, 8
          %v5126 = vpop.permute.xlu0 %5125
          %5127 = vrot.lane.b32.xlu0 %v3506, 8
          %v5128 = vpop.permute.xlu0 %5127
          %5129 = vrot.lane.b32.xlu0 %v3507, 8
          %v5130 = vpop.permute.xlu0 %5129
          %5131 = vrot.lane.b32.xlu0 %v3508, 8
          %v5132 = vpop.permute.xlu0 %5131
          %5133 = vrot.lane.b32.xlu0 %v3509, 8
          %v5134 = vpop.permute.xlu0 %5133
          %5135 = vrot.lane.b32.xlu0 %v3510, 8
          %v5136 = vpop.permute.xlu0 %5135
          %5137 = vrot.lane.b32.xlu0 %v3511, 8
          %v5138 = vpop.permute.xlu0 %5137
          %5139 = vrot.lane.b32.xlu0 %v3512, 8
          %v5140 = vpop.permute.xlu0 %5139
          %5141 = vrot.lane.b32.xlu0 %v3513, 8
          %v5142 = vpop.permute.xlu0 %5141
          %5143 = vrot.lane.b32.xlu0 %v3514, 8
          %v5144 = vpop.permute.xlu0 %5143
          %5145 = vrot.lane.b32.xlu0 %v3515, 8
          %v5146 = vpop.permute.xlu0 %5145
          %5147 = vrot.lane.b32.xlu0 %v3516, 8
          %v5148 = vpop.permute.xlu0 %5147
          %5149 = vrot.lane.b32.xlu0 %v3517, 8
          %v5150 = vpop.permute.xlu0 %5149
          %5151 = vrot.lane.b32.xlu0 %v3518, 8
          %v5152 = vpop.permute.xlu0 %5151
          %5153 = vrot.lane.b32.xlu0 %v3519, 8
          %v5154 = vpop.permute.xlu0 %5153
          %5155 = vrot.lane.b32.xlu0 %v3520, 8
          %v5156 = vpop.permute.xlu0 %5155
          %5157 = vrot.lane.b32.xlu0 %v3521, 8
          %v5158 = vpop.permute.xlu0 %5157
          %5159 = vrot.lane.b32.xlu0 %v3522, 8
          %v5160 = vpop.permute.xlu0 %5159
          %5161 = vrot.lane.b32.xlu0 %v3523, 8
          %v5162 = vpop.permute.xlu0 %5161
          %5163 = vrot.lane.b32.xlu0 %v3524, 8
          %v5164 = vpop.permute.xlu0 %5163
          %5165 = vrot.lane.b32.xlu0 %v3525, 8
          %v5166 = vpop.permute.xlu0 %5165
          %5167 = vrot.lane.b32.xlu0 %v3526, 8
          %v5168 = vpop.permute.xlu0 %5167
          %5169 = vrot.lane.b32.xlu0 %v3527, 8
          %v5170 = vpop.permute.xlu0 %5169
          %5171 = vrot.lane.b32.xlu0 %v3528, 8
          %v5172 = vpop.permute.xlu0 %5171
          %5173 = vrot.lane.b32.xlu0 %v3529, 8
          %v5174 = vpop.permute.xlu0 %5173
          %5175 = vrot.lane.b32.xlu0 %v3530, 8
          %v5176 = vpop.permute.xlu0 %5175
          %5177 = vrot.lane.b32.xlu0 %v3531, 8
          %v5178 = vpop.permute.xlu0 %5177
          %5179 = vrot.lane.b32.xlu0 %v3532, 8
          %v5180 = vpop.permute.xlu0 %5179
          %5181 = vrot.lane.b32.xlu0 %v3533, 8
          %v5182 = vpop.permute.xlu0 %5181
          %5183 = vrot.lane.b32.xlu0 %v3534, 8
          %v5184 = vpop.permute.xlu0 %5183
          %5185 = vrot.lane.b32.xlu0 %v3535, 8
          %v5186 = vpop.permute.xlu0 %5185
          %5187 = vrot.lane.b32.xlu0 %v3536, 8
          %v5188 = vpop.permute.xlu0 %5187
          %5189 = vrot.lane.b32.xlu0 %v3537, 8
          %v5190 = vpop.permute.xlu0 %5189
          %5191 = vrot.lane.b32.xlu0 %v3538, 8
          %v5192 = vpop.permute.xlu0 %5191
          %5193 = vrot.lane.b32.xlu0 %v3539, 8
          %v5194 = vpop.permute.xlu0 %5193
          %5195 = vrot.lane.b32.xlu0 %v3540, 8
          %v5196 = vpop.permute.xlu0 %5195
          %5197 = vrot.lane.b32.xlu0 %v3541, 8
          %v5198 = vpop.permute.xlu0 %5197
          %5199 = vrot.lane.b32.xlu0 %v3542, 8
          %v5200 = vpop.permute.xlu0 %5199
          %5201 = vrot.lane.b32.xlu0 %v3543, 8
          %v5202 = vpop.permute.xlu0 %5201
          %5203 = vrot.lane.b32.xlu0 %v3544, 8
          %v5204 = vpop.permute.xlu0 %5203
          %5205 = vrot.lane.b32.xlu0 %v3545, 8
          %v5206 = vpop.permute.xlu0 %5205
          %5207 = vrot.lane.b32.xlu0 %v3546, 8
          %v5208 = vpop.permute.xlu0 %5207
          %5209 = vrot.lane.b32.xlu0 %v3547, 8
          %v5210 = vpop.permute.xlu0 %5209
          %5211 = vrot.lane.b32.xlu0 %v3548, 8
          %v5212 = vpop.permute.xlu0 %5211
          %v5277 = vsel %vm2845, %v4894, %v5086
          %v5278 = vsel %vm2846, %v4896, %v5088
          %v5279 = vsel %vm2847, %v4898, %v5090
          %v5280 = vsel %vm2848, %v4900, %v5092
          %v5281 = vsel %vm2849, %v4902, %v5094
          %v5282 = vsel %vm2850, %v4904, %v5096
          %v5283 = vsel %vm2851, %v4906, %v5098
          %v5284 = vsel %vm2852, %v4908, %v5100
          %v5285 = vsel %vm2853, %v4910, %v5102
          %v5286 = vsel %vm2854, %v4912, %v5104
          %v5287 = vsel %vm2855, %v4914, %v5106
          %v5288 = vsel %vm2856, %v4916, %v5108
          %v5289 = vsel %vm2857, %v4918, %v5110
          %v5290 = vsel %vm2858, %v4920, %v5112
          %v5291 = vsel %vm2859, %v4922, %v5114
          %v5292 = vsel %vm2860, %v4924, %v5116
          %v5293 = vsel %vm2861, %v4926, %v5118
          %v5294 = vsel %vm2862, %v4928, %v5120
          %v5295 = vsel %vm2863, %v4930, %v5122
          %v5296 = vsel %vm2864, %v4932, %v5124
          %v5297 = vsel %vm2865, %v4934, %v5126
          %v5298 = vsel %vm2866, %v4936, %v5128
          %v5299 = vsel %vm2867, %v4938, %v5130
          %v5300 = vsel %vm2868, %v4940, %v5132
          %v5301 = vsel %vm2869, %v4942, %v5134
          %v5302 = vsel %vm2870, %v4944, %v5136
          %v5303 = vsel %vm2871, %v4946, %v5138
          %v5304 = vsel %vm2872, %v4948, %v5140
          %v5305 = vsel %vm2873, %v4950, %v5142
          %v5306 = vsel %vm2874, %v4952, %v5144
          %v5307 = vsel %vm2875, %v4954, %v5146
          %v5308 = vsel %vm2876, %v4956, %v5148
          %v5309 = vsel %vm2877, %v4958, %v5150
          %v5310 = vsel %vm2878, %v4960, %v5152
          %v5311 = vsel %vm2879, %v4962, %v5154
          %v5312 = vsel %vm2880, %v4964, %v5156
          %v5313 = vsel %vm2881, %v4966, %v5158
          %v5314 = vsel %vm2882, %v4968, %v5160
          %v5315 = vsel %vm2883, %v4970, %v5162
          %v5316 = vsel %vm2884, %v4972, %v5164
          %v5317 = vsel %vm2885, %v4974, %v5166
          %v5318 = vsel %vm2886, %v4976, %v5168
          %v5319 = vsel %vm2887, %v4978, %v5170
          %v5320 = vsel %vm2888, %v4980, %v5172
          %v5321 = vsel %vm2889, %v4982, %v5174
          %v5322 = vsel %vm2890, %v4984, %v5176
          %v5323 = vsel %vm2891, %v4986, %v5178
          %v5324 = vsel %vm2892, %v4988, %v5180
          %v5325 = vsel %vm2893, %v4990, %v5182
          %v5326 = vsel %vm2894, %v4992, %v5184
          %v5327 = vsel %vm2895, %v4994, %v5186
          %v5328 = vsel %vm2896, %v4996, %v5188
          %v5329 = vsel %vm2897, %v4998, %v5190
          %v5330 = vsel %vm2898, %v5000, %v5192
          %v5331 = vsel %vm2899, %v5002, %v5194
          %v5332 = vsel %vm2900, %v5004, %v5196
          %v5333 = vsel %vm2901, %v5006, %v5198
          %v5334 = vsel %vm2902, %v5008, %v5200
          %v5335 = vsel %vm2903, %v5010, %v5202
          %v5336 = vsel %vm2904, %v5012, %v5204
          %v5337 = vsel %vm2905, %v5014, %v5206
          %v5338 = vsel %vm2906, %v5016, %v5208
          %v5339 = vsel %vm2907, %v5018, %v5210
          %v5340 = vsel %vm2908, %v5020, %v5212
          %vm5341 = vcmask 64512
          %5342 = vst.msk [vmem:[%s319] sm:$0xff] %vm5341, %v4829
          %5343 = vst.msk [vmem:[%s319 + $0x8] sm:$0xff] %vm5341, %v4830
          %5344 = vst.msk [vmem:[%s319 + $0x10] sm:$0xff] %vm5341, %v4831
          %5345 = vst.msk [vmem:[%s319 + $0x18] sm:$0xff] %vm5341, %v4832
          %5346 = vst.msk [vmem:[%s319 + $0x20] sm:$0xff] %vm5341, %v4833
          %5347 = vst.msk [vmem:[%s319 + $0x28] sm:$0xff] %vm5341, %v4834
          %5348 = vst.msk [vmem:[%s319 + $0x30] sm:$0xff] %vm5341, %v4835
          %5349 = vst.msk [vmem:[%s319 + $0x38] sm:$0xff] %vm5341, %v4836
          %5350 = vst.msk [vmem:[%s319 + $0x40] sm:$0xff] %vm5341, %v4837
          %5351 = vst.msk [vmem:[%s319 + $0x48] sm:$0xff] %vm5341, %v4838
          %5352 = vst.msk [vmem:[%s319 + $0x50] sm:$0xff] %vm5341, %v4839
          %5353 = vst.msk [vmem:[%s319 + $0x58] sm:$0xff] %vm5341, %v4840
          %5354 = vst.msk [vmem:[%s319 + $0x60] sm:$0xff] %vm5341, %v4841
          %5355 = vst.msk [vmem:[%s319 + $0x68] sm:$0xff] %vm5341, %v4842
          %5356 = vst.msk [vmem:[%s319 + $0x70] sm:$0xff] %vm5341, %v4843
          %5357 = vst.msk [vmem:[%s319 + $0x78] sm:$0xff] %vm5341, %v4844
          %5358 = vst.msk [vmem:[%s319 + $0x80] sm:$0xff] %vm5341, %v4845
          %5359 = vst.msk [vmem:[%s319 + $0x88] sm:$0xff] %vm5341, %v4846
          %5360 = vst.msk [vmem:[%s319 + $0x90] sm:$0xff] %vm5341, %v4847
          %5361 = vst.msk [vmem:[%s319 + $0x98] sm:$0xff] %vm5341, %v4848
          %5362 = vst.msk [vmem:[%s319 + $0xa0] sm:$0xff] %vm5341, %v4849
          %5363 = vst.msk [vmem:[%s319 + $0xa8] sm:$0xff] %vm5341, %v4850
          %5364 = vst.msk [vmem:[%s319 + $0xb0] sm:$0xff] %vm5341, %v4851
          %5365 = vst.msk [vmem:[%s319 + $0xb8] sm:$0xff] %vm5341, %v4852
          %5366 = vst.msk [vmem:[%s319 + $0xc0] sm:$0xff] %vm5341, %v4853
          %5367 = vst.msk [vmem:[%s319 + $0xc8] sm:$0xff] %vm5341, %v4854
          %5368 = vst.msk [vmem:[%s319 + $0xd0] sm:$0xff] %vm5341, %v4855
          %5369 = vst.msk [vmem:[%s319 + $0xd8] sm:$0xff] %vm5341, %v4856
          %5370 = vst.msk [vmem:[%s319 + $0xe0] sm:$0xff] %vm5341, %v4857
          %5371 = vst.msk [vmem:[%s319 + $0xe8] sm:$0xff] %vm5341, %v4858
          %5372 = vst.msk [vmem:[%s319 + $0xf0] sm:$0xff] %vm5341, %v4859
          %5373 = vst.msk [vmem:[%s319 + $0xf8] sm:$0xff] %vm5341, %v4860
          %5374 = vst.msk [vmem:[%s319 + $0x100] sm:$0xff] %vm5341, %v4861
          %5375 = vst.msk [vmem:[%s319 + $0x108] sm:$0xff] %vm5341, %v4862
          %5376 = vst.msk [vmem:[%s319 + $0x110] sm:$0xff] %vm5341, %v4863
          %5377 = vst.msk [vmem:[%s319 + $0x118] sm:$0xff] %vm5341, %v4864
          %5378 = vst.msk [vmem:[%s319 + $0x120] sm:$0xff] %vm5341, %v4865
          %5379 = vst.msk [vmem:[%s319 + $0x128] sm:$0xff] %vm5341, %v4866
          %5380 = vst.msk [vmem:[%s319 + $0x130] sm:$0xff] %vm5341, %v4867
          %5381 = vst.msk [vmem:[%s319 + $0x138] sm:$0xff] %vm5341, %v4868
          %5382 = vst.msk [vmem:[%s319 + $0x140] sm:$0xff] %vm5341, %v4869
          %5383 = vst.msk [vmem:[%s319 + $0x148] sm:$0xff] %vm5341, %v4870
          %5384 = vst.msk [vmem:[%s319 + $0x150] sm:$0xff] %vm5341, %v4871
          %5385 = vst.msk [vmem:[%s319 + $0x158] sm:$0xff] %vm5341, %v4872
          %5386 = vst.msk [vmem:[%s319 + $0x160] sm:$0xff] %vm5341, %v4873
          %5387 = vst.msk [vmem:[%s319 + $0x168] sm:$0xff] %vm5341, %v4874
          %5388 = vst.msk [vmem:[%s319 + $0x170] sm:$0xff] %vm5341, %v4875
          %5389 = vst.msk [vmem:[%s319 + $0x178] sm:$0xff] %vm5341, %v4876
          %5390 = vst.msk [vmem:[%s319 + $0x180] sm:$0xff] %vm5341, %v4877
          %5391 = vst.msk [vmem:[%s319 + $0x188] sm:$0xff] %vm5341, %v4878
          %5392 = vst.msk [vmem:[%s319 + $0x190] sm:$0xff] %vm5341, %v4879
          %5393 = vst.msk [vmem:[%s319 + $0x198] sm:$0xff] %vm5341, %v4880
          %5394 = vst.msk [vmem:[%s319 + $0x1a0] sm:$0xff] %vm5341, %v4881
          %5395 = vst.msk [vmem:[%s319 + $0x1a8] sm:$0xff] %vm5341, %v4882
          %5396 = vst.msk [vmem:[%s319 + $0x1b0] sm:$0xff] %vm5341, %v4883
          %5397 = vst.msk [vmem:[%s319 + $0x1b8] sm:$0xff] %vm5341, %v4884
          %5398 = vst.msk [vmem:[%s319 + $0x1c0] sm:$0xff] %vm5341, %v4885
          %5399 = vst.msk [vmem:[%s319 + $0x1c8] sm:$0xff] %vm5341, %v4886
          %5400 = vst.msk [vmem:[%s319 + $0x1d0] sm:$0xff] %vm5341, %v4887
          %5401 = vst.msk [vmem:[%s319 + $0x1d8] sm:$0xff] %vm5341, %v4888
          %5402 = vst.msk [vmem:[%s319 + $0x1e0] sm:$0xff] %vm5341, %v4889
          %5403 = vst.msk [vmem:[%s319 + $0x1e8] sm:$0xff] %vm5341, %v4890
          %5404 = vst.msk [vmem:[%s319 + $0x1f0] sm:$0xff] %vm5341, %v4891
          %5405 = vst.msk [vmem:[%s319 + $0x1f8] sm:$0xff] %vm5341, %v4892
          %5470 = vrot.lane.b32.xlu0 %v5277, 120
          %v5471 = vpop.permute.xlu0 %5470
          %5472 = vrot.lane.b32.xlu0 %v5278, 120
          %v5473 = vpop.permute.xlu0 %5472
          %5474 = vrot.lane.b32.xlu0 %v5279, 120
          %v5475 = vpop.permute.xlu0 %5474
          %5476 = vrot.lane.b32.xlu0 %v5280, 120
          %v5477 = vpop.permute.xlu0 %5476
          %5478 = vrot.lane.b32.xlu0 %v5281, 120
          %v5479 = vpop.permute.xlu0 %5478
          %5480 = vrot.lane.b32.xlu0 %v5282, 120
          %v5481 = vpop.permute.xlu0 %5480
          %5482 = vrot.lane.b32.xlu0 %v5283, 120
          %v5483 = vpop.permute.xlu0 %5482
          %5484 = vrot.lane.b32.xlu0 %v5284, 120
          %v5485 = vpop.permute.xlu0 %5484
          %5486 = vrot.lane.b32.xlu0 %v5285, 120
          %v5487 = vpop.permute.xlu0 %5486
          %5488 = vrot.lane.b32.xlu0 %v5286, 120
          %v5489 = vpop.permute.xlu0 %5488
          %5490 = vrot.lane.b32.xlu0 %v5287, 120
          %v5491 = vpop.permute.xlu0 %5490
          %5492 = vrot.lane.b32.xlu0 %v5288, 120
          %v5493 = vpop.permute.xlu0 %5492
          %5494 = vrot.lane.b32.xlu0 %v5289, 120
          %v5495 = vpop.permute.xlu0 %5494
          %5496 = vrot.lane.b32.xlu0 %v5290, 120
          %v5497 = vpop.permute.xlu0 %5496
          %5498 = vrot.lane.b32.xlu0 %v5291, 120
          %v5499 = vpop.permute.xlu0 %5498
          %5500 = vrot.lane.b32.xlu0 %v5292, 120
          %v5501 = vpop.permute.xlu0 %5500
          %5502 = vrot.lane.b32.xlu0 %v5293, 120
          %v5503 = vpop.permute.xlu0 %5502
          %5504 = vrot.lane.b32.xlu0 %v5294, 120
          %v5505 = vpop.permute.xlu0 %5504
          %5506 = vrot.lane.b32.xlu0 %v5295, 120
          %v5507 = vpop.permute.xlu0 %5506
          %5508 = vrot.lane.b32.xlu0 %v5296, 120
          %v5509 = vpop.permute.xlu0 %5508
          %5510 = vrot.lane.b32.xlu0 %v5297, 120
          %v5511 = vpop.permute.xlu0 %5510
          %5512 = vrot.lane.b32.xlu0 %v5298, 120
          %v5513 = vpop.permute.xlu0 %5512
          %5514 = vrot.lane.b32.xlu0 %v5299, 120
          %v5515 = vpop.permute.xlu0 %5514
          %5516 = vrot.lane.b32.xlu0 %v5300, 120
          %v5517 = vpop.permute.xlu0 %5516
          %5518 = vrot.lane.b32.xlu0 %v5301, 120
          %v5519 = vpop.permute.xlu0 %5518
          %5520 = vrot.lane.b32.xlu0 %v5302, 120
          %v5521 = vpop.permute.xlu0 %5520
          %5522 = vrot.lane.b32.xlu0 %v5303, 120
          %v5523 = vpop.permute.xlu0 %5522
          %5524 = vrot.lane.b32.xlu0 %v5304, 120
          %v5525 = vpop.permute.xlu0 %5524
          %5526 = vrot.lane.b32.xlu0 %v5305, 120
          %v5527 = vpop.permute.xlu0 %5526
          %5528 = vrot.lane.b32.xlu0 %v5306, 120
          %v5529 = vpop.permute.xlu0 %5528
          %5530 = vrot.lane.b32.xlu0 %v5307, 120
          %v5531 = vpop.permute.xlu0 %5530
          %5532 = vrot.lane.b32.xlu0 %v5308, 120
          %v5533 = vpop.permute.xlu0 %5532
          %5534 = vrot.lane.b32.xlu0 %v5309, 120
          %v5535 = vpop.permute.xlu0 %5534
          %5536 = vrot.lane.b32.xlu0 %v5310, 120
          %v5537 = vpop.permute.xlu0 %5536
          %5538 = vrot.lane.b32.xlu0 %v5311, 120
          %v5539 = vpop.permute.xlu0 %5538
          %5540 = vrot.lane.b32.xlu0 %v5312, 120
          %v5541 = vpop.permute.xlu0 %5540
          %5542 = vrot.lane.b32.xlu0 %v5313, 120
          %v5543 = vpop.permute.xlu0 %5542
          %5544 = vrot.lane.b32.xlu0 %v5314, 120
          %v5545 = vpop.permute.xlu0 %5544
          %5546 = vrot.lane.b32.xlu0 %v5315, 120
          %v5547 = vpop.permute.xlu0 %5546
          %5548 = vrot.lane.b32.xlu0 %v5316, 120
          %v5549 = vpop.permute.xlu0 %5548
          %5550 = vrot.lane.b32.xlu0 %v5317, 120
          %v5551 = vpop.permute.xlu0 %5550
          %5552 = vrot.lane.b32.xlu0 %v5318, 120
          %v5553 = vpop.permute.xlu0 %5552
          %5554 = vrot.lane.b32.xlu0 %v5319, 120
          %v5555 = vpop.permute.xlu0 %5554
          %5556 = vrot.lane.b32.xlu0 %v5320, 120
          %v5557 = vpop.permute.xlu0 %5556
          %5558 = vrot.lane.b32.xlu0 %v5321, 120
          %v5559 = vpop.permute.xlu0 %5558
          %5560 = vrot.lane.b32.xlu0 %v5322, 120
          %v5561 = vpop.permute.xlu0 %5560
          %5562 = vrot.lane.b32.xlu0 %v5323, 120
          %v5563 = vpop.permute.xlu0 %5562
          %5564 = vrot.lane.b32.xlu0 %v5324, 120
          %v5565 = vpop.permute.xlu0 %5564
          %5566 = vrot.lane.b32.xlu0 %v5325, 120
          %v5567 = vpop.permute.xlu0 %5566
          %5568 = vrot.lane.b32.xlu0 %v5326, 120
          %v5569 = vpop.permute.xlu0 %5568
          %5570 = vrot.lane.b32.xlu0 %v5327, 120
          %v5571 = vpop.permute.xlu0 %5570
          %5572 = vrot.lane.b32.xlu0 %v5328, 120
          %v5573 = vpop.permute.xlu0 %5572
          %5574 = vrot.lane.b32.xlu0 %v5329, 120
          %v5575 = vpop.permute.xlu0 %5574
          %5576 = vrot.lane.b32.xlu0 %v5330, 120
          %v5577 = vpop.permute.xlu0 %5576
          %5578 = vrot.lane.b32.xlu0 %v5331, 120
          %v5579 = vpop.permute.xlu0 %5578
          %5580 = vrot.lane.b32.xlu0 %v5332, 120
          %v5581 = vpop.permute.xlu0 %5580
          %5582 = vrot.lane.b32.xlu0 %v5333, 120
          %v5583 = vpop.permute.xlu0 %5582
          %5584 = vrot.lane.b32.xlu0 %v5334, 120
          %v5585 = vpop.permute.xlu0 %5584
          %5586 = vrot.lane.b32.xlu0 %v5335, 120
          %v5587 = vpop.permute.xlu0 %5586
          %5588 = vrot.lane.b32.xlu0 %v5336, 120
          %v5589 = vpop.permute.xlu0 %5588
          %5590 = vrot.lane.b32.xlu0 %v5337, 120
          %v5591 = vpop.permute.xlu0 %5590
          %5592 = vrot.lane.b32.xlu0 %v5338, 120
          %v5593 = vpop.permute.xlu0 %5592
          %5594 = vrot.lane.b32.xlu0 %v5339, 120
          %v5595 = vpop.permute.xlu0 %5594
          %5596 = vrot.lane.b32.xlu0 %v5340, 120
          %v5597 = vpop.permute.xlu0 %5596
          %vm5662 = vcmask 7168
          %5663 = vst.msk [vmem:[%s325] sm:$0xff] %vm5662, %v5471
          %5664 = vst.msk [vmem:[%s325 + $0x8] sm:$0xff] %vm5662, %v5473
          %5665 = vst.msk [vmem:[%s325 + $0x10] sm:$0xff] %vm5662, %v5475
          %5666 = vst.msk [vmem:[%s325 + $0x18] sm:$0xff] %vm5662, %v5477
          %5667 = vst.msk [vmem:[%s325 + $0x20] sm:$0xff] %vm5662, %v5479
          %5668 = vst.msk [vmem:[%s325 + $0x28] sm:$0xff] %vm5662, %v5481
          %5669 = vst.msk [vmem:[%s325 + $0x30] sm:$0xff] %vm5662, %v5483
          %5670 = vst.msk [vmem:[%s325 + $0x38] sm:$0xff] %vm5662, %v5485
          %5671 = vst.msk [vmem:[%s325 + $0x40] sm:$0xff] %vm5662, %v5487
          %5672 = vst.msk [vmem:[%s325 + $0x48] sm:$0xff] %vm5662, %v5489
          %5673 = vst.msk [vmem:[%s325 + $0x50] sm:$0xff] %vm5662, %v5491
          %5674 = vst.msk [vmem:[%s325 + $0x58] sm:$0xff] %vm5662, %v5493
          %5675 = vst.msk [vmem:[%s325 + $0x60] sm:$0xff] %vm5662, %v5495
          %5676 = vst.msk [vmem:[%s325 + $0x68] sm:$0xff] %vm5662, %v5497
          %5677 = vst.msk [vmem:[%s325 + $0x70] sm:$0xff] %vm5662, %v5499
          %5678 = vst.msk [vmem:[%s325 + $0x78] sm:$0xff] %vm5662, %v5501
          %5679 = vst.msk [vmem:[%s325 + $0x80] sm:$0xff] %vm5662, %v5503
          %5680 = vst.msk [vmem:[%s325 + $0x88] sm:$0xff] %vm5662, %v5505
          %5681 = vst.msk [vmem:[%s325 + $0x90] sm:$0xff] %vm5662, %v5507
          %5682 = vst.msk [vmem:[%s325 + $0x98] sm:$0xff] %vm5662, %v5509
          %5683 = vst.msk [vmem:[%s325 + $0xa0] sm:$0xff] %vm5662, %v5511
          %5684 = vst.msk [vmem:[%s325 + $0xa8] sm:$0xff] %vm5662, %v5513
          %5685 = vst.msk [vmem:[%s325 + $0xb0] sm:$0xff] %vm5662, %v5515
          %5686 = vst.msk [vmem:[%s325 + $0xb8] sm:$0xff] %vm5662, %v5517
          %5687 = vst.msk [vmem:[%s325 + $0xc0] sm:$0xff] %vm5662, %v5519
          %5688 = vst.msk [vmem:[%s325 + $0xc8] sm:$0xff] %vm5662, %v5521
          %5689 = vst.msk [vmem:[%s325 + $0xd0] sm:$0xff] %vm5662, %v5523
          %5690 = vst.msk [vmem:[%s325 + $0xd8] sm:$0xff] %vm5662, %v5525
          %5691 = vst.msk [vmem:[%s325 + $0xe0] sm:$0xff] %vm5662, %v5527
          %5692 = vst.msk [vmem:[%s325 + $0xe8] sm:$0xff] %vm5662, %v5529
          %5693 = vst.msk [vmem:[%s325 + $0xf0] sm:$0xff] %vm5662, %v5531
          %5694 = vst.msk [vmem:[%s325 + $0xf8] sm:$0xff] %vm5662, %v5533
          %5695 = vst.msk [vmem:[%s325 + $0x100] sm:$0xff] %vm5662, %v5535
          %5696 = vst.msk [vmem:[%s325 + $0x108] sm:$0xff] %vm5662, %v5537
          %5697 = vst.msk [vmem:[%s325 + $0x110] sm:$0xff] %vm5662, %v5539
          %5698 = vst.msk [vmem:[%s325 + $0x118] sm:$0xff] %vm5662, %v5541
          %5699 = vst.msk [vmem:[%s325 + $0x120] sm:$0xff] %vm5662, %v5543
          %5700 = vst.msk [vmem:[%s325 + $0x128] sm:$0xff] %vm5662, %v5545
          %5701 = vst.msk [vmem:[%s325 + $0x130] sm:$0xff] %vm5662, %v5547
          %5702 = vst.msk [vmem:[%s325 + $0x138] sm:$0xff] %vm5662, %v5549
          %5703 = vst.msk [vmem:[%s325 + $0x140] sm:$0xff] %vm5662, %v5551
          %5704 = vst.msk [vmem:[%s325 + $0x148] sm:$0xff] %vm5662, %v5553
          %5705 = vst.msk [vmem:[%s325 + $0x150] sm:$0xff] %vm5662, %v5555
          %5706 = vst.msk [vmem:[%s325 + $0x158] sm:$0xff] %vm5662, %v5557
          %5707 = vst.msk [vmem:[%s325 + $0x160] sm:$0xff] %vm5662, %v5559
          %5708 = vst.msk [vmem:[%s325 + $0x168] sm:$0xff] %vm5662, %v5561
          %5709 = vst.msk [vmem:[%s325 + $0x170] sm:$0xff] %vm5662, %v5563
          %5710 = vst.msk [vmem:[%s325 + $0x178] sm:$0xff] %vm5662, %v5565
          %5711 = vst.msk [vmem:[%s325 + $0x180] sm:$0xff] %vm5662, %v5567
          %5712 = vst.msk [vmem:[%s325 + $0x188] sm:$0xff] %vm5662, %v5569
          %5713 = vst.msk [vmem:[%s325 + $0x190] sm:$0xff] %vm5662, %v5571
          %5714 = vst.msk [vmem:[%s325 + $0x198] sm:$0xff] %vm5662, %v5573
          %5715 = vst.msk [vmem:[%s325 + $0x1a0] sm:$0xff] %vm5662, %v5575
          %5716 = vst.msk [vmem:[%s325 + $0x1a8] sm:$0xff] %vm5662, %v5577
          %5717 = vst.msk [vmem:[%s325 + $0x1b0] sm:$0xff] %vm5662, %v5579
          %5718 = vst.msk [vmem:[%s325 + $0x1b8] sm:$0xff] %vm5662, %v5581
          %5719 = vst.msk [vmem:[%s325 + $0x1c0] sm:$0xff] %vm5662, %v5583
          %5720 = vst.msk [vmem:[%s325 + $0x1c8] sm:$0xff] %vm5662, %v5585
          %5721 = vst.msk [vmem:[%s325 + $0x1d0] sm:$0xff] %vm5662, %v5587
          %5722 = vst.msk [vmem:[%s325 + $0x1d8] sm:$0xff] %vm5662, %v5589
          %5723 = vst.msk [vmem:[%s325 + $0x1e0] sm:$0xff] %vm5662, %v5591
          %5724 = vst.msk [vmem:[%s325 + $0x1e8] sm:$0xff] %vm5662, %v5593
          %5725 = vst.msk [vmem:[%s325 + $0x1f0] sm:$0xff] %vm5662, %v5595
          %5726 = vst.msk [vmem:[%s325 + $0x1f8] sm:$0xff] %vm5662, %v5597
        $region48: #{tpu_custom_call.1} parent=39 // pred_fallthru
          _
      $region40: #{tpu_custom_call.1} parent=35 // pred_fallthru
        _
      %p5727 = scmp.le.s32.totalorder %s328, 0
      // Predicated region
      $region49: #{tpu_custom_call.1} parent=35 // pred_check
        %p5728 = pneg %p5727
      $region50: #{tpu_custom_call.1} parent=35 // pred_check_branch
        %5730 = sbr.rel (%p5728) target = $region52
      $region51: #{tpu_custom_call.1} parent=35 // pred_region
        %p5731 = scmp.eq.s32.totalorder %s29, 0
        // Predicated region
        $region53: #{tpu_custom_call.1} parent=51 // pred_check
          %p5732 = pneg %p5731
        $region54: #{tpu_custom_call.1} parent=51 // pred_check_branch
          %5734 = sbr.rel (%p5732) target = $region56
        $region55: #{tpu_custom_call.1} parent=51 // pred_region
          %v5735 = vld [vmem:[%s307] sm:$0xff]
          %v5736 = vld [vmem:[%s307 + $0x8] sm:$0xff]
          %v5737 = vld [vmem:[%s307 + $0x10] sm:$0xff]
          %v5738 = vld [vmem:[%s307 + $0x18] sm:$0xff]
          %v5739 = vld [vmem:[%s307 + $0x20] sm:$0xff]
          %v5740 = vld [vmem:[%s307 + $0x28] sm:$0xff]
          %v5741 = vld [vmem:[%s307 + $0x30] sm:$0xff]
          %v5742 = vld [vmem:[%s307 + $0x38] sm:$0xff]
          %v5743 = vld [vmem:[%s307 + $0x40] sm:$0xff]
          %v5744 = vld [vmem:[%s307 + $0x48] sm:$0xff]
          %v5745 = vld [vmem:[%s307 + $0x50] sm:$0xff]
          %v5746 = vld [vmem:[%s307 + $0x58] sm:$0xff]
          %v5747 = vld [vmem:[%s307 + $0x60] sm:$0xff]
          %v5748 = vld [vmem:[%s307 + $0x68] sm:$0xff]
          %v5749 = vld [vmem:[%s307 + $0x70] sm:$0xff]
          %v5750 = vld [vmem:[%s307 + $0x78] sm:$0xff]
          %v5751 = vld [vmem:[%s307 + $0x80] sm:$0xff]
          %v5752 = vld [vmem:[%s307 + $0x88] sm:$0xff]
          %v5753 = vld [vmem:[%s307 + $0x90] sm:$0xff]
          %v5754 = vld [vmem:[%s307 + $0x98] sm:$0xff]
          %v5755 = vld [vmem:[%s307 + $0xa0] sm:$0xff]
          %v5756 = vld [vmem:[%s307 + $0xa8] sm:$0xff]
          %v5757 = vld [vmem:[%s307 + $0xb0] sm:$0xff]
          %v5758 = vld [vmem:[%s307 + $0xb8] sm:$0xff]
          %v5759 = vld [vmem:[%s307 + $0xc0] sm:$0xff]
          %v5760 = vld [vmem:[%s307 + $0xc8] sm:$0xff]
          %v5761 = vld [vmem:[%s307 + $0xd0] sm:$0xff]
          %v5762 = vld [vmem:[%s307 + $0xd8] sm:$0xff]
          %v5763 = vld [vmem:[%s307 + $0xe0] sm:$0xff]
          %v5764 = vld [vmem:[%s307 + $0xe8] sm:$0xff]
          %v5765 = vld [vmem:[%s307 + $0xf0] sm:$0xff]
          %v5766 = vld [vmem:[%s307 + $0xf8] sm:$0xff]
          %v5767 = vld [vmem:[%s307 + $0x100] sm:$0xff]
          %v5768 = vld [vmem:[%s307 + $0x108] sm:$0xff]
          %v5769 = vld [vmem:[%s307 + $0x110] sm:$0xff]
          %v5770 = vld [vmem:[%s307 + $0x118] sm:$0xff]
          %v5771 = vld [vmem:[%s307 + $0x120] sm:$0xff]
          %v5772 = vld [vmem:[%s307 + $0x128] sm:$0xff]
          %v5773 = vld [vmem:[%s307 + $0x130] sm:$0xff]
          %v5774 = vld [vmem:[%s307 + $0x138] sm:$0xff]
          %v5775 = vld [vmem:[%s307 + $0x140] sm:$0xff]
          %v5776 = vld [vmem:[%s307 + $0x148] sm:$0xff]
          %v5777 = vld [vmem:[%s307 + $0x150] sm:$0xff]
          %v5778 = vld [vmem:[%s307 + $0x158] sm:$0xff]
          %v5779 = vld [vmem:[%s307 + $0x160] sm:$0xff]
          %v5780 = vld [vmem:[%s307 + $0x168] sm:$0xff]
          %v5781 = vld [vmem:[%s307 + $0x170] sm:$0xff]
          %v5782 = vld [vmem:[%s307 + $0x178] sm:$0xff]
          %v5783 = vld [vmem:[%s307 + $0x180] sm:$0xff]
          %v5784 = vld [vmem:[%s307 + $0x188] sm:$0xff]
          %v5785 = vld [vmem:[%s307 + $0x190] sm:$0xff]
          %v5786 = vld [vmem:[%s307 + $0x198] sm:$0xff]
          %v5787 = vld [vmem:[%s307 + $0x1a0] sm:$0xff]
          %v5788 = vld [vmem:[%s307 + $0x1a8] sm:$0xff]
          %v5789 = vld [vmem:[%s307 + $0x1b0] sm:$0xff]
          %v5790 = vld [vmem:[%s307 + $0x1b8] sm:$0xff]
          %v5791 = vld [vmem:[%s307 + $0x1c0] sm:$0xff]
          %v5792 = vld [vmem:[%s307 + $0x1c8] sm:$0xff]
          %v5793 = vld [vmem:[%s307 + $0x1d0] sm:$0xff]
          %v5794 = vld [vmem:[%s307 + $0x1d8] sm:$0xff]
          %v5795 = vld [vmem:[%s307 + $0x1e0] sm:$0xff]
          %v5796 = vld [vmem:[%s307 + $0x1e8] sm:$0xff]
          %v5797 = vld [vmem:[%s307 + $0x1f0] sm:$0xff]
          %v5798 = vld [vmem:[%s307 + $0x1f8] sm:$0xff]
          %vm5799 = vcmask 64512
          %5800 = vst.msk [vmem:[%s319] sm:$0xff] %vm5799, %v5735
          %5801 = vst.msk [vmem:[%s319 + $0x8] sm:$0xff] %vm5799, %v5736
          %5802 = vst.msk [vmem:[%s319 + $0x10] sm:$0xff] %vm5799, %v5737
          %5803 = vst.msk [vmem:[%s319 + $0x18] sm:$0xff] %vm5799, %v5738
          %5804 = vst.msk [vmem:[%s319 + $0x20] sm:$0xff] %vm5799, %v5739
          %5805 = vst.msk [vmem:[%s319 + $0x28] sm:$0xff] %vm5799, %v5740
          %5806 = vst.msk [vmem:[%s319 + $0x30] sm:$0xff] %vm5799, %v5741
          %5807 = vst.msk [vmem:[%s319 + $0x38] sm:$0xff] %vm5799, %v5742
          %5808 = vst.msk [vmem:[%s319 + $0x40] sm:$0xff] %vm5799, %v5743
          %5809 = vst.msk [vmem:[%s319 + $0x48] sm:$0xff] %vm5799, %v5744
          %5810 = vst.msk [vmem:[%s319 + $0x50] sm:$0xff] %vm5799, %v5745
          %5811 = vst.msk [vmem:[%s319 + $0x58] sm:$0xff] %vm5799, %v5746
          %5812 = vst.msk [vmem:[%s319 + $0x60] sm:$0xff] %vm5799, %v5747
          %5813 = vst.msk [vmem:[%s319 + $0x68] sm:$0xff] %vm5799, %v5748
          %5814 = vst.msk [vmem:[%s319 + $0x70] sm:$0xff] %vm5799, %v5749
          %5815 = vst.msk [vmem:[%s319 + $0x78] sm:$0xff] %vm5799, %v5750
          %5816 = vst.msk [vmem:[%s319 + $0x80] sm:$0xff] %vm5799, %v5751
          %5817 = vst.msk [vmem:[%s319 + $0x88] sm:$0xff] %vm5799, %v5752
          %5818 = vst.msk [vmem:[%s319 + $0x90] sm:$0xff] %vm5799, %v5753
          %5819 = vst.msk [vmem:[%s319 + $0x98] sm:$0xff] %vm5799, %v5754
          %5820 = vst.msk [vmem:[%s319 + $0xa0] sm:$0xff] %vm5799, %v5755
          %5821 = vst.msk [vmem:[%s319 + $0xa8] sm:$0xff] %vm5799, %v5756
          %5822 = vst.msk [vmem:[%s319 + $0xb0] sm:$0xff] %vm5799, %v5757
          %5823 = vst.msk [vmem:[%s319 + $0xb8] sm:$0xff] %vm5799, %v5758
          %5824 = vst.msk [vmem:[%s319 + $0xc0] sm:$0xff] %vm5799, %v5759
          %5825 = vst.msk [vmem:[%s319 + $0xc8] sm:$0xff] %vm5799, %v5760
          %5826 = vst.msk [vmem:[%s319 + $0xd0] sm:$0xff] %vm5799, %v5761
          %5827 = vst.msk [vmem:[%s319 + $0xd8] sm:$0xff] %vm5799, %v5762
          %5828 = vst.msk [vmem:[%s319 + $0xe0] sm:$0xff] %vm5799, %v5763
          %5829 = vst.msk [vmem:[%s319 + $0xe8] sm:$0xff] %vm5799, %v5764
          %5830 = vst.msk [vmem:[%s319 + $0xf0] sm:$0xff] %vm5799, %v5765
          %5831 = vst.msk [vmem:[%s319 + $0xf8] sm:$0xff] %vm5799, %v5766
          %5832 = vst.msk [vmem:[%s319 + $0x100] sm:$0xff] %vm5799, %v5767
          %5833 = vst.msk [vmem:[%s319 + $0x108] sm:$0xff] %vm5799, %v5768
          %5834 = vst.msk [vmem:[%s319 + $0x110] sm:$0xff] %vm5799, %v5769
          %5835 = vst.msk [vmem:[%s319 + $0x118] sm:$0xff] %vm5799, %v5770
          %5836 = vst.msk [vmem:[%s319 + $0x120] sm:$0xff] %vm5799, %v5771
          %5837 = vst.msk [vmem:[%s319 + $0x128] sm:$0xff] %vm5799, %v5772
          %5838 = vst.msk [vmem:[%s319 + $0x130] sm:$0xff] %vm5799, %v5773
          %5839 = vst.msk [vmem:[%s319 + $0x138] sm:$0xff] %vm5799, %v5774
          %5840 = vst.msk [vmem:[%s319 + $0x140] sm:$0xff] %vm5799, %v5775
          %5841 = vst.msk [vmem:[%s319 + $0x148] sm:$0xff] %vm5799, %v5776
          %5842 = vst.msk [vmem:[%s319 + $0x150] sm:$0xff] %vm5799, %v5777
          %5843 = vst.msk [vmem:[%s319 + $0x158] sm:$0xff] %vm5799, %v5778
          %5844 = vst.msk [vmem:[%s319 + $0x160] sm:$0xff] %vm5799, %v5779
          %5845 = vst.msk [vmem:[%s319 + $0x168] sm:$0xff] %vm5799, %v5780
          %5846 = vst.msk [vmem:[%s319 + $0x170] sm:$0xff] %vm5799, %v5781
          %5847 = vst.msk [vmem:[%s319 + $0x178] sm:$0xff] %vm5799, %v5782
          %5848 = vst.msk [vmem:[%s319 + $0x180] sm:$0xff] %vm5799, %v5783
          %5849 = vst.msk [vmem:[%s319 + $0x188] sm:$0xff] %vm5799, %v5784
          %5850 = vst.msk [vmem:[%s319 + $0x190] sm:$0xff] %vm5799, %v5785
          %5851 = vst.msk [vmem:[%s319 + $0x198] sm:$0xff] %vm5799, %v5786
          %5852 = vst.msk [vmem:[%s319 + $0x1a0] sm:$0xff] %vm5799, %v5787
          %5853 = vst.msk [vmem:[%s319 + $0x1a8] sm:$0xff] %vm5799, %v5788
          %5854 = vst.msk [vmem:[%s319 + $0x1b0] sm:$0xff] %vm5799, %v5789
          %5855 = vst.msk [vmem:[%s319 + $0x1b8] sm:$0xff] %vm5799, %v5790
          %5856 = vst.msk [vmem:[%s319 + $0x1c0] sm:$0xff] %vm5799, %v5791
          %5857 = vst.msk [vmem:[%s319 + $0x1c8] sm:$0xff] %vm5799, %v5792
          %5858 = vst.msk [vmem:[%s319 + $0x1d0] sm:$0xff] %vm5799, %v5793
          %5859 = vst.msk [vmem:[%s319 + $0x1d8] sm:$0xff] %vm5799, %v5794
          %5860 = vst.msk [vmem:[%s319 + $0x1e0] sm:$0xff] %vm5799, %v5795
          %5861 = vst.msk [vmem:[%s319 + $0x1e8] sm:$0xff] %vm5799, %v5796
          %5862 = vst.msk [vmem:[%s319 + $0x1f0] sm:$0xff] %vm5799, %v5797
          %5863 = vst.msk [vmem:[%s319 + $0x1f8] sm:$0xff] %vm5799, %v5798
          %v5864 = vld [vmem:[%s313] sm:$0xff]
          %v5865 = vld [vmem:[%s313 + $0x8] sm:$0xff]
          %v5866 = vld [vmem:[%s313 + $0x10] sm:$0xff]
          %v5867 = vld [vmem:[%s313 + $0x18] sm:$0xff]
          %v5868 = vld [vmem:[%s313 + $0x20] sm:$0xff]
          %v5869 = vld [vmem:[%s313 + $0x28] sm:$0xff]
          %v5870 = vld [vmem:[%s313 + $0x30] sm:$0xff]
          %v5871 = vld [vmem:[%s313 + $0x38] sm:$0xff]
          %v5872 = vld [vmem:[%s313 + $0x40] sm:$0xff]
          %v5873 = vld [vmem:[%s313 + $0x48] sm:$0xff]
          %v5874 = vld [vmem:[%s313 + $0x50] sm:$0xff]
          %v5875 = vld [vmem:[%s313 + $0x58] sm:$0xff]
          %v5876 = vld [vmem:[%s313 + $0x60] sm:$0xff]
          %v5877 = vld [vmem:[%s313 + $0x68] sm:$0xff]
          %v5878 = vld [vmem:[%s313 + $0x70] sm:$0xff]
          %v5879 = vld [vmem:[%s313 + $0x78] sm:$0xff]
          %v5880 = vld [vmem:[%s313 + $0x80] sm:$0xff]
          %v5881 = vld [vmem:[%s313 + $0x88] sm:$0xff]
          %v5882 = vld [vmem:[%s313 + $0x90] sm:$0xff]
          %v5883 = vld [vmem:[%s313 + $0x98] sm:$0xff]
          %v5884 = vld [vmem:[%s313 + $0xa0] sm:$0xff]
          %v5885 = vld [vmem:[%s313 + $0xa8] sm:$0xff]
          %v5886 = vld [vmem:[%s313 + $0xb0] sm:$0xff]
          %v5887 = vld [vmem:[%s313 + $0xb8] sm:$0xff]
          %v5888 = vld [vmem:[%s313 + $0xc0] sm:$0xff]
          %v5889 = vld [vmem:[%s313 + $0xc8] sm:$0xff]
          %v5890 = vld [vmem:[%s313 + $0xd0] sm:$0xff]
          %v5891 = vld [vmem:[%s313 + $0xd8] sm:$0xff]
          %v5892 = vld [vmem:[%s313 + $0xe0] sm:$0xff]
          %v5893 = vld [vmem:[%s313 + $0xe8] sm:$0xff]
          %v5894 = vld [vmem:[%s313 + $0xf0] sm:$0xff]
          %v5895 = vld [vmem:[%s313 + $0xf8] sm:$0xff]
          %v5896 = vld [vmem:[%s313 + $0x100] sm:$0xff]
          %v5897 = vld [vmem:[%s313 + $0x108] sm:$0xff]
          %v5898 = vld [vmem:[%s313 + $0x110] sm:$0xff]
          %v5899 = vld [vmem:[%s313 + $0x118] sm:$0xff]
          %v5900 = vld [vmem:[%s313 + $0x120] sm:$0xff]
          %v5901 = vld [vmem:[%s313 + $0x128] sm:$0xff]
          %v5902 = vld [vmem:[%s313 + $0x130] sm:$0xff]
          %v5903 = vld [vmem:[%s313 + $0x138] sm:$0xff]
          %v5904 = vld [vmem:[%s313 + $0x140] sm:$0xff]
          %v5905 = vld [vmem:[%s313 + $0x148] sm:$0xff]
          %v5906 = vld [vmem:[%s313 + $0x150] sm:$0xff]
          %v5907 = vld [vmem:[%s313 + $0x158] sm:$0xff]
          %v5908 = vld [vmem:[%s313 + $0x160] sm:$0xff]
          %v5909 = vld [vmem:[%s313 + $0x168] sm:$0xff]
          %v5910 = vld [vmem:[%s313 + $0x170] sm:$0xff]
          %v5911 = vld [vmem:[%s313 + $0x178] sm:$0xff]
          %v5912 = vld [vmem:[%s313 + $0x180] sm:$0xff]
          %v5913 = vld [vmem:[%s313 + $0x188] sm:$0xff]
          %v5914 = vld [vmem:[%s313 + $0x190] sm:$0xff]
          %v5915 = vld [vmem:[%s313 + $0x198] sm:$0xff]
          %v5916 = vld [vmem:[%s313 + $0x1a0] sm:$0xff]
          %v5917 = vld [vmem:[%s313 + $0x1a8] sm:$0xff]
          %v5918 = vld [vmem:[%s313 + $0x1b0] sm:$0xff]
          %v5919 = vld [vmem:[%s313 + $0x1b8] sm:$0xff]
          %v5920 = vld [vmem:[%s313 + $0x1c0] sm:$0xff]
          %v5921 = vld [vmem:[%s313 + $0x1c8] sm:$0xff]
          %v5922 = vld [vmem:[%s313 + $0x1d0] sm:$0xff]
          %v5923 = vld [vmem:[%s313 + $0x1d8] sm:$0xff]
          %v5924 = vld [vmem:[%s313 + $0x1e0] sm:$0xff]
          %v5925 = vld [vmem:[%s313 + $0x1e8] sm:$0xff]
          %v5926 = vld [vmem:[%s313 + $0x1f0] sm:$0xff]
          %v5927 = vld [vmem:[%s313 + $0x1f8] sm:$0xff]
          %vm5928 = vcmask 7168
          %5929 = vst.msk [vmem:[%s325] sm:$0xff] %vm5928, %v5864
          %5930 = vst.msk [vmem:[%s325 + $0x8] sm:$0xff] %vm5928, %v5865
          %5931 = vst.msk [vmem:[%s325 + $0x10] sm:$0xff] %vm5928, %v5866
          %5932 = vst.msk [vmem:[%s325 + $0x18] sm:$0xff] %vm5928, %v5867
          %5933 = vst.msk [vmem:[%s325 + $0x20] sm:$0xff] %vm5928, %v5868
          %5934 = vst.msk [vmem:[%s325 + $0x28] sm:$0xff] %vm5928, %v5869
          %5935 = vst.msk [vmem:[%s325 + $0x30] sm:$0xff] %vm5928, %v5870
          %5936 = vst.msk [vmem:[%s325 + $0x38] sm:$0xff] %vm5928, %v5871
          %5937 = vst.msk [vmem:[%s325 + $0x40] sm:$0xff] %vm5928, %v5872
          %5938 = vst.msk [vmem:[%s325 + $0x48] sm:$0xff] %vm5928, %v5873
          %5939 = vst.msk [vmem:[%s325 + $0x50] sm:$0xff] %vm5928, %v5874
          %5940 = vst.msk [vmem:[%s325 + $0x58] sm:$0xff] %vm5928, %v5875
          %5941 = vst.msk [vmem:[%s325 + $0x60] sm:$0xff] %vm5928, %v5876
          %5942 = vst.msk [vmem:[%s325 + $0x68] sm:$0xff] %vm5928, %v5877
          %5943 = vst.msk [vmem:[%s325 + $0x70] sm:$0xff] %vm5928, %v5878
          %5944 = vst.msk [vmem:[%s325 + $0x78] sm:$0xff] %vm5928, %v5879
          %5945 = vst.msk [vmem:[%s325 + $0x80] sm:$0xff] %vm5928, %v5880
          %5946 = vst.msk [vmem:[%s325 + $0x88] sm:$0xff] %vm5928, %v5881
          %5947 = vst.msk [vmem:[%s325 + $0x90] sm:$0xff] %vm5928, %v5882
          %5948 = vst.msk [vmem:[%s325 + $0x98] sm:$0xff] %vm5928, %v5883
          %5949 = vst.msk [vmem:[%s325 + $0xa0] sm:$0xff] %vm5928, %v5884
          %5950 = vst.msk [vmem:[%s325 + $0xa8] sm:$0xff] %vm5928, %v5885
          %5951 = vst.msk [vmem:[%s325 + $0xb0] sm:$0xff] %vm5928, %v5886
          %5952 = vst.msk [vmem:[%s325 + $0xb8] sm:$0xff] %vm5928, %v5887
          %5953 = vst.msk [vmem:[%s325 + $0xc0] sm:$0xff] %vm5928, %v5888
          %5954 = vst.msk [vmem:[%s325 + $0xc8] sm:$0xff] %vm5928, %v5889
          %5955 = vst.msk [vmem:[%s325 + $0xd0] sm:$0xff] %vm5928, %v5890
          %5956 = vst.msk [vmem:[%s325 + $0xd8] sm:$0xff] %vm5928, %v5891
          %5957 = vst.msk [vmem:[%s325 + $0xe0] sm:$0xff] %vm5928, %v5892
          %5958 = vst.msk [vmem:[%s325 + $0xe8] sm:$0xff] %vm5928, %v5893
          %5959 = vst.msk [vmem:[%s325 + $0xf0] sm:$0xff] %vm5928, %v5894
          %5960 = vst.msk [vmem:[%s325 + $0xf8] sm:$0xff] %vm5928, %v5895
          %5961 = vst.msk [vmem:[%s325 + $0x100] sm:$0xff] %vm5928, %v5896
          %5962 = vst.msk [vmem:[%s325 + $0x108] sm:$0xff] %vm5928, %v5897
          %5963 = vst.msk [vmem:[%s325 + $0x110] sm:$0xff] %vm5928, %v5898
          %5964 = vst.msk [vmem:[%s325 + $0x118] sm:$0xff] %vm5928, %v5899
          %5965 = vst.msk [vmem:[%s325 + $0x120] sm:$0xff] %vm5928, %v5900
          %5966 = vst.msk [vmem:[%s325 + $0x128] sm:$0xff] %vm5928, %v5901
          %5967 = vst.msk [vmem:[%s325 + $0x130] sm:$0xff] %vm5928, %v5902
          %5968 = vst.msk [vmem:[%s325 + $0x138] sm:$0xff] %vm5928, %v5903
          %5969 = vst.msk [vmem:[%s325 + $0x140] sm:$0xff] %vm5928, %v5904
          %5970 = vst.msk [vmem:[%s325 + $0x148] sm:$0xff] %vm5928, %v5905
          %5971 = vst.msk [vmem:[%s325 + $0x150] sm:$0xff] %vm5928, %v5906
          %5972 = vst.msk [vmem:[%s325 + $0x158] sm:$0xff] %vm5928, %v5907
          %5973 = vst.msk [vmem:[%s325 + $0x160] sm:$0xff] %vm5928, %v5908
          %5974 = vst.msk [vmem:[%s325 + $0x168] sm:$0xff] %vm5928, %v5909
          %5975 = vst.msk [vmem:[%s325 + $0x170] sm:$0xff] %vm5928, %v5910
          %5976 = vst.msk [vmem:[%s325 + $0x178] sm:$0xff] %vm5928, %v5911
          %5977 = vst.msk [vmem:[%s325 + $0x180] sm:$0xff] %vm5928, %v5912
          %5978 = vst.msk [vmem:[%s325 + $0x188] sm:$0xff] %vm5928, %v5913
          %5979 = vst.msk [vmem:[%s325 + $0x190] sm:$0xff] %vm5928, %v5914
          %5980 = vst.msk [vmem:[%s325 + $0x198] sm:$0xff] %vm5928, %v5915
          %5981 = vst.msk [vmem:[%s325 + $0x1a0] sm:$0xff] %vm5928, %v5916
          %5982 = vst.msk [vmem:[%s325 + $0x1a8] sm:$0xff] %vm5928, %v5917
          %5983 = vst.msk [vmem:[%s325 + $0x1b0] sm:$0xff] %vm5928, %v5918
          %5984 = vst.msk [vmem:[%s325 + $0x1b8] sm:$0xff] %vm5928, %v5919
          %5985 = vst.msk [vmem:[%s325 + $0x1c0] sm:$0xff] %vm5928, %v5920
          %5986 = vst.msk [vmem:[%s325 + $0x1c8] sm:$0xff] %vm5928, %v5921
          %5987 = vst.msk [vmem:[%s325 + $0x1d0] sm:$0xff] %vm5928, %v5922
          %5988 = vst.msk [vmem:[%s325 + $0x1d8] sm:$0xff] %vm5928, %v5923
          %5989 = vst.msk [vmem:[%s325 + $0x1e0] sm:$0xff] %vm5928, %v5924
          %5990 = vst.msk [vmem:[%s325 + $0x1e8] sm:$0xff] %vm5928, %v5925
          %5991 = vst.msk [vmem:[%s325 + $0x1f0] sm:$0xff] %vm5928, %v5926
          %5992 = vst.msk [vmem:[%s325 + $0x1f8] sm:$0xff] %vm5928, %v5927
        $region56: #{tpu_custom_call.1} parent=51 // pred_fallthru
          _
      $region52: #{tpu_custom_call.1} parent=35 // pred_fallthru
        _
      %s5993 = smul.u32 64, %s28
      %p5994 = scmp.lt.s32.totalorder %s5993, 511
      %s5995 = scalar_select %p5994, %s5993, 511
      %s5996 = smul.addr %s5995, 8
      %s5997 = scalar_lea.vmem %s5, %s5996
      %s5998 = smul.u32 64, %s28
      %p5999 = scmp.lt.s32.totalorder %s5998, 511
      %s6000 = scalar_select %p5999, %s5998, 511
      %s6001 = smul.addr %s6000, 8
      %s6002 = scalar_lea.vmem %s6, %s6001
      // Predicated region
      $region57: #{tpu_custom_call.1} parent=35 // pred_check
        %p6003 = pneg %p158
      $region58: #{tpu_custom_call.1} parent=35 // pred_check_branch
        %6005 = sbr.rel (%p6003) target = $region60
      $region59: #{tpu_custom_call.1} parent=35 // pred_region
        %s6006 = smul.u32 64, %s28
      $region60: #{tpu_custom_call.1} parent=35 // pred_fallthru
        _
      // Predicated region
      $region61: #{tpu_custom_call.1} parent=35 // pred_check
        %p6007 = pneg %p184
      $region62: #{tpu_custom_call.1} parent=35 // pred_check_branch
        %6009 = sbr.rel (%p6007) target = $region64
      $region63: #{tpu_custom_call.1} parent=35 // pred_region
        %s6010 = smul.u32 64, %s28
      $region64: #{tpu_custom_call.1} parent=35 // pred_fallthru
        _
    $region36: #{tpu_custom_call.1} parent=5 // pred_fallthru
      _
    %p6011 = scmp.le.s32.totalorder 2, %s19
    // Predicated region
    $region65: #{tpu_custom_call.1} parent=5 // pred_check
      %p6012 = pneg %p6011
    $region66: #{tpu_custom_call.1} parent=5 // pred_check_branch
      %6014 = sbr.rel (%p6012) target = $region68
    $region67: #{tpu_custom_call.1} parent=5 // pred_region
      %s6015 = ssub.s32 %s19, 2
      // Predicated region
      $region69: #{tpu_custom_call.1} parent=67 // pred_check
        %p6016 = pneg %p164
      $region70: #{tpu_custom_call.1} parent=67 // pred_check_branch
        %6018 = sbr.rel (%p6016) target = $region72
      $region71: #{tpu_custom_call.1} parent=67 // pred_region
        %s6019 = smul.u32 64, %s30
        %p6020 = scmp.lt.s32.totalorder %s6019, 511
        %s6021 = scalar_select %p6020, %s6019, 511
        %s6022 = smul.addr %s6021, 8
        %s6023 = scalar_lea.vmem %s5, %s6022
      $region72: #{tpu_custom_call.1} parent=67 // pred_fallthru
        _
      // Predicated region
      $region73: #{tpu_custom_call.1} parent=67 // pred_check
        %p6024 = pneg %p190
      $region74: #{tpu_custom_call.1} parent=67 // pred_check_branch
        %6026 = sbr.rel (%p6024) target = $region76
      $region75: #{tpu_custom_call.1} parent=67 // pred_region
        %s6027 = smul.u32 64, %s30
        %p6028 = scmp.lt.s32.totalorder %s6027, 511
        %s6029 = scalar_select %p6028, %s6027, 511
        %s6030 = smul.addr %s6029, 8
        %s6031 = scalar_lea.vmem %s6, %s6030
      $region76: #{tpu_custom_call.1} parent=67 // pred_fallthru
        _
    $region68: #{tpu_custom_call.1} parent=5 // pred_fallthru
      _
  $region6: #{tpu_custom_call.1} parent=0 // loop_footer
    %s23 = sadd.s32 1, %s19
  $region7: #{tpu_custom_call.1} parent=0 // loop_footer_branch
    %18 = sbr.rel target = $region3
  $region8: #{tpu_custom_call.1} parent=0 // loop_exit
    _

</llo_original>
